<compile_context>
chip_gen: v6e
topology: v6e:2x2x1
jax: 0.10.0
libtpu: 0.0.40
codegen_flags: <defaults>
</compile_context>

<pallas_src>
import functools
import math

import jax
import jax.numpy as jnp
from jax.experimental import pallas as pl
from jax.experimental.pallas import tpu as pltpu


# --------------------------------------------------------------------------
# Hyper-parameters (small test config)
# --------------------------------------------------------------------------

class HParams:
    vocab_size = 32
    embed_size = 32
    num_heads = 4
    ffn_size = 64
    num_layers = 2
    multi_speaker = True
    max_num_speaker = 4
    speaker_embedding_size = 16
    multi_lingual = True
    max_num_language = 4
    language_embedding_size = 16


# --------------------------------------------------------------------------
# Fused encoder kernel: one grid step == one batch element, all layers
# --------------------------------------------------------------------------

def _fused_encoder_kernel(
        lens_ref,                                        # (B,) int32, SMEM prefetch
        x_ref, pe_ref,                                   # (1,T,E), (T,E)
        wqkv_ref, bqkv_ref, wo_ref, bo_ref,              # (L,E,3E)(L,1,3E)(L,E,E)(L,1,E)
        ln1g_ref, ln1b_ref,                              # (L,1,E)
        w1_ref, b1_ref, w2_ref, b2_ref,                  # (L,E,F)(L,1,F)(L,F,E)(L,1,E)
        ln2g_ref, ln2b_ref,                              # (L,1,E)
        spk_ref, spk_w_ref, spk_b_ref,                   # (1,1,S)(S,S)(1,S)
        lang_ref, lang_ew_ref, lang_w_ref, lang_b_ref,   # (1,1,Lm)(Lm,Ll)(Ll,Ll)(1,Ll)
        o_ref,                                           # (1,T,E+S+Ll)
        *, num_layers, num_heads, eps):
    b = pl.program_id(0)
    length = lens_ref[b]

    x = x_ref[0] + pe_ref[...]                           # (T, E), f32
    T, E = x.shape
    Dh = E // num_heads
    scale = 1.0 / math.sqrt(Dh)

    # key-padding mask (shared by all heads / layers of this batch element)
    col = jax.lax.broadcasted_iota(jnp.int32, (T, T), 1)
    key_valid = col < length

    def add_ln(h, g, bb):                                # LayerNorm over last dim (f32)
        mu = jnp.mean(h, axis=-1, keepdims=True)
        var = jnp.mean((h - mu) ** 2, axis=-1, keepdims=True)
        return (h - mu) * jax.lax.rsqrt(var + eps) * g + bb

    for l in range(num_layers):                          # static unroll (L = 2)
        # fused QKV projection: one (T,E) @ (E,3E) MXU pass
        qkv = jnp.dot(x, wqkv_ref[l], preferred_element_type=jnp.float32) + bqkv_ref[l]

        heads = []
        for h in range(num_heads):                       # static unroll (H = 4)
            q = qkv[:, h * Dh:(h + 1) * Dh] * scale      # fold scale into q
            k = qkv[:, E + h * Dh:E + (h + 1) * Dh]
            v = qkv[:, 2 * E + h * Dh:2 * E + (h + 1) * Dh]
            # contract Dh of q with Dh of k directly (no explicit transpose)
            s = jax.lax.dot_general(q, k, (((1,), (1,)), ((), ())),
                                    preferred_element_type=jnp.float32)
            s = jnp.where(key_valid, s, -1e30)           # f32 masked softmax
            s = s - jnp.max(s, axis=-1, keepdims=True)
            p = jnp.exp(s)
            p = p * pl.reciprocal(jnp.sum(p, axis=-1, keepdims=True), approx=True)
            heads.append(jnp.dot(p, v, preferred_element_type=jnp.float32))
        attn = jnp.concatenate(heads, axis=-1)           # (T, E)

        attn = jnp.dot(attn, wo_ref[l], preferred_element_type=jnp.float32) + bo_ref[l]
        x = add_ln(x + attn, ln1g_ref[l], ln1b_ref[l])   # post-LN residual 1

        ff = jnp.dot(x, w1_ref[l], preferred_element_type=jnp.float32) + b1_ref[l]
        ff = jnp.maximum(ff, 0.0)
        ff = jnp.dot(ff, w2_ref[l], preferred_element_type=jnp.float32) + b2_ref[l]
        x = add_ln(x + ff, ln2g_ref[l], ln2b_ref[l])     # post-LN residual 2

    # --- speaker / language epilogue (softsign = x / (1 + |x|)) -----------
    spk = jnp.dot(spk_ref[0], spk_w_ref[...],
                  preferred_element_type=jnp.float32) + spk_b_ref[...]      # (1, S)
    spk = spk / (1.0 + jnp.abs(spk))

    lan = jnp.dot(lang_ref[0], lang_ew_ref[...],
                  preferred_element_type=jnp.float32)                        # no bias
    lan = jnp.dot(lan, lang_w_ref[...],
                  preferred_element_type=jnp.float32) + lang_b_ref[...]      # (1, Ll)
    lan = lan / (1.0 + jnp.abs(lan))

    spk_t = jnp.broadcast_to(spk, (T, spk.shape[-1]))
    lan_t = jnp.broadcast_to(lan, (T, lan.shape[-1]))
    o_ref[0] = jnp.concatenate([x, spk_t, lan_t], axis=-1).astype(o_ref.dtype)


# --------------------------------------------------------------------------
# Parameters / glue
# --------------------------------------------------------------------------

def sinusoidal_pe(T, E, dtype=jnp.float32):
    pos = jnp.arange(T, dtype=jnp.float32)[:, None]
    i = jnp.arange(E, dtype=jnp.float32)[None, :]
    angle = pos / jnp.power(10000.0, (2.0 * (i // 2)) / E)
    pe = jnp.where((jnp.arange(E) % 2) == 0, jnp.sin(angle), jnp.cos(angle))
    return pe.astype(dtype)


def init_params(hp, key):
    ks = iter(jax.random.split(key, 64))

    def w(shape, scale=0.05):
        return (scale * jax.random.normal(next(ks), shape)).astype(jnp.float32)

    E, F, L = hp.embed_size, hp.ffn_size, hp.num_layers
    S = hp.speaker_embedding_size
    Lm, Ll = hp.max_num_language, hp.language_embedding_size
    z = lambda shape: jnp.zeros(shape, jnp.float32)
    return {
        "embed": w((hp.vocab_size, E), 0.1),
        # stacked per-layer weights (leading L axis), QKV fused to (E, 3E)
        "wqkv": w((L, E, 3 * E)), "bqkv": z((L, 1, 3 * E)),
        "wo": w((L, E, E)),       "bo": z((L, 1, E)),
        "ln1_g": jnp.ones((L, 1, E), jnp.float32), "ln1_b": z((L, 1, E)),
        "w1": w((L, E, F)),       "b1": z((L, 1, F)),
        "w2": w((L, F, E)),       "b2": z((L, 1, E)),
        "ln2_g": jnp.ones((L, 1, E), jnp.float32), "ln2_b": z((L, 1, E)),
        "spk_embed": w((hp.max_num_speaker, S), 0.1),
        "spk_w": w((S, S)),       "spk_b": z((1, S)),
        "lang_embed_w": w((Lm, Ll)),                      # Linear, bias=False
        "lang_w": w((Ll, Ll)),    "lang_b": z((1, Ll)),
    }


def encoder_forward(params, hp, inputs, input_lengths,
                    input_spk_ids, input_language_vecs):
    B, T = inputs.shape
    E, F, L = hp.embed_size, hp.ffn_size, hp.num_layers
    S = hp.speaker_embedding_size
    Lm, Ll = hp.max_num_language, hp.language_embedding_size
    Eo = E + S + Ll

    # glue: gathers + constant PE table (folds under jit; tiny here)
    x = jnp.take(params["embed"], inputs, axis=0)                     # (B, T, E)
    pe = sinusoidal_pe(T, E)                                          # (T, E)
    spk_emb = jnp.take(params["spk_embed"], input_spk_ids, axis=0)[:, None, :]   # (B,1,S)
    lang_vec = input_language_vecs.astype(jnp.float32)[:, None, :]               # (B,1,Lm)

    full3 = lambda shape: pl.BlockSpec(shape, lambda b, lens: (0, 0, 0))
    full2 = lambda shape: pl.BlockSpec(shape, lambda b, lens: (0, 0))
    perb3 = lambda shape: pl.BlockSpec(shape, lambda b, lens: (b, 0, 0))

    kernel = functools.partial(_fused_encoder_kernel,
                               num_layers=L, num_heads=hp.num_heads, eps=1e-5)

    return pl.pallas_call(
        kernel,
        out_shape=jax.ShapeDtypeStruct((B, T, Eo), jnp.float32),
        grid_spec=pltpu.PrefetchScalarGridSpec(
            num_scalar_prefetch=1,
            grid=(B,),
            in_specs=[
                perb3((1, T, E)),        # x (embedded tokens)
                full2((T, E)),           # positional encoding table
                full3((L, E, 3 * E)),    # wqkv
                full3((L, 1, 3 * E)),    # bqkv
                full3((L, E, E)),        # wo
                full3((L, 1, E)),        # bo
                full3((L, 1, E)),        # ln1_g
                full3((L, 1, E)),        # ln1_b
                full3((L, E, F)),        # w1
                full3((L, 1, F)),        # b1
                full3((L, F, E)),        # w2
                full3((L, 1, E)),        # b2
                full3((L, 1, E)),        # ln2_g
                full3((L, 1, E)),        # ln2_b
                perb3((1, 1, S)),        # gathered speaker embedding
                full2((S, S)),           # speaker_layer weight
                full2((1, S)),           # speaker_layer bias
                perb3((1, 1, Lm)),       # language one-hot vector
                full2((Lm, Ll)),         # language_embed weight (no bias)
                full2((Ll, Ll)),         # language_layer weight
                full2((1, Ll)),          # language_layer bias
            ],
            out_specs=pl.BlockSpec((1, T, Eo), lambda b, lens: (b, 0, 0)),
        ),
        compiler_params=pltpu.CompilerParams(
            dimension_semantics=("parallel",)),           # batch axis -> both TCs on v7x
    )(
        input_lengths.astype(jnp.int32),
        x, pe,
        params["wqkv"], params["bqkv"], params["wo"], params["bo"],
        params["ln1_g"], params["ln1_b"],
        params["w1"], params["b1"], params["w2"], params["b2"],
        params["ln2_g"], params["ln2_b"],
        spk_emb, params["spk_w"], params["spk_b"],
        lang_vec, params["lang_embed_w"], params["lang_w"], params["lang_b"],
    )


# --------------------------------------------------------------------------
# Main
# --------------------------------------------------------------------------

if __name__ == "__main__":
    hp = HParams()
    key = jax.random.PRNGKey(0)
    kp, ki, ks, kl = jax.random.split(key, 4)

    params = init_params(hp, kp)

    B, T = 2, 8
    inputs = jax.random.randint(ki, (B, T), 0, hp.vocab_size, dtype=jnp.int32)
    input_lengths = jnp.array([8, 5], dtype=jnp.int32)
    input_spk_ids = jax.random.randint(ks, (B,), 0, hp.max_num_speaker,
                                       dtype=jnp.int32)
    lang_ids = jax.random.randint(kl, (B,), 0, hp.max_num_language,
                                  dtype=jnp.int32)
    input_language_vecs = jax.nn.one_hot(lang_ids, hp.max_num_language,
                                         dtype=jnp.float32)

    out = encoder_forward(params, hp, inputs, input_lengths,
                          input_spk_ids, input_language_vecs)
    out = jax.block_until_ready(out)

    expected = (B, T, hp.embed_size + hp.speaker_embedding_size
                + hp.language_embedding_size)
    assert out.shape == expected, (out.shape, expected)
    assert jnp.all(jnp.isfinite(out))
    print("KERNEL_OK")
</pallas_src>

<mosaic_0001>
module attributes {stable_mosaic.version = 11 : i64} {
  func.func @_fused_encoder_kernel(%arg0: i32, %arg1: memref<2xi32, #tpu.memory_space<smem>>, %arg2: memref<1x8x32xf32, #tpu.memory_space<vmem>>, %arg3: memref<8x32xf32, #tpu.memory_space<vmem>>, %arg4: memref<2x32x96xf32, #tpu.memory_space<vmem>>, %arg5: memref<2x1x96xf32, #tpu.memory_space<vmem>>, %arg6: memref<2x32x32xf32, #tpu.memory_space<vmem>>, %arg7: memref<2x1x32xf32, #tpu.memory_space<vmem>>, %arg8: memref<2x1x32xf32, #tpu.memory_space<vmem>>, %arg9: memref<2x1x32xf32, #tpu.memory_space<vmem>>, %arg10: memref<2x32x64xf32, #tpu.memory_space<vmem>>, %arg11: memref<2x1x64xf32, #tpu.memory_space<vmem>>, %arg12: memref<2x64x32xf32, #tpu.memory_space<vmem>>, %arg13: memref<2x1x32xf32, #tpu.memory_space<vmem>>, %arg14: memref<2x1x32xf32, #tpu.memory_space<vmem>>, %arg15: memref<2x1x32xf32, #tpu.memory_space<vmem>>, %arg16: memref<1x1x16xf32, #tpu.memory_space<vmem>>, %arg17: memref<16x16xf32, #tpu.memory_space<vmem>>, %arg18: memref<1x16xf32, #tpu.memory_space<vmem>>, %arg19: memref<1x1x4xf32, #tpu.memory_space<vmem>>, %arg20: memref<4x16xf32, #tpu.memory_space<vmem>>, %arg21: memref<16x16xf32, #tpu.memory_space<vmem>>, %arg22: memref<1x16xf32, #tpu.memory_space<vmem>>, %arg23: memref<1x8x64xf32, #tpu.memory_space<vmem>>) attributes {dimension_semantics = [#tpu.dimension_semantics<parallel>], iteration_bounds = array<i64: 2>, scalar_prefetch = 1 : i64, scratch_operands = 0 : i64, tpu.core_type = #tpu.core_type<tc>, window_params = [{transform_indices = @transform_0, window_bounds = array<i64: 1, 8, 32>}, {pipeline_mode = #tpu.pipeline_mode<synchronous>, transform_indices = @transform_1, window_bounds = array<i64: 8, 32>}, {pipeline_mode = #tpu.pipeline_mode<synchronous>, transform_indices = @transform_2, window_bounds = array<i64: 2, 32, 96>}, {pipeline_mode = #tpu.pipeline_mode<synchronous>, transform_indices = @transform_3, window_bounds = array<i64: 2, 1, 96>}, {pipeline_mode = #tpu.pipeline_mode<synchronous>, transform_indices = @transform_4, window_bounds = array<i64: 2, 32, 32>}, {pipeline_mode = #tpu.pipeline_mode<synchronous>, transform_indices = @transform_5, window_bounds = array<i64: 2, 1, 32>}, {pipeline_mode = #tpu.pipeline_mode<synchronous>, transform_indices = @transform_6, window_bounds = array<i64: 2, 1, 32>}, {pipeline_mode = #tpu.pipeline_mode<synchronous>, transform_indices = @transform_7, window_bounds = array<i64: 2, 1, 32>}, {pipeline_mode = #tpu.pipeline_mode<synchronous>, transform_indices = @transform_8, window_bounds = array<i64: 2, 32, 64>}, {pipeline_mode = #tpu.pipeline_mode<synchronous>, transform_indices = @transform_9, window_bounds = array<i64: 2, 1, 64>}, {pipeline_mode = #tpu.pipeline_mode<synchronous>, transform_indices = @transform_10, window_bounds = array<i64: 2, 64, 32>}, {pipeline_mode = #tpu.pipeline_mode<synchronous>, transform_indices = @transform_11, window_bounds = array<i64: 2, 1, 32>}, {pipeline_mode = #tpu.pipeline_mode<synchronous>, transform_indices = @transform_12, window_bounds = array<i64: 2, 1, 32>}, {pipeline_mode = #tpu.pipeline_mode<synchronous>, transform_indices = @transform_13, window_bounds = array<i64: 2, 1, 32>}, {transform_indices = @transform_14, window_bounds = array<i64: 1, 1, 16>}, {pipeline_mode = #tpu.pipeline_mode<synchronous>, transform_indices = @transform_15, window_bounds = array<i64: 16, 16>}, {pipeline_mode = #tpu.pipeline_mode<synchronous>, transform_indices = @transform_16, window_bounds = array<i64: 1, 16>}, {transform_indices = @transform_17, window_bounds = array<i64: 1, 1, 4>}, {pipeline_mode = #tpu.pipeline_mode<synchronous>, transform_indices = @transform_18, window_bounds = array<i64: 4, 16>}, {pipeline_mode = #tpu.pipeline_mode<synchronous>, transform_indices = @transform_19, window_bounds = array<i64: 16, 16>}, {pipeline_mode = #tpu.pipeline_mode<synchronous>, transform_indices = @transform_20, window_bounds = array<i64: 1, 16>}, {transform_indices = @transform_21, window_bounds = array<i64: 1, 8, 64>}]} {
    %0 = arith.index_cast %arg0 : i32 to index
    %1 = memref.load %arg1[%0] : memref<2xi32, #tpu.memory_space<smem>>
    %c0 = arith.constant 0 : index
    %c0_0 = arith.constant 0 : index
    %c0_1 = arith.constant 0 : index
    %2 = vector.load %arg2[%c0, %c0_0, %c0_1] : memref<1x8x32xf32, #tpu.memory_space<vmem>>, vector<1x8x32xf32>
    %3 = vector.shape_cast %2 : vector<1x8x32xf32> to vector<8x32xf32>
    %c0_2 = arith.constant 0 : index
    %c0_3 = arith.constant 0 : index
    %4 = vector.load %arg3[%c0_2, %c0_3] : memref<8x32xf32, #tpu.memory_space<vmem>>, vector<8x32xf32>
    %5 = arith.addf %3, %4 : vector<8x32xf32>
    %6 = tpu.iota {dimensions = array<i32: 1>} : vector<8x8xi32>
    %7 = vector.broadcast %1 : i32 to vector<8x8xi32>
    %8 = arith.cmpi slt, %6, %7 : vector<8x8xi32>
    %c0_4 = arith.constant 0 : index
    %c0_5 = arith.constant 0 : index
    %c0_6 = arith.constant 0 : index
    %9 = vector.load %arg4[%c0_4, %c0_5, %c0_6] : memref<2x32x96xf32, #tpu.memory_space<vmem>>, vector<1x32x96xf32>
    %10 = vector.shape_cast %9 : vector<1x32x96xf32> to vector<32x96xf32>
    %cst = arith.constant dense<0.000000e+00> : vector<8x96xf32>
    %11 = tpu.matmul %5, %10, %cst {dimension_numbers = #tpu.dot_dimension_numbers<[1], [0], [0], [1], [0, 0, 1, 1], [], []>} : vector<8x32xf32>, vector<32x96xf32>, vector<8x96xf32> -> vector<8x96xf32>
    %c0_7 = arith.constant 0 : index
    %c0_8 = arith.constant 0 : index
    %c0_9 = arith.constant 0 : index
    %12 = vector.load %arg5[%c0_7, %c0_8, %c0_9] : memref<2x1x96xf32, #tpu.memory_space<vmem>>, vector<1x1x96xf32>
    %13 = vector.shape_cast %12 : vector<1x1x96xf32> to vector<1x96xf32>
    %14 = vector.broadcast %13 : vector<1x96xf32> to vector<8x96xf32>
    %15 = arith.addf %11, %14 : vector<8x96xf32>
    %16 = vector.extract_strided_slice %15 {offsets = [0, 0], sizes = [8, 8], strides = [1, 1]} : vector<8x96xf32> to vector<8x8xf32>
    %cst_10 = arith.constant 0.353553385 : f32
    %17 = vector.broadcast %cst_10 : f32 to vector<8x8xf32>
    %18 = arith.mulf %16, %17 : vector<8x8xf32>
    %19 = vector.extract_strided_slice %15 {offsets = [0, 32], sizes = [8, 8], strides = [1, 1]} : vector<8x96xf32> to vector<8x8xf32>
    %20 = vector.extract_strided_slice %15 {offsets = [0, 64], sizes = [8, 8], strides = [1, 1]} : vector<8x96xf32> to vector<8x8xf32>
    %cst_11 = arith.constant dense<0.000000e+00> : vector<8x8xf32>
    %21 = tpu.matmul %18, %19, %cst_11 {dimension_numbers = #tpu.dot_dimension_numbers<[1], [1], [0], [0], [0, 0, 1, 0], [], []>} : vector<8x8xf32>, vector<8x8xf32>, vector<8x8xf32> -> vector<8x8xf32>
    %cst_12 = arith.constant -1.000000e+30 : f32
    %22 = vector.broadcast %cst_12 : f32 to vector<8x8xf32>
    %23 = arith.select %8, %21, %22 : vector<8x8xi1>, vector<8x8xf32>
    %cst_13 = arith.constant dense<0xFF800000> : vector<8xf32>
    %24 = vector.multi_reduction <maximumf>, %23, %cst_13 [1] : vector<8x8xf32> to vector<8xf32>
    %25 = vector.shape_cast %24 : vector<8xf32> to vector<8x1xf32>
    %26 = vector.broadcast %25 : vector<8x1xf32> to vector<8x8xf32>
    %27 = arith.subf %23, %26 : vector<8x8xf32>
    %28 = math.exp %27 : vector<8x8xf32>
    %cst_14 = arith.constant dense<0.000000e+00> : vector<8xf32>
    %29 = vector.multi_reduction <add>, %28, %cst_14 [1] : vector<8x8xf32> to vector<8xf32>
    %30 = vector.shape_cast %29 : vector<8xf32> to vector<8x1xf32>
    %31 = tpu.reciprocal %30 {approx = true} : vector<8x1xf32> -> vector<8x1xf32>
    %32 = vector.broadcast %31 : vector<8x1xf32> to vector<8x8xf32>
    %33 = arith.mulf %28, %32 : vector<8x8xf32>
    %cst_15 = arith.constant dense<0.000000e+00> : vector<8x8xf32>
    %34 = tpu.matmul %33, %20, %cst_15 {dimension_numbers = #tpu.dot_dimension_numbers<[1], [0], [0], [1], [0, 0, 1, 1], [], []>} : vector<8x8xf32>, vector<8x8xf32>, vector<8x8xf32> -> vector<8x8xf32>
    %35 = vector.extract_strided_slice %15 {offsets = [0, 8], sizes = [8, 8], strides = [1, 1]} : vector<8x96xf32> to vector<8x8xf32>
    %cst_16 = arith.constant 0.353553385 : f32
    %36 = vector.broadcast %cst_16 : f32 to vector<8x8xf32>
    %37 = arith.mulf %35, %36 : vector<8x8xf32>
    %38 = vector.extract_strided_slice %15 {offsets = [0, 40], sizes = [8, 8], strides = [1, 1]} : vector<8x96xf32> to vector<8x8xf32>
    %39 = vector.extract_strided_slice %15 {offsets = [0, 72], sizes = [8, 8], strides = [1, 1]} : vector<8x96xf32> to vector<8x8xf32>
    %cst_17 = arith.constant dense<0.000000e+00> : vector<8x8xf32>
    %40 = tpu.matmul %37, %38, %cst_17 {dimension_numbers = #tpu.dot_dimension_numbers<[1], [1], [0], [0], [0, 0, 1, 0], [], []>} : vector<8x8xf32>, vector<8x8xf32>, vector<8x8xf32> -> vector<8x8xf32>
    %cst_18 = arith.constant -1.000000e+30 : f32
    %41 = vector.broadcast %cst_18 : f32 to vector<8x8xf32>
    %42 = arith.select %8, %40, %41 : vector<8x8xi1>, vector<8x8xf32>
    %cst_19 = arith.constant dense<0xFF800000> : vector<8xf32>
    %43 = vector.multi_reduction <maximumf>, %42, %cst_19 [1] : vector<8x8xf32> to vector<8xf32>
    %44 = vector.shape_cast %43 : vector<8xf32> to vector<8x1xf32>
    %45 = vector.broadcast %44 : vector<8x1xf32> to vector<8x8xf32>
    %46 = arith.subf %42, %45 : vector<8x8xf32>
    %47 = math.exp %46 : vector<8x8xf32>
    %cst_20 = arith.constant dense<0.000000e+00> : vector<8xf32>
    %48 = vector.multi_reduction <add>, %47, %cst_20 [1] : vector<8x8xf32> to vector<8xf32>
    %49 = vector.shape_cast %48 : vector<8xf32> to vector<8x1xf32>
    %50 = tpu.reciprocal %49 {approx = true} : vector<8x1xf32> -> vector<8x1xf32>
    %51 = vector.broadcast %50 : vector<8x1xf32> to vector<8x8xf32>
    %52 = arith.mulf %47, %51 : vector<8x8xf32>
    %cst_21 = arith.constant dense<0.000000e+00> : vector<8x8xf32>
    %53 = tpu.matmul %52, %39, %cst_21 {dimension_numbers = #tpu.dot_dimension_numbers<[1], [0], [0], [1], [0, 0, 1, 1], [], []>} : vector<8x8xf32>, vector<8x8xf32>, vector<8x8xf32> -> vector<8x8xf32>
    %54 = vector.extract_strided_slice %15 {offsets = [0, 16], sizes = [8, 8], strides = [1, 1]} : vector<8x96xf32> to vector<8x8xf32>
    %cst_22 = arith.constant 0.353553385 : f32
    %55 = vector.broadcast %cst_22 : f32 to vector<8x8xf32>
    %56 = arith.mulf %54, %55 : vector<8x8xf32>
    %57 = vector.extract_strided_slice %15 {offsets = [0, 48], sizes = [8, 8], strides = [1, 1]} : vector<8x96xf32> to vector<8x8xf32>
    %58 = vector.extract_strided_slice %15 {offsets = [0, 80], sizes = [8, 8], strides = [1, 1]} : vector<8x96xf32> to vector<8x8xf32>
    %cst_23 = arith.constant dense<0.000000e+00> : vector<8x8xf32>
    %59 = tpu.matmul %56, %57, %cst_23 {dimension_numbers = #tpu.dot_dimension_numbers<[1], [1], [0], [0], [0, 0, 1, 0], [], []>} : vector<8x8xf32>, vector<8x8xf32>, vector<8x8xf32> -> vector<8x8xf32>
    %cst_24 = arith.constant -1.000000e+30 : f32
    %60 = vector.broadcast %cst_24 : f32 to vector<8x8xf32>
    %61 = arith.select %8, %59, %60 : vector<8x8xi1>, vector<8x8xf32>
    %cst_25 = arith.constant dense<0xFF800000> : vector<8xf32>
    %62 = vector.multi_reduction <maximumf>, %61, %cst_25 [1] : vector<8x8xf32> to vector<8xf32>
    %63 = vector.shape_cast %62 : vector<8xf32> to vector<8x1xf32>
    %64 = vector.broadcast %63 : vector<8x1xf32> to vector<8x8xf32>
    %65 = arith.subf %61, %64 : vector<8x8xf32>
    %66 = math.exp %65 : vector<8x8xf32>
    %cst_26 = arith.constant dense<0.000000e+00> : vector<8xf32>
    %67 = vector.multi_reduction <add>, %66, %cst_26 [1] : vector<8x8xf32> to vector<8xf32>
    %68 = vector.shape_cast %67 : vector<8xf32> to vector<8x1xf32>
    %69 = tpu.reciprocal %68 {approx = true} : vector<8x1xf32> -> vector<8x1xf32>
    %70 = vector.broadcast %69 : vector<8x1xf32> to vector<8x8xf32>
    %71 = arith.mulf %66, %70 : vector<8x8xf32>
    %cst_27 = arith.constant dense<0.000000e+00> : vector<8x8xf32>
    %72 = tpu.matmul %71, %58, %cst_27 {dimension_numbers = #tpu.dot_dimension_numbers<[1], [0], [0], [1], [0, 0, 1, 1], [], []>} : vector<8x8xf32>, vector<8x8xf32>, vector<8x8xf32> -> vector<8x8xf32>
    %73 = vector.extract_strided_slice %15 {offsets = [0, 24], sizes = [8, 8], strides = [1, 1]} : vector<8x96xf32> to vector<8x8xf32>
    %cst_28 = arith.constant 0.353553385 : f32
    %74 = vector.broadcast %cst_28 : f32 to vector<8x8xf32>
    %75 = arith.mulf %73, %74 : vector<8x8xf32>
    %76 = vector.extract_strided_slice %15 {offsets = [0, 56], sizes = [8, 8], strides = [1, 1]} : vector<8x96xf32> to vector<8x8xf32>
    %77 = vector.extract_strided_slice %15 {offsets = [0, 88], sizes = [8, 8], strides = [1, 1]} : vector<8x96xf32> to vector<8x8xf32>
    %cst_29 = arith.constant dense<0.000000e+00> : vector<8x8xf32>
    %78 = tpu.matmul %75, %76, %cst_29 {dimension_numbers = #tpu.dot_dimension_numbers<[1], [1], [0], [0], [0, 0, 1, 0], [], []>} : vector<8x8xf32>, vector<8x8xf32>, vector<8x8xf32> -> vector<8x8xf32>
    %cst_30 = arith.constant -1.000000e+30 : f32
    %79 = vector.broadcast %cst_30 : f32 to vector<8x8xf32>
    %80 = arith.select %8, %78, %79 : vector<8x8xi1>, vector<8x8xf32>
    %cst_31 = arith.constant dense<0xFF800000> : vector<8xf32>
    %81 = vector.multi_reduction <maximumf>, %80, %cst_31 [1] : vector<8x8xf32> to vector<8xf32>
    %82 = vector.shape_cast %81 : vector<8xf32> to vector<8x1xf32>
    %83 = vector.broadcast %82 : vector<8x1xf32> to vector<8x8xf32>
    %84 = arith.subf %80, %83 : vector<8x8xf32>
    %85 = math.exp %84 : vector<8x8xf32>
    %cst_32 = arith.constant dense<0.000000e+00> : vector<8xf32>
    %86 = vector.multi_reduction <add>, %85, %cst_32 [1] : vector<8x8xf32> to vector<8xf32>
    %87 = vector.shape_cast %86 : vector<8xf32> to vector<8x1xf32>
    %88 = tpu.reciprocal %87 {approx = true} : vector<8x1xf32> -> vector<8x1xf32>
    %89 = vector.broadcast %88 : vector<8x1xf32> to vector<8x8xf32>
    %90 = arith.mulf %85, %89 : vector<8x8xf32>
    %cst_33 = arith.constant dense<0.000000e+00> : vector<8x8xf32>
    %91 = tpu.matmul %90, %77, %cst_33 {dimension_numbers = #tpu.dot_dimension_numbers<[1], [0], [0], [1], [0, 0, 1, 1], [], []>} : vector<8x8xf32>, vector<8x8xf32>, vector<8x8xf32> -> vector<8x8xf32>
    %92 = tpu.concatenate %34, %53, %72, %91 in 1 : vector<8x8xf32>, vector<8x8xf32>, vector<8x8xf32>, vector<8x8xf32> -> vector<8x32xf32>
    %c0_34 = arith.constant 0 : index
    %c0_35 = arith.constant 0 : index
    %c0_36 = arith.constant 0 : index
    %93 = vector.load %arg6[%c0_34, %c0_35, %c0_36] : memref<2x32x32xf32, #tpu.memory_space<vmem>>, vector<1x32x32xf32>
    %94 = vector.shape_cast %93 : vector<1x32x32xf32> to vector<32x32xf32>
    %cst_37 = arith.constant dense<0.000000e+00> : vector<8x32xf32>
    %95 = tpu.matmul %92, %94, %cst_37 {dimension_numbers = #tpu.dot_dimension_numbers<[1], [0], [0], [1], [0, 0, 1, 1], [], []>} : vector<8x32xf32>, vector<32x32xf32>, vector<8x32xf32> -> vector<8x32xf32>
    %c0_38 = arith.constant 0 : index
    %c0_39 = arith.constant 0 : index
    %c0_40 = arith.constant 0 : index
    %96 = vector.load %arg7[%c0_38, %c0_39, %c0_40] : memref<2x1x32xf32, #tpu.memory_space<vmem>>, vector<1x1x32xf32>
    %97 = vector.shape_cast %96 : vector<1x1x32xf32> to vector<1x32xf32>
    %98 = vector.broadcast %97 : vector<1x32xf32> to vector<8x32xf32>
    %99 = arith.addf %95, %98 : vector<8x32xf32>
    %100 = arith.addf %5, %99 : vector<8x32xf32>
    %c0_41 = arith.constant 0 : index
    %c0_42 = arith.constant 0 : index
    %c0_43 = arith.constant 0 : index
    %101 = vector.load %arg8[%c0_41, %c0_42, %c0_43] : memref<2x1x32xf32, #tpu.memory_space<vmem>>, vector<1x1x32xf32>
    %102 = vector.shape_cast %101 : vector<1x1x32xf32> to vector<1x32xf32>
    %c0_44 = arith.constant 0 : index
    %c0_45 = arith.constant 0 : index
    %c0_46 = arith.constant 0 : index
    %103 = vector.load %arg9[%c0_44, %c0_45, %c0_46] : memref<2x1x32xf32, #tpu.memory_space<vmem>>, vector<1x1x32xf32>
    %104 = vector.shape_cast %103 : vector<1x1x32xf32> to vector<1x32xf32>
    %cst_47 = arith.constant dense<0.000000e+00> : vector<8xf32>
    %105 = vector.multi_reduction <add>, %100, %cst_47 [1] : vector<8x32xf32> to vector<8xf32>
    %106 = vector.shape_cast %105 : vector<8xf32> to vector<8x1xf32>
    %cst_48 = arith.constant 3.200000e+01 : f32
    %107 = vector.broadcast %cst_48 : f32 to vector<8x1xf32>
    %108 = arith.divf %106, %107 : vector<8x1xf32>
    %109 = vector.broadcast %108 : vector<8x1xf32> to vector<8x32xf32>
    %110 = arith.subf %100, %109 : vector<8x32xf32>
    %111 = arith.mulf %110, %110 : vector<8x32xf32>
    %cst_49 = arith.constant dense<0.000000e+00> : vector<8xf32>
    %112 = vector.multi_reduction <add>, %111, %cst_49 [1] : vector<8x32xf32> to vector<8xf32>
    %113 = vector.shape_cast %112 : vector<8xf32> to vector<8x1xf32>
    %cst_50 = arith.constant 3.200000e+01 : f32
    %114 = vector.broadcast %cst_50 : f32 to vector<8x1xf32>
    %115 = arith.divf %113, %114 : vector<8x1xf32>
    %116 = vector.broadcast %108 : vector<8x1xf32> to vector<8x32xf32>
    %117 = arith.subf %100, %116 : vector<8x32xf32>
    %cst_51 = arith.constant 9.99999974E-6 : f32
    %118 = vector.broadcast %cst_51 : f32 to vector<8x1xf32>
    %119 = arith.addf %115, %118 : vector<8x1xf32>
    %120 = math.rsqrt %119 : vector<8x1xf32>
    %121 = vector.broadcast %120 : vector<8x1xf32> to vector<8x32xf32>
    %122 = arith.mulf %117, %121 : vector<8x32xf32>
    %123 = vector.broadcast %102 : vector<1x32xf32> to vector<8x32xf32>
    %124 = arith.mulf %122, %123 : vector<8x32xf32>
    %125 = vector.broadcast %104 : vector<1x32xf32> to vector<8x32xf32>
    %126 = arith.addf %124, %125 : vector<8x32xf32>
    %c0_52 = arith.constant 0 : index
    %c0_53 = arith.constant 0 : index
    %c0_54 = arith.constant 0 : index
    %127 = vector.load %arg10[%c0_52, %c0_53, %c0_54] : memref<2x32x64xf32, #tpu.memory_space<vmem>>, vector<1x32x64xf32>
    %128 = vector.shape_cast %127 : vector<1x32x64xf32> to vector<32x64xf32>
    %cst_55 = arith.constant dense<0.000000e+00> : vector<8x64xf32>
    %129 = tpu.matmul %126, %128, %cst_55 {dimension_numbers = #tpu.dot_dimension_numbers<[1], [0], [0], [1], [0, 0, 1, 1], [], []>} : vector<8x32xf32>, vector<32x64xf32>, vector<8x64xf32> -> vector<8x64xf32>
    %c0_56 = arith.constant 0 : index
    %c0_57 = arith.constant 0 : index
    %c0_58 = arith.constant 0 : index
    %130 = vector.load %arg11[%c0_56, %c0_57, %c0_58] : memref<2x1x64xf32, #tpu.memory_space<vmem>>, vector<1x1x64xf32>
    %131 = vector.shape_cast %130 : vector<1x1x64xf32> to vector<1x64xf32>
    %132 = vector.broadcast %131 : vector<1x64xf32> to vector<8x64xf32>
    %133 = arith.addf %129, %132 : vector<8x64xf32>
    %cst_59 = arith.constant 0.000000e+00 : f32
    %134 = vector.broadcast %cst_59 : f32 to vector<8x64xf32>
    %135 = arith.maximumf %133, %134 : vector<8x64xf32>
    %c0_60 = arith.constant 0 : index
    %c0_61 = arith.constant 0 : index
    %c0_62 = arith.constant 0 : index
    %136 = vector.load %arg12[%c0_60, %c0_61, %c0_62] : memref<2x64x32xf32, #tpu.memory_space<vmem>>, vector<1x64x32xf32>
    %137 = vector.shape_cast %136 : vector<1x64x32xf32> to vector<64x32xf32>
    %cst_63 = arith.constant dense<0.000000e+00> : vector<8x32xf32>
    %138 = tpu.matmul %135, %137, %cst_63 {dimension_numbers = #tpu.dot_dimension_numbers<[1], [0], [0], [1], [0, 0, 1, 1], [], []>} : vector<8x64xf32>, vector<64x32xf32>, vector<8x32xf32> -> vector<8x32xf32>
    %c0_64 = arith.constant 0 : index
    %c0_65 = arith.constant 0 : index
    %c0_66 = arith.constant 0 : index
    %139 = vector.load %arg13[%c0_64, %c0_65, %c0_66] : memref<2x1x32xf32, #tpu.memory_space<vmem>>, vector<1x1x32xf32>
    %140 = vector.shape_cast %139 : vector<1x1x32xf32> to vector<1x32xf32>
    %141 = vector.broadcast %140 : vector<1x32xf32> to vector<8x32xf32>
    %142 = arith.addf %138, %141 : vector<8x32xf32>
    %143 = arith.addf %126, %142 : vector<8x32xf32>
    %c0_67 = arith.constant 0 : index
    %c0_68 = arith.constant 0 : index
    %c0_69 = arith.constant 0 : index
    %144 = vector.load %arg14[%c0_67, %c0_68, %c0_69] : memref<2x1x32xf32, #tpu.memory_space<vmem>>, vector<1x1x32xf32>
    %145 = vector.shape_cast %144 : vector<1x1x32xf32> to vector<1x32xf32>
    %c0_70 = arith.constant 0 : index
    %c0_71 = arith.constant 0 : index
    %c0_72 = arith.constant 0 : index
    %146 = vector.load %arg15[%c0_70, %c0_71, %c0_72] : memref<2x1x32xf32, #tpu.memory_space<vmem>>, vector<1x1x32xf32>
    %147 = vector.shape_cast %146 : vector<1x1x32xf32> to vector<1x32xf32>
    %cst_73 = arith.constant dense<0.000000e+00> : vector<8xf32>
    %148 = vector.multi_reduction <add>, %143, %cst_73 [1] : vector<8x32xf32> to vector<8xf32>
    %149 = vector.shape_cast %148 : vector<8xf32> to vector<8x1xf32>
    %cst_74 = arith.constant 3.200000e+01 : f32
    %150 = vector.broadcast %cst_74 : f32 to vector<8x1xf32>
    %151 = arith.divf %149, %150 : vector<8x1xf32>
    %152 = vector.broadcast %151 : vector<8x1xf32> to vector<8x32xf32>
    %153 = arith.subf %143, %152 : vector<8x32xf32>
    %154 = arith.mulf %153, %153 : vector<8x32xf32>
    %cst_75 = arith.constant dense<0.000000e+00> : vector<8xf32>
    %155 = vector.multi_reduction <add>, %154, %cst_75 [1] : vector<8x32xf32> to vector<8xf32>
    %156 = vector.shape_cast %155 : vector<8xf32> to vector<8x1xf32>
    %cst_76 = arith.constant 3.200000e+01 : f32
    %157 = vector.broadcast %cst_76 : f32 to vector<8x1xf32>
    %158 = arith.divf %156, %157 : vector<8x1xf32>
    %159 = vector.broadcast %151 : vector<8x1xf32> to vector<8x32xf32>
    %160 = arith.subf %143, %159 : vector<8x32xf32>
    %cst_77 = arith.constant 9.99999974E-6 : f32
    %161 = vector.broadcast %cst_77 : f32 to vector<8x1xf32>
    %162 = arith.addf %158, %161 : vector<8x1xf32>
    %163 = math.rsqrt %162 : vector<8x1xf32>
    %164 = vector.broadcast %163 : vector<8x1xf32> to vector<8x32xf32>
    %165 = arith.mulf %160, %164 : vector<8x32xf32>
    %166 = vector.broadcast %145 : vector<1x32xf32> to vector<8x32xf32>
    %167 = arith.mulf %165, %166 : vector<8x32xf32>
    %168 = vector.broadcast %147 : vector<1x32xf32> to vector<8x32xf32>
    %169 = arith.addf %167, %168 : vector<8x32xf32>
    %c1 = arith.constant 1 : index
    %c0_78 = arith.constant 0 : index
    %c0_79 = arith.constant 0 : index
    %170 = vector.load %arg4[%c1, %c0_78, %c0_79] : memref<2x32x96xf32, #tpu.memory_space<vmem>>, vector<1x32x96xf32>
    %171 = vector.shape_cast %170 : vector<1x32x96xf32> to vector<32x96xf32>
    %cst_80 = arith.constant dense<0.000000e+00> : vector<8x96xf32>
    %172 = tpu.matmul %169, %171, %cst_80 {dimension_numbers = #tpu.dot_dimension_numbers<[1], [0], [0], [1], [0, 0, 1, 1], [], []>} : vector<8x32xf32>, vector<32x96xf32>, vector<8x96xf32> -> vector<8x96xf32>
    %c1_81 = arith.constant 1 : index
    %c0_82 = arith.constant 0 : index
    %c0_83 = arith.constant 0 : index
    %173 = vector.load %arg5[%c1_81, %c0_82, %c0_83] : memref<2x1x96xf32, #tpu.memory_space<vmem>>, vector<1x1x96xf32>
    %174 = vector.shape_cast %173 : vector<1x1x96xf32> to vector<1x96xf32>
    %175 = vector.broadcast %174 : vector<1x96xf32> to vector<8x96xf32>
    %176 = arith.addf %172, %175 : vector<8x96xf32>
    %177 = vector.extract_strided_slice %176 {offsets = [0, 0], sizes = [8, 8], strides = [1, 1]} : vector<8x96xf32> to vector<8x8xf32>
    %cst_84 = arith.constant 0.353553385 : f32
    %178 = vector.broadcast %cst_84 : f32 to vector<8x8xf32>
    %179 = arith.mulf %177, %178 : vector<8x8xf32>
    %180 = vector.extract_strided_slice %176 {offsets = [0, 32], sizes = [8, 8], strides = [1, 1]} : vector<8x96xf32> to vector<8x8xf32>
    %181 = vector.extract_strided_slice %176 {offsets = [0, 64], sizes = [8, 8], strides = [1, 1]} : vector<8x96xf32> to vector<8x8xf32>
    %cst_85 = arith.constant dense<0.000000e+00> : vector<8x8xf32>
    %182 = tpu.matmul %179, %180, %cst_85 {dimension_numbers = #tpu.dot_dimension_numbers<[1], [1], [0], [0], [0, 0, 1, 0], [], []>} : vector<8x8xf32>, vector<8x8xf32>, vector<8x8xf32> -> vector<8x8xf32>
    %cst_86 = arith.constant -1.000000e+30 : f32
    %183 = vector.broadcast %cst_86 : f32 to vector<8x8xf32>
    %184 = arith.select %8, %182, %183 : vector<8x8xi1>, vector<8x8xf32>
    %cst_87 = arith.constant dense<0xFF800000> : vector<8xf32>
    %185 = vector.multi_reduction <maximumf>, %184, %cst_87 [1] : vector<8x8xf32> to vector<8xf32>
    %186 = vector.shape_cast %185 : vector<8xf32> to vector<8x1xf32>
    %187 = vector.broadcast %186 : vector<8x1xf32> to vector<8x8xf32>
    %188 = arith.subf %184, %187 : vector<8x8xf32>
    %189 = math.exp %188 : vector<8x8xf32>
    %cst_88 = arith.constant dense<0.000000e+00> : vector<8xf32>
    %190 = vector.multi_reduction <add>, %189, %cst_88 [1] : vector<8x8xf32> to vector<8xf32>
    %191 = vector.shape_cast %190 : vector<8xf32> to vector<8x1xf32>
    %192 = tpu.reciprocal %191 {approx = true} : vector<8x1xf32> -> vector<8x1xf32>
    %193 = vector.broadcast %192 : vector<8x1xf32> to vector<8x8xf32>
    %194 = arith.mulf %189, %193 : vector<8x8xf32>
    %cst_89 = arith.constant dense<0.000000e+00> : vector<8x8xf32>
    %195 = tpu.matmul %194, %181, %cst_89 {dimension_numbers = #tpu.dot_dimension_numbers<[1], [0], [0], [1], [0, 0, 1, 1], [], []>} : vector<8x8xf32>, vector<8x8xf32>, vector<8x8xf32> -> vector<8x8xf32>
    %196 = vector.extract_strided_slice %176 {offsets = [0, 8], sizes = [8, 8], strides = [1, 1]} : vector<8x96xf32> to vector<8x8xf32>
    %cst_90 = arith.constant 0.353553385 : f32
    %197 = vector.broadcast %cst_90 : f32 to vector<8x8xf32>
    %198 = arith.mulf %196, %197 : vector<8x8xf32>
    %199 = vector.extract_strided_slice %176 {offsets = [0, 40], sizes = [8, 8], strides = [1, 1]} : vector<8x96xf32> to vector<8x8xf32>
    %200 = vector.extract_strided_slice %176 {offsets = [0, 72], sizes = [8, 8], strides = [1, 1]} : vector<8x96xf32> to vector<8x8xf32>
    %cst_91 = arith.constant dense<0.000000e+00> : vector<8x8xf32>
    %201 = tpu.matmul %198, %199, %cst_91 {dimension_numbers = #tpu.dot_dimension_numbers<[1], [1], [0], [0], [0, 0, 1, 0], [], []>} : vector<8x8xf32>, vector<8x8xf32>, vector<8x8xf32> -> vector<8x8xf32>
    %cst_92 = arith.constant -1.000000e+30 : f32
    %202 = vector.broadcast %cst_92 : f32 to vector<8x8xf32>
    %203 = arith.select %8, %201, %202 : vector<8x8xi1>, vector<8x8xf32>
    %cst_93 = arith.constant dense<0xFF800000> : vector<8xf32>
    %204 = vector.multi_reduction <maximumf>, %203, %cst_93 [1] : vector<8x8xf32> to vector<8xf32>
    %205 = vector.shape_cast %204 : vector<8xf32> to vector<8x1xf32>
    %206 = vector.broadcast %205 : vector<8x1xf32> to vector<8x8xf32>
    %207 = arith.subf %203, %206 : vector<8x8xf32>
    %208 = math.exp %207 : vector<8x8xf32>
    %cst_94 = arith.constant dense<0.000000e+00> : vector<8xf32>
    %209 = vector.multi_reduction <add>, %208, %cst_94 [1] : vector<8x8xf32> to vector<8xf32>
    %210 = vector.shape_cast %209 : vector<8xf32> to vector<8x1xf32>
    %211 = tpu.reciprocal %210 {approx = true} : vector<8x1xf32> -> vector<8x1xf32>
    %212 = vector.broadcast %211 : vector<8x1xf32> to vector<8x8xf32>
    %213 = arith.mulf %208, %212 : vector<8x8xf32>
    %cst_95 = arith.constant dense<0.000000e+00> : vector<8x8xf32>
    %214 = tpu.matmul %213, %200, %cst_95 {dimension_numbers = #tpu.dot_dimension_numbers<[1], [0], [0], [1], [0, 0, 1, 1], [], []>} : vector<8x8xf32>, vector<8x8xf32>, vector<8x8xf32> -> vector<8x8xf32>
    %215 = vector.extract_strided_slice %176 {offsets = [0, 16], sizes = [8, 8], strides = [1, 1]} : vector<8x96xf32> to vector<8x8xf32>
    %cst_96 = arith.constant 0.353553385 : f32
    %216 = vector.broadcast %cst_96 : f32 to vector<8x8xf32>
    %217 = arith.mulf %215, %216 : vector<8x8xf32>
    %218 = vector.extract_strided_slice %176 {offsets = [0, 48], sizes = [8, 8], strides = [1, 1]} : vector<8x96xf32> to vector<8x8xf32>
    %219 = vector.extract_strided_slice %176 {offsets = [0, 80], sizes = [8, 8], strides = [1, 1]} : vector<8x96xf32> to vector<8x8xf32>
    %cst_97 = arith.constant dense<0.000000e+00> : vector<8x8xf32>
    %220 = tpu.matmul %217, %218, %cst_97 {dimension_numbers = #tpu.dot_dimension_numbers<[1], [1], [0], [0], [0, 0, 1, 0], [], []>} : vector<8x8xf32>, vector<8x8xf32>, vector<8x8xf32> -> vector<8x8xf32>
    %cst_98 = arith.constant -1.000000e+30 : f32
    %221 = vector.broadcast %cst_98 : f32 to vector<8x8xf32>
    %222 = arith.select %8, %220, %221 : vector<8x8xi1>, vector<8x8xf32>
    %cst_99 = arith.constant dense<0xFF800000> : vector<8xf32>
    %223 = vector.multi_reduction <maximumf>, %222, %cst_99 [1] : vector<8x8xf32> to vector<8xf32>
    %224 = vector.shape_cast %223 : vector<8xf32> to vector<8x1xf32>
    %225 = vector.broadcast %224 : vector<8x1xf32> to vector<8x8xf32>
    %226 = arith.subf %222, %225 : vector<8x8xf32>
    %227 = math.exp %226 : vector<8x8xf32>
    %cst_100 = arith.constant dense<0.000000e+00> : vector<8xf32>
    %228 = vector.multi_reduction <add>, %227, %cst_100 [1] : vector<8x8xf32> to vector<8xf32>
    %229 = vector.shape_cast %228 : vector<8xf32> to vector<8x1xf32>
    %230 = tpu.reciprocal %229 {approx = true} : vector<8x1xf32> -> vector<8x1xf32>
    %231 = vector.broadcast %230 : vector<8x1xf32> to vector<8x8xf32>
    %232 = arith.mulf %227, %231 : vector<8x8xf32>
    %cst_101 = arith.constant dense<0.000000e+00> : vector<8x8xf32>
    %233 = tpu.matmul %232, %219, %cst_101 {dimension_numbers = #tpu.dot_dimension_numbers<[1], [0], [0], [1], [0, 0, 1, 1], [], []>} : vector<8x8xf32>, vector<8x8xf32>, vector<8x8xf32> -> vector<8x8xf32>
    %234 = vector.extract_strided_slice %176 {offsets = [0, 24], sizes = [8, 8], strides = [1, 1]} : vector<8x96xf32> to vector<8x8xf32>
    %cst_102 = arith.constant 0.353553385 : f32
    %235 = vector.broadcast %cst_102 : f32 to vector<8x8xf32>
    %236 = arith.mulf %234, %235 : vector<8x8xf32>
    %237 = vector.extract_strided_slice %176 {offsets = [0, 56], sizes = [8, 8], strides = [1, 1]} : vector<8x96xf32> to vector<8x8xf32>
    %238 = vector.extract_strided_slice %176 {offsets = [0, 88], sizes = [8, 8], strides = [1, 1]} : vector<8x96xf32> to vector<8x8xf32>
    %cst_103 = arith.constant dense<0.000000e+00> : vector<8x8xf32>
    %239 = tpu.matmul %236, %237, %cst_103 {dimension_numbers = #tpu.dot_dimension_numbers<[1], [1], [0], [0], [0, 0, 1, 0], [], []>} : vector<8x8xf32>, vector<8x8xf32>, vector<8x8xf32> -> vector<8x8xf32>
    %cst_104 = arith.constant -1.000000e+30 : f32
    %240 = vector.broadcast %cst_104 : f32 to vector<8x8xf32>
    %241 = arith.select %8, %239, %240 : vector<8x8xi1>, vector<8x8xf32>
    %cst_105 = arith.constant dense<0xFF800000> : vector<8xf32>
    %242 = vector.multi_reduction <maximumf>, %241, %cst_105 [1] : vector<8x8xf32> to vector<8xf32>
    %243 = vector.shape_cast %242 : vector<8xf32> to vector<8x1xf32>
    %244 = vector.broadcast %243 : vector<8x1xf32> to vector<8x8xf32>
    %245 = arith.subf %241, %244 : vector<8x8xf32>
    %246 = math.exp %245 : vector<8x8xf32>
    %cst_106 = arith.constant dense<0.000000e+00> : vector<8xf32>
    %247 = vector.multi_reduction <add>, %246, %cst_106 [1] : vector<8x8xf32> to vector<8xf32>
    %248 = vector.shape_cast %247 : vector<8xf32> to vector<8x1xf32>
    %249 = tpu.reciprocal %248 {approx = true} : vector<8x1xf32> -> vector<8x1xf32>
    %250 = vector.broadcast %249 : vector<8x1xf32> to vector<8x8xf32>
    %251 = arith.mulf %246, %250 : vector<8x8xf32>
    %cst_107 = arith.constant dense<0.000000e+00> : vector<8x8xf32>
    %252 = tpu.matmul %251, %238, %cst_107 {dimension_numbers = #tpu.dot_dimension_numbers<[1], [0], [0], [1], [0, 0, 1, 1], [], []>} : vector<8x8xf32>, vector<8x8xf32>, vector<8x8xf32> -> vector<8x8xf32>
    %253 = tpu.concatenate %195, %214, %233, %252 in 1 : vector<8x8xf32>, vector<8x8xf32>, vector<8x8xf32>, vector<8x8xf32> -> vector<8x32xf32>
    %c1_108 = arith.constant 1 : index
    %c0_109 = arith.constant 0 : index
    %c0_110 = arith.constant 0 : index
    %254 = vector.load %arg6[%c1_108, %c0_109, %c0_110] : memref<2x32x32xf32, #tpu.memory_space<vmem>>, vector<1x32x32xf32>
    %255 = vector.shape_cast %254 : vector<1x32x32xf32> to vector<32x32xf32>
    %cst_111 = arith.constant dense<0.000000e+00> : vector<8x32xf32>
    %256 = tpu.matmul %253, %255, %cst_111 {dimension_numbers = #tpu.dot_dimension_numbers<[1], [0], [0], [1], [0, 0, 1, 1], [], []>} : vector<8x32xf32>, vector<32x32xf32>, vector<8x32xf32> -> vector<8x32xf32>
    %c1_112 = arith.constant 1 : index
    %c0_113 = arith.constant 0 : index
    %c0_114 = arith.constant 0 : index
    %257 = vector.load %arg7[%c1_112, %c0_113, %c0_114] : memref<2x1x32xf32, #tpu.memory_space<vmem>>, vector<1x1x32xf32>
    %258 = vector.shape_cast %257 : vector<1x1x32xf32> to vector<1x32xf32>
    %259 = vector.broadcast %258 : vector<1x32xf32> to vector<8x32xf32>
    %260 = arith.addf %256, %259 : vector<8x32xf32>
    %261 = arith.addf %169, %260 : vector<8x32xf32>
    %c1_115 = arith.constant 1 : index
    %c0_116 = arith.constant 0 : index
    %c0_117 = arith.constant 0 : index
    %262 = vector.load %arg8[%c1_115, %c0_116, %c0_117] : memref<2x1x32xf32, #tpu.memory_space<vmem>>, vector<1x1x32xf32>
    %263 = vector.shape_cast %262 : vector<1x1x32xf32> to vector<1x32xf32>
    %c1_118 = arith.constant 1 : index
    %c0_119 = arith.constant 0 : index
    %c0_120 = arith.constant 0 : index
    %264 = vector.load %arg9[%c1_118, %c0_119, %c0_120] : memref<2x1x32xf32, #tpu.memory_space<vmem>>, vector<1x1x32xf32>
    %265 = vector.shape_cast %264 : vector<1x1x32xf32> to vector<1x32xf32>
    %cst_121 = arith.constant dense<0.000000e+00> : vector<8xf32>
    %266 = vector.multi_reduction <add>, %261, %cst_121 [1] : vector<8x32xf32> to vector<8xf32>
    %267 = vector.shape_cast %266 : vector<8xf32> to vector<8x1xf32>
    %cst_122 = arith.constant 3.200000e+01 : f32
    %268 = vector.broadcast %cst_122 : f32 to vector<8x1xf32>
    %269 = arith.divf %267, %268 : vector<8x1xf32>
    %270 = vector.broadcast %269 : vector<8x1xf32> to vector<8x32xf32>
    %271 = arith.subf %261, %270 : vector<8x32xf32>
    %272 = arith.mulf %271, %271 : vector<8x32xf32>
    %cst_123 = arith.constant dense<0.000000e+00> : vector<8xf32>
    %273 = vector.multi_reduction <add>, %272, %cst_123 [1] : vector<8x32xf32> to vector<8xf32>
    %274 = vector.shape_cast %273 : vector<8xf32> to vector<8x1xf32>
    %cst_124 = arith.constant 3.200000e+01 : f32
    %275 = vector.broadcast %cst_124 : f32 to vector<8x1xf32>
    %276 = arith.divf %274, %275 : vector<8x1xf32>
    %277 = vector.broadcast %269 : vector<8x1xf32> to vector<8x32xf32>
    %278 = arith.subf %261, %277 : vector<8x32xf32>
    %cst_125 = arith.constant 9.99999974E-6 : f32
    %279 = vector.broadcast %cst_125 : f32 to vector<8x1xf32>
    %280 = arith.addf %276, %279 : vector<8x1xf32>
    %281 = math.rsqrt %280 : vector<8x1xf32>
    %282 = vector.broadcast %281 : vector<8x1xf32> to vector<8x32xf32>
    %283 = arith.mulf %278, %282 : vector<8x32xf32>
    %284 = vector.broadcast %263 : vector<1x32xf32> to vector<8x32xf32>
    %285 = arith.mulf %283, %284 : vector<8x32xf32>
    %286 = vector.broadcast %265 : vector<1x32xf32> to vector<8x32xf32>
    %287 = arith.addf %285, %286 : vector<8x32xf32>
    %c1_126 = arith.constant 1 : index
    %c0_127 = arith.constant 0 : index
    %c0_128 = arith.constant 0 : index
    %288 = vector.load %arg10[%c1_126, %c0_127, %c0_128] : memref<2x32x64xf32, #tpu.memory_space<vmem>>, vector<1x32x64xf32>
    %289 = vector.shape_cast %288 : vector<1x32x64xf32> to vector<32x64xf32>
    %cst_129 = arith.constant dense<0.000000e+00> : vector<8x64xf32>
    %290 = tpu.matmul %287, %289, %cst_129 {dimension_numbers = #tpu.dot_dimension_numbers<[1], [0], [0], [1], [0, 0, 1, 1], [], []>} : vector<8x32xf32>, vector<32x64xf32>, vector<8x64xf32> -> vector<8x64xf32>
    %c1_130 = arith.constant 1 : index
    %c0_131 = arith.constant 0 : index
    %c0_132 = arith.constant 0 : index
    %291 = vector.load %arg11[%c1_130, %c0_131, %c0_132] : memref<2x1x64xf32, #tpu.memory_space<vmem>>, vector<1x1x64xf32>
    %292 = vector.shape_cast %291 : vector<1x1x64xf32> to vector<1x64xf32>
    %293 = vector.broadcast %292 : vector<1x64xf32> to vector<8x64xf32>
    %294 = arith.addf %290, %293 : vector<8x64xf32>
    %cst_133 = arith.constant 0.000000e+00 : f32
    %295 = vector.broadcast %cst_133 : f32 to vector<8x64xf32>
    %296 = arith.maximumf %294, %295 : vector<8x64xf32>
    %c1_134 = arith.constant 1 : index
    %c0_135 = arith.constant 0 : index
    %c0_136 = arith.constant 0 : index
    %297 = vector.load %arg12[%c1_134, %c0_135, %c0_136] : memref<2x64x32xf32, #tpu.memory_space<vmem>>, vector<1x64x32xf32>
    %298 = vector.shape_cast %297 : vector<1x64x32xf32> to vector<64x32xf32>
    %cst_137 = arith.constant dense<0.000000e+00> : vector<8x32xf32>
    %299 = tpu.matmul %296, %298, %cst_137 {dimension_numbers = #tpu.dot_dimension_numbers<[1], [0], [0], [1], [0, 0, 1, 1], [], []>} : vector<8x64xf32>, vector<64x32xf32>, vector<8x32xf32> -> vector<8x32xf32>
    %c1_138 = arith.constant 1 : index
    %c0_139 = arith.constant 0 : index
    %c0_140 = arith.constant 0 : index
    %300 = vector.load %arg13[%c1_138, %c0_139, %c0_140] : memref<2x1x32xf32, #tpu.memory_space<vmem>>, vector<1x1x32xf32>
    %301 = vector.shape_cast %300 : vector<1x1x32xf32> to vector<1x32xf32>
    %302 = vector.broadcast %301 : vector<1x32xf32> to vector<8x32xf32>
    %303 = arith.addf %299, %302 : vector<8x32xf32>
    %304 = arith.addf %287, %303 : vector<8x32xf32>
    %c1_141 = arith.constant 1 : index
    %c0_142 = arith.constant 0 : index
    %c0_143 = arith.constant 0 : index
    %305 = vector.load %arg14[%c1_141, %c0_142, %c0_143] : memref<2x1x32xf32, #tpu.memory_space<vmem>>, vector<1x1x32xf32>
    %306 = vector.shape_cast %305 : vector<1x1x32xf32> to vector<1x32xf32>
    %c1_144 = arith.constant 1 : index
    %c0_145 = arith.constant 0 : index
    %c0_146 = arith.constant 0 : index
    %307 = vector.load %arg15[%c1_144, %c0_145, %c0_146] : memref<2x1x32xf32, #tpu.memory_space<vmem>>, vector<1x1x32xf32>
    %308 = vector.shape_cast %307 : vector<1x1x32xf32> to vector<1x32xf32>
    %cst_147 = arith.constant dense<0.000000e+00> : vector<8xf32>
    %309 = vector.multi_reduction <add>, %304, %cst_147 [1] : vector<8x32xf32> to vector<8xf32>
    %310 = vector.shape_cast %309 : vector<8xf32> to vector<8x1xf32>
    %cst_148 = arith.constant 3.200000e+01 : f32
    %311 = vector.broadcast %cst_148 : f32 to vector<8x1xf32>
    %312 = arith.divf %310, %311 : vector<8x1xf32>
    %313 = vector.broadcast %312 : vector<8x1xf32> to vector<8x32xf32>
    %314 = arith.subf %304, %313 : vector<8x32xf32>
    %315 = arith.mulf %314, %314 : vector<8x32xf32>
    %cst_149 = arith.constant dense<0.000000e+00> : vector<8xf32>
    %316 = vector.multi_reduction <add>, %315, %cst_149 [1] : vector<8x32xf32> to vector<8xf32>
    %317 = vector.shape_cast %316 : vector<8xf32> to vector<8x1xf32>
    %cst_150 = arith.constant 3.200000e+01 : f32
    %318 = vector.broadcast %cst_150 : f32 to vector<8x1xf32>
    %319 = arith.divf %317, %318 : vector<8x1xf32>
    %320 = vector.broadcast %312 : vector<8x1xf32> to vector<8x32xf32>
    %321 = arith.subf %304, %320 : vector<8x32xf32>
    %cst_151 = arith.constant 9.99999974E-6 : f32
    %322 = vector.broadcast %cst_151 : f32 to vector<8x1xf32>
    %323 = arith.addf %319, %322 : vector<8x1xf32>
    %324 = math.rsqrt %323 : vector<8x1xf32>
    %325 = vector.broadcast %324 : vector<8x1xf32> to vector<8x32xf32>
    %326 = arith.mulf %321, %325 : vector<8x32xf32>
    %327 = vector.broadcast %306 : vector<1x32xf32> to vector<8x32xf32>
    %328 = arith.mulf %326, %327 : vector<8x32xf32>
    %329 = vector.broadcast %308 : vector<1x32xf32> to vector<8x32xf32>
    %330 = arith.addf %328, %329 : vector<8x32xf32>
    %c0_152 = arith.constant 0 : index
    %c0_153 = arith.constant 0 : index
    %c0_154 = arith.constant 0 : index
    %331 = vector.load %arg16[%c0_152, %c0_153, %c0_154] : memref<1x1x16xf32, #tpu.memory_space<vmem>>, vector<1x1x16xf32>
    %332 = vector.shape_cast %331 : vector<1x1x16xf32> to vector<1x16xf32>
    %c0_155 = arith.constant 0 : index
    %c0_156 = arith.constant 0 : index
    %333 = vector.load %arg17[%c0_155, %c0_156] : memref<16x16xf32, #tpu.memory_space<vmem>>, vector<16x16xf32>
    %cst_157 = arith.constant dense<0.000000e+00> : vector<1x16xf32>
    %334 = tpu.matmul %332, %333, %cst_157 {dimension_numbers = #tpu.dot_dimension_numbers<[1], [0], [0], [1], [0, 0, 1, 1], [], []>} : vector<1x16xf32>, vector<16x16xf32>, vector<1x16xf32> -> vector<1x16xf32>
    %c0_158 = arith.constant 0 : index
    %c0_159 = arith.constant 0 : index
    %335 = vector.load %arg18[%c0_158, %c0_159] : memref<1x16xf32, #tpu.memory_space<vmem>>, vector<1x16xf32>
    %336 = arith.addf %334, %335 : vector<1x16xf32>
    %337 = math.absf %336 : vector<1x16xf32>
    %cst_160 = arith.constant 1.000000e+00 : f32
    %338 = vector.broadcast %cst_160 : f32 to vector<1x16xf32>
    %339 = arith.addf %338, %337 : vector<1x16xf32>
    %340 = arith.divf %336, %339 : vector<1x16xf32>
    %c0_161 = arith.constant 0 : index
    %c0_162 = arith.constant 0 : index
    %c0_163 = arith.constant 0 : index
    %341 = vector.load %arg19[%c0_161, %c0_162, %c0_163] : memref<1x1x4xf32, #tpu.memory_space<vmem>>, vector<1x1x4xf32>
    %342 = vector.shape_cast %341 : vector<1x1x4xf32> to vector<1x4xf32>
    %c0_164 = arith.constant 0 : index
    %c0_165 = arith.constant 0 : index
    %343 = vector.load %arg20[%c0_164, %c0_165] : memref<4x16xf32, #tpu.memory_space<vmem>>, vector<4x16xf32>
    %cst_166 = arith.constant dense<0.000000e+00> : vector<1x16xf32>
    %344 = tpu.matmul %342, %343, %cst_166 {dimension_numbers = #tpu.dot_dimension_numbers<[1], [0], [0], [1], [0, 0, 1, 1], [], []>} : vector<1x4xf32>, vector<4x16xf32>, vector<1x16xf32> -> vector<1x16xf32>
    %c0_167 = arith.constant 0 : index
    %c0_168 = arith.constant 0 : index
    %345 = vector.load %arg21[%c0_167, %c0_168] : memref<16x16xf32, #tpu.memory_space<vmem>>, vector<16x16xf32>
    %cst_169 = arith.constant dense<0.000000e+00> : vector<1x16xf32>
    %346 = tpu.matmul %344, %345, %cst_169 {dimension_numbers = #tpu.dot_dimension_numbers<[1], [0], [0], [1], [0, 0, 1, 1], [], []>} : vector<1x16xf32>, vector<16x16xf32>, vector<1x16xf32> -> vector<1x16xf32>
    %c0_170 = arith.constant 0 : index
    %c0_171 = arith.constant 0 : index
    %347 = vector.load %arg22[%c0_170, %c0_171] : memref<1x16xf32, #tpu.memory_space<vmem>>, vector<1x16xf32>
    %348 = arith.addf %346, %347 : vector<1x16xf32>
    %349 = math.absf %348 : vector<1x16xf32>
    %cst_172 = arith.constant 1.000000e+00 : f32
    %350 = vector.broadcast %cst_172 : f32 to vector<1x16xf32>
    %351 = arith.addf %350, %349 : vector<1x16xf32>
    %352 = arith.divf %348, %351 : vector<1x16xf32>
    %353 = vector.shape_cast %340 : vector<1x16xf32> to vector<1x16xf32>
    %354 = vector.broadcast %353 : vector<1x16xf32> to vector<8x16xf32>
    %355 = vector.shape_cast %352 : vector<1x16xf32> to vector<1x16xf32>
    %356 = vector.broadcast %355 : vector<1x16xf32> to vector<8x16xf32>
    %357 = tpu.concatenate %330, %354, %356 in 1 : vector<8x32xf32>, vector<8x16xf32>, vector<8x16xf32> -> vector<8x64xf32>
    %c0_173 = arith.constant 0 : index
    %c0_174 = arith.constant 0 : index
    %c0_175 = arith.constant 0 : index
    %358 = vector.load %arg23[%c0_173, %c0_174, %c0_175] : memref<1x8x64xf32, #tpu.memory_space<vmem>>, vector<1x8x64xf32>
    %359 = vector.shape_cast %358 : vector<1x8x64xf32> to vector<8x64xf32>
    %360 = vector.shape_cast %357 : vector<8x64xf32> to vector<1x8x64xf32>
    tpu.vector_store %arg23[%c0_173, %c0_174, %c0_175], %360 {strides = array<i32>} : memref<1x8x64xf32, #tpu.memory_space<vmem>>, vector<1x8x64xf32>,
    return
  }
  func.func @transform_0(%arg0: i32, %arg1: memref<2xi32, #tpu.memory_space<smem>>) -> (i32, i32, i32) {
    %c0_i32 = arith.constant 0 : i32
    %c0_i32_0 = arith.constant 0 : i32
    %c0_i32_1 = arith.constant 0 : i32
    return %arg0, %c0_i32, %c0_i32_0 : i32, i32, i32
  }
  func.func @transform_1(%arg0: i32, %arg1: memref<2xi32, #tpu.memory_space<smem>>) -> (i32, i32) {
    %c0_i32 = arith.constant 0 : i32
    %c0_i32_0 = arith.constant 0 : i32
    %c0_i32_1 = arith.constant 0 : i32
    return %c0_i32, %c0_i32_0 : i32, i32
  }
  func.func @transform_2(%arg0: i32, %arg1: memref<2xi32, #tpu.memory_space<smem>>) -> (i32, i32, i32) {
    %c0_i32 = arith.constant 0 : i32
    %c0_i32_0 = arith.constant 0 : i32
    %c0_i32_1 = arith.constant 0 : i32
    %c0_i32_2 = arith.constant 0 : i32
    return %c0_i32, %c0_i32_0, %c0_i32_1 : i32, i32, i32
  }
  func.func @transform_3(%arg0: i32, %arg1: memref<2xi32, #tpu.memory_space<smem>>) -> (i32, i32, i32) {
    %c0_i32 = arith.constant 0 : i32
    %c0_i32_0 = arith.constant 0 : i32
    %c0_i32_1 = arith.constant 0 : i32
    %c0_i32_2 = arith.constant 0 : i32
    return %c0_i32, %c0_i32_0, %c0_i32_1 : i32, i32, i32
  }
  func.func @transform_4(%arg0: i32, %arg1: memref<2xi32, #tpu.memory_space<smem>>) -> (i32, i32, i32) {
    %c0_i32 = arith.constant 0 : i32
    %c0_i32_0 = arith.constant 0 : i32
    %c0_i32_1 = arith.constant 0 : i32
    %c0_i32_2 = arith.constant 0 : i32
    return %c0_i32, %c0_i32_0, %c0_i32_1 : i32, i32, i32
  }
  func.func @transform_5(%arg0: i32, %arg1: memref<2xi32, #tpu.memory_space<smem>>) -> (i32, i32, i32) {
    %c0_i32 = arith.constant 0 : i32
    %c0_i32_0 = arith.constant 0 : i32
    %c0_i32_1 = arith.constant 0 : i32
    %c0_i32_2 = arith.constant 0 : i32
    return %c0_i32, %c0_i32_0, %c0_i32_1 : i32, i32, i32
  }
  func.func @transform_6(%arg0: i32, %arg1: memref<2xi32, #tpu.memory_space<smem>>) -> (i32, i32, i32) {
    %c0_i32 = arith.constant 0 : i32
    %c0_i32_0 = arith.constant 0 : i32
    %c0_i32_1 = arith.constant 0 : i32
    %c0_i32_2 = arith.constant 0 : i32
    return %c0_i32, %c0_i32_0, %c0_i32_1 : i32, i32, i32
  }
  func.func @transform_7(%arg0: i32, %arg1: memref<2xi32, #tpu.memory_space<smem>>) -> (i32, i32, i32) {
    %c0_i32 = arith.constant 0 : i32
    %c0_i32_0 = arith.constant 0 : i32
    %c0_i32_1 = arith.constant 0 : i32
    %c0_i32_2 = arith.constant 0 : i32
    return %c0_i32, %c0_i32_0, %c0_i32_1 : i32, i32, i32
  }
  func.func @transform_8(%arg0: i32, %arg1: memref<2xi32, #tpu.memory_space<smem>>) -> (i32, i32, i32) {
    %c0_i32 = arith.constant 0 : i32
    %c0_i32_0 = arith.constant 0 : i32
    %c0_i32_1 = arith.constant 0 : i32
    %c0_i32_2 = arith.constant 0 : i32
    return %c0_i32, %c0_i32_0, %c0_i32_1 : i32, i32, i32
  }
  func.func @transform_9(%arg0: i32, %arg1: memref<2xi32, #tpu.memory_space<smem>>) -> (i32, i32, i32) {
    %c0_i32 = arith.constant 0 : i32
    %c0_i32_0 = arith.constant 0 : i32
    %c0_i32_1 = arith.constant 0 : i32
    %c0_i32_2 = arith.constant 0 : i32
    return %c0_i32, %c0_i32_0, %c0_i32_1 : i32, i32, i32
  }
  func.func @transform_10(%arg0: i32, %arg1: memref<2xi32, #tpu.memory_space<smem>>) -> (i32, i32, i32) {
    %c0_i32 = arith.constant 0 : i32
    %c0_i32_0 = arith.constant 0 : i32
    %c0_i32_1 = arith.constant 0 : i32
    %c0_i32_2 = arith.constant 0 : i32
    return %c0_i32, %c0_i32_0, %c0_i32_1 : i32, i32, i32
  }
  func.func @transform_11(%arg0: i32, %arg1: memref<2xi32, #tpu.memory_space<smem>>) -> (i32, i32, i32) {
    %c0_i32 = arith.constant 0 : i32
    %c0_i32_0 = arith.constant 0 : i32
    %c0_i32_1 = arith.constant 0 : i32
    %c0_i32_2 = arith.constant 0 : i32
    return %c0_i32, %c0_i32_0, %c0_i32_1 : i32, i32, i32
  }
  func.func @transform_12(%arg0: i32, %arg1: memref<2xi32, #tpu.memory_space<smem>>) -> (i32, i32, i32) {
    %c0_i32 = arith.constant 0 : i32
    %c0_i32_0 = arith.constant 0 : i32
    %c0_i32_1 = arith.constant 0 : i32
    %c0_i32_2 = arith.constant 0 : i32
    return %c0_i32, %c0_i32_0, %c0_i32_1 : i32, i32, i32
  }
  func.func @transform_13(%arg0: i32, %arg1: memref<2xi32, #tpu.memory_space<smem>>) -> (i32, i32, i32) {
    %c0_i32 = arith.constant 0 : i32
    %c0_i32_0 = arith.constant 0 : i32
    %c0_i32_1 = arith.constant 0 : i32
    %c0_i32_2 = arith.constant 0 : i32
    return %c0_i32, %c0_i32_0, %c0_i32_1 : i32, i32, i32
  }
  func.func @transform_14(%arg0: i32, %arg1: memref<2xi32, #tpu.memory_space<smem>>) -> (i32, i32, i32) {
    %c0_i32 = arith.constant 0 : i32
    %c0_i32_0 = arith.constant 0 : i32
    %c0_i32_1 = arith.constant 0 : i32
    return %arg0, %c0_i32, %c0_i32_0 : i32, i32, i32
  }
  func.func @transform_15(%arg0: i32, %arg1: memref<2xi32, #tpu.memory_space<smem>>) -> (i32, i32) {
    %c0_i32 = arith.constant 0 : i32
    %c0_i32_0 = arith.constant 0 : i32
    %c0_i32_1 = arith.constant 0 : i32
    return %c0_i32, %c0_i32_0 : i32, i32
  }
  func.func @transform_16(%arg0: i32, %arg1: memref<2xi32, #tpu.memory_space<smem>>) -> (i32, i32) {
    %c0_i32 = arith.constant 0 : i32
    %c0_i32_0 = arith.constant 0 : i32
    %c0_i32_1 = arith.constant 0 : i32
    return %c0_i32, %c0_i32_0 : i32, i32
  }
  func.func @transform_17(%arg0: i32, %arg1: memref<2xi32, #tpu.memory_space<smem>>) -> (i32, i32, i32) {
    %c0_i32 = arith.constant 0 : i32
    %c0_i32_0 = arith.constant 0 : i32
    %c0_i32_1 = arith.constant 0 : i32
    return %arg0, %c0_i32, %c0_i32_0 : i32, i32, i32
  }
  func.func @transform_18(%arg0: i32, %arg1: memref<2xi32, #tpu.memory_space<smem>>) -> (i32, i32) {
    %c0_i32 = arith.constant 0 : i32
    %c0_i32_0 = arith.constant 0 : i32
    %c0_i32_1 = arith.constant 0 : i32
    return %c0_i32, %c0_i32_0 : i32, i32
  }
  func.func @transform_19(%arg0: i32, %arg1: memref<2xi32, #tpu.memory_space<smem>>) -> (i32, i32) {
    %c0_i32 = arith.constant 0 : i32
    %c0_i32_0 = arith.constant 0 : i32
    %c0_i32_1 = arith.constant 0 : i32
    return %c0_i32, %c0_i32_0 : i32, i32
  }
  func.func @transform_20(%arg0: i32, %arg1: memref<2xi32, #tpu.memory_space<smem>>) -> (i32, i32) {
    %c0_i32 = arith.constant 0 : i32
    %c0_i32_0 = arith.constant 0 : i32
    %c0_i32_1 = arith.constant 0 : i32
    return %c0_i32, %c0_i32_0 : i32, i32
  }
  func.func @transform_21(%arg0: i32, %arg1: memref<2xi32, #tpu.memory_space<smem>>) -> (i32, i32, i32) {
    %c0_i32 = arith.constant 0 : i32
    %c0_i32_0 = arith.constant 0 : i32
    %c0_i32_1 = arith.constant 0 : i32
    return %arg0, %c0_i32, %c0_i32_0 : i32, i32, i32
  }
}

</mosaic_0001>

<llo_original>
// kernel: tpu_custom_call.1
$region0: #{tpu_custom_call.1}
  #allocation0 [shape = 'u32[]', space=smem, size = 0x4, offset = 0x4, fixed_abs, tag = 'smem constant byte address 0x4 - core index']
  #allocation1 [shape = 'u32[144,128]{1,0:T(1,128)}', space=vmem, size = 0x12000, scoped, tag = 'internal scratch']
  #allocation2 [shape = 's32[1]{0}', space=sflag, size = 0x4, scoped, tag = 'scoped memory for tpu_custom_call.1']
  #allocation3 [shape = 'u8[512]{0}', space=smem, size = 0x200, scoped, tag = 'prefetched SMEM operand 0']
  %s0 = inlined_call_operand.hbm [shape: s32[2], index: 0, kind: input, shape index: {}]
  %s1 = inlined_call_operand.hbm [shape: f32[2,8,32], index: 1, kind: input, shape index: {}]
  %s2 = inlined_call_operand.hbm [shape: f32[8,32], index: 2, kind: input, shape index: {}]
  %s3 = inlined_call_operand.vmem [shape: f32[2,32,96], index: 3, kind: input, shape index: {}]
  %s4 = inlined_call_operand.hbm [shape: f32[2,1,96], index: 4, kind: input, shape index: {}]
  %s5 = inlined_call_operand.vmem [shape: f32[2,32,32], index: 5, kind: input, shape index: {}]
  %s6 = inlined_call_operand.hbm [shape: f32[2,1,32], index: 6, kind: input, shape index: {}]
  %s7 = inlined_call_operand.hbm [shape: f32[2,1,32], index: 7, kind: input, shape index: {}]
  %s8 = inlined_call_operand.hbm [shape: f32[2,1,32], index: 8, kind: input, shape index: {}]
  %s9 = inlined_call_operand.vmem [shape: f32[2,32,64], index: 9, kind: input, shape index: {}]
  %s10 = inlined_call_operand.hbm [shape: f32[2,1,64], index: 10, kind: input, shape index: {}]
  %s11 = inlined_call_operand.vmem [shape: f32[2,64,32], index: 11, kind: input, shape index: {}]
  %s12 = inlined_call_operand.hbm [shape: f32[2,1,32], index: 12, kind: input, shape index: {}]
  %s13 = inlined_call_operand.hbm [shape: f32[2,1,32], index: 13, kind: input, shape index: {}]
  %s14 = inlined_call_operand.hbm [shape: f32[2,1,32], index: 14, kind: input, shape index: {}]
  %s15 = inlined_call_operand.hbm [shape: f32[2,1,16], index: 15, kind: input, shape index: {}]
  %s16 = inlined_call_operand.vmem [shape: f32[16,16], index: 16, kind: input, shape index: {}]
  %s17 = inlined_call_operand.hbm [shape: f32[1,16], index: 17, kind: input, shape index: {}]
  %s18 = inlined_call_operand.hbm [shape: f32[2,1,4], index: 18, kind: input, shape index: {}]
  %s19 = inlined_call_operand.hbm [shape: f32[4,16], index: 19, kind: input, shape index: {}]
  %s20 = inlined_call_operand.vmem [shape: f32[16,16], index: 20, kind: input, shape index: {}]
  %s21 = inlined_call_operand.vmem [shape: f32[1,16], index: 21, kind: input, shape index: {}]
  %s22 = inlined_call_operand.hbm [shape: f32[2,8,64], index: 22, kind: output, shape index: {}]
  %s23 = sld [smem:[#allocation0]]
  $region173: #{tpu_custom_call.1} parent=0
    _
  %s25 = ssub.s32 1, %s23
  %s26 = scalar_select 0, %s25, %s23
  %28 = dma.hbm_to_smem %s0, 16, [#allocation3], [#allocation2]
  %29 = dma.done [#allocation2], 16
  %30 = sfence
  $region1: #{tpu_custom_call.1} parent=0
    #allocation4 [shape = 'u8[8192]{0}', space=vmem, size = 0x2000, scoped, tag = 'input window, operand 1']
    #allocation5 [shape = 's32[2]{0}', space=sflag, size = 0x8, scoped, tag = 'scoped memory for tpu_custom_call.1']
    #allocation6 [shape = 's32[2]{0}', space=sflag, size = 0x8, scoped, tag = 'scoped memory for tpu_custom_call.1']
    #allocation7 [shape = 'u8[4096]{0}', space=vmem, size = 0x1000, scoped, tag = 'input window, operand 2, single buffered']
    #allocation8 [shape = 's32[1]{0}', space=sflag, size = 0x4, scoped, tag = 'scoped memory for tpu_custom_call.1']
    #allocation9 [shape = 'u8[1024]{0}', space=vmem, size = 0x400, scoped, tag = 'input window, operand 4, single buffered']
    #allocation10 [shape = 'u8[1024]{0}', space=vmem, size = 0x400, scoped, tag = 'input window, operand 6, single buffered']
    #allocation11 [shape = 's32[1]{0}', space=sflag, size = 0x4, scoped, tag = 'scoped memory for tpu_custom_call.1']
    #allocation12 [shape = 'u8[1024]{0}', space=vmem, size = 0x400, scoped, tag = 'input window, operand 7, single buffered']
    #allocation13 [shape = 'u8[1024]{0}', space=vmem, size = 0x400, scoped, tag = 'input window, operand 8, single buffered']
    #allocation14 [shape = 's32[1]{0}', space=sflag, size = 0x4, scoped, tag = 'scoped memory for tpu_custom_call.1']
    #allocation15 [shape = 'u8[1024]{0}', space=vmem, size = 0x400, scoped, tag = 'input window, operand 10, single buffered']
    #allocation16 [shape = 'u8[1024]{0}', space=vmem, size = 0x400, scoped, tag = 'input window, operand 12, single buffered']
    #allocation17 [shape = 's32[1]{0}', space=sflag, size = 0x4, scoped, tag = 'scoped memory for tpu_custom_call.1']
    #allocation18 [shape = 'u8[1024]{0}', space=vmem, size = 0x400, scoped, tag = 'input window, operand 13, single buffered']
    #allocation19 [shape = 'u8[1024]{0}', space=vmem, size = 0x400, scoped, tag = 'input window, operand 14, single buffered']
    #allocation20 [shape = 's32[1]{0}', space=sflag, size = 0x4, scoped, tag = 'scoped memory for tpu_custom_call.1']
    #allocation21 [shape = 'u8[1024]{0}', space=vmem, size = 0x400, scoped, tag = 'input window, operand 15']
    #allocation22 [shape = 'u8[512]{0}', space=vmem, size = 0x400, scoped, tag = 'input window, operand 17, single buffered']
    #allocation23 [shape = 'u8[1024]{0}', space=vmem, size = 0x400, scoped, tag = 'input window, operand 18']
    #allocation24 [shape = 'u8[2048]{0}', space=vmem, size = 0x800, scoped, tag = 'input window, operand 19, single buffered']
    #allocation25 [shape = 'u8[8192]{0}', space=vmem, size = 0x2000, scoped, tag = 'output window, operand 0']
    %31 = vsyncpa [#allocation5], 0
    %s32 = scalar_lea.sflag [#allocation5], 1
    %33 = vsyncpa %s32, 0
    %34 = vsyncpa [#allocation8], 0
    %35 = vsyncpa [#allocation11], 0
    %36 = vsyncpa [#allocation14], 0
    %37 = vsyncpa [#allocation17], 0
    %38 = vsyncpa [#allocation20], 0
    %39 = vsyncpa [#allocation6], 0
    %s40 = scalar_lea.sflag [#allocation6], 1
    %41 = vsyncpa %s40, 0
    loop: start=0, step=1, limit=4
    $region2: #{tpu_custom_call.1} parent=1 // loop_pre_header
      _
    $region3: #{tpu_custom_call.1} parent=1 // loop_header
      %s43 = sphi 0, %s47
      %p44 = scmp.ge.s32.totalorder %s43, 4
      %s53 = sphi 0, %s55
      %s56 = sphi 0, %s53
      %s57 = sphi 0, %s56
      %s73 = sphi 0, %s57
      %s77 = sphi 0, %s77
      %s79 = sphi 0, %s77
      %s80 = sphi 0, %s79
      %s94 = sphi 0, %s80
      %s98 = sphi 0, %s98
      %s100 = sphi 0, %s98
      %s101 = sphi 0, %s100
      %s115 = sphi 0, %s101
      %s119 = sphi 0, %s119
      %s121 = sphi 0, %s119
      %s122 = sphi 0, %s121
      %s136 = sphi 0, %s122
      %s140 = sphi 0, %s140
      %s142 = sphi 0, %s140
      %s143 = sphi 0, %s142
      %s157 = sphi 0, %s143
      %s161 = sphi 0, %s161
      %s163 = sphi 0, %s161
      %s164 = sphi 0, %s163
      %s178 = sphi 0, %s164
      %s182 = sphi 0, %s182
      %s184 = sphi 0, %s182
      %s185 = sphi 0, %s184
      %s199 = sphi 0, %s185
      %s203 = sphi 0, %s203
      %s205 = sphi 0, %s203
      %s206 = sphi 0, %s205
      %s220 = sphi 0, %s206
      %s224 = sphi 0, %s224
      %s226 = sphi 0, %s224
      %s227 = sphi 0, %s226
      %s241 = sphi 0, %s227
      %s245 = sphi 0, %s245
      %s247 = sphi 0, %s245
      %s248 = sphi 0, %s247
      %s262 = sphi 0, %s248
      %s266 = sphi 0, %s266
      %s268 = sphi 0, %s266
      %s269 = sphi 0, %s268
      %s283 = sphi 0, %s269
      %s287 = sphi 0, %s287
      %s289 = sphi 0, %s287
      %s290 = sphi 0, %s289
      %s304 = sphi 0, %s290
      %s308 = sphi 0, %s308
      %s310 = sphi 0, %s308
      %s311 = sphi 0, %s310
      %s325 = sphi 0, %s311
      %s329 = sphi 0, %s329
      %s331 = sphi 0, %s329
      %s332 = sphi 0, %s331
      %s346 = sphi 0, %s332
      %s352 = sphi 0, %s354
      %s355 = sphi 0, %s352
      %s356 = sphi 0, %s355
      %s372 = sphi 0, %s356
      %s376 = sphi 0, %s376
      %s378 = sphi 0, %s376
      %s379 = sphi 0, %s378
      %s393 = sphi 0, %s379
      %s397 = sphi 0, %s397
      %s399 = sphi 0, %s397
      %s400 = sphi 0, %s399
      %s414 = sphi 0, %s400
      %s420 = sphi 0, %s422
      %s423 = sphi 0, %s420
      %s424 = sphi 0, %s423
      %s440 = sphi 0, %s424
      %s444 = sphi 0, %s444
      %s446 = sphi 0, %s444
      %s447 = sphi 0, %s446
      %s461 = sphi 0, %s447
      %s465 = sphi 0, %s465
      %s467 = sphi 0, %s465
      %s468 = sphi 0, %s467
      %s482 = sphi 0, %s468
      %s486 = sphi 0, %s486
      %s488 = sphi 0, %s486
      %s489 = sphi 0, %s488
      %s503 = sphi 0, %s489
      %s509 = sphi 0, %s511
      %s512 = sphi 0, %s509
      %s513 = sphi 0, %s512
      %s529 = sphi 0, %s513
    $region4: #{tpu_custom_call.1} parent=1 // loop_header_branch
      %46 = sbr.rel (%p44) target = $region8
    $region5: #{tpu_custom_call.1} parent=1 // loop_body
      %s48 = ssub.s32 %s43, 1
      %s49 = ssub.s32 %s43, 2
      %s50 = sadd.s32 %s43, 1
      %s51 = ssub.s32 %s43, %s50
      %p52 = scmp.eq.s32.totalorder %s51, 0
      %s54 = sadd.s32 %s53, 1
      %s55 = scalar_select %p52, %s53, %s54
      %p58 = pneg %p52
      %p59 = scmp.eq.s32.totalorder %s43, 1
      %p60 = por %p58, %p59
      %p61 = scmp.ne.s32.totalorder %s53, %s56
      %p62 = scmp.eq.s32.totalorder %s43, 0
      %p63 = por %p61, %p62
      %p64 = scmp.ne.s32.totalorder %s53, %s56
      %p65 = scmp.eq.s32.totalorder %s48, 1
      %p66 = por %p64, %p65
      %p67 = scmp.ne.s32.totalorder %s56, %s57
      %p68 = scmp.eq.s32.totalorder %s48, 0
      %p69 = por %p67, %p68
      %p70 = scmp.ne.s32.totalorder %s56, %s57
      %p71 = scmp.eq.s32.totalorder %s49, 1
      %p72 = por %p70, %p71
      %p74 = scmp.ne.s32.totalorder %s57, %s73
      %p75 = scmp.eq.s32.totalorder %s49, 0
      %p76 = por %p74, %p75
      %s78 = sadd.s32 %s77, 1
      %p81 = scmp.eq.s32.totalorder %s43, 1
      %p82 = scmp.ne.s32.totalorder %s77, %s79
      %p83 = scmp.eq.s32.totalorder %s43, 0
      %p84 = por %p82, %p83
      %p85 = scmp.ne.s32.totalorder %s77, %s79
      %p86 = scmp.eq.s32.totalorder %s48, 1
      %p87 = por %p85, %p86
      %p88 = scmp.ne.s32.totalorder %s79, %s80
      %p89 = scmp.eq.s32.totalorder %s48, 0
      %p90 = por %p88, %p89
      %p91 = scmp.ne.s32.totalorder %s79, %s80
      %p92 = scmp.eq.s32.totalorder %s49, 1
      %p93 = por %p91, %p92
      %p95 = scmp.ne.s32.totalorder %s80, %s94
      %p96 = scmp.eq.s32.totalorder %s49, 0
      %p97 = por %p95, %p96
      %s99 = sadd.s32 %s98, 1
      %p102 = scmp.eq.s32.totalorder %s43, 1
      %p103 = scmp.ne.s32.totalorder %s98, %s100
      %p104 = scmp.eq.s32.totalorder %s43, 0
      %p105 = por %p103, %p104
      %p106 = scmp.ne.s32.totalorder %s98, %s100
      %p107 = scmp.eq.s32.totalorder %s48, 1
      %p108 = por %p106, %p107
      %p109 = scmp.ne.s32.totalorder %s100, %s101
      %p110 = scmp.eq.s32.totalorder %s48, 0
      %p111 = por %p109, %p110
      %p112 = scmp.ne.s32.totalorder %s100, %s101
      %p113 = scmp.eq.s32.totalorder %s49, 1
      %p114 = por %p112, %p113
      %p116 = scmp.ne.s32.totalorder %s101, %s115
      %p117 = scmp.eq.s32.totalorder %s49, 0
      %p118 = por %p116, %p117
      %s120 = sadd.s32 %s119, 1
      %p123 = scmp.eq.s32.totalorder %s43, 1
      %p124 = scmp.ne.s32.totalorder %s119, %s121
      %p125 = scmp.eq.s32.totalorder %s43, 0
      %p126 = por %p124, %p125
      %p127 = scmp.ne.s32.totalorder %s119, %s121
      %p128 = scmp.eq.s32.totalorder %s48, 1
      %p129 = por %p127, %p128
      %p130 = scmp.ne.s32.totalorder %s121, %s122
      %p131 = scmp.eq.s32.totalorder %s48, 0
      %p132 = por %p130, %p131
      %p133 = scmp.ne.s32.totalorder %s121, %s122
      %p134 = scmp.eq.s32.totalorder %s49, 1
      %p135 = por %p133, %p134
      %p137 = scmp.ne.s32.totalorder %s122, %s136
      %p138 = scmp.eq.s32.totalorder %s49, 0
      %p139 = por %p137, %p138
      %s141 = sadd.s32 %s140, 1
      %p144 = scmp.eq.s32.totalorder %s43, 1
      %p145 = scmp.ne.s32.totalorder %s140, %s142
      %p146 = scmp.eq.s32.totalorder %s43, 0
      %p147 = por %p145, %p146
      %p148 = scmp.ne.s32.totalorder %s140, %s142
      %p149 = scmp.eq.s32.totalorder %s48, 1
      %p150 = por %p148, %p149
      %p151 = scmp.ne.s32.totalorder %s142, %s143
      %p152 = scmp.eq.s32.totalorder %s48, 0
      %p153 = por %p151, %p152
      %p154 = scmp.ne.s32.totalorder %s142, %s143
      %p155 = scmp.eq.s32.totalorder %s49, 1
      %p156 = por %p154, %p155
      %p158 = scmp.ne.s32.totalorder %s143, %s157
      %p159 = scmp.eq.s32.totalorder %s49, 0
      %p160 = por %p158, %p159
      %s162 = sadd.s32 %s161, 1
      %p165 = scmp.eq.s32.totalorder %s43, 1
      %p166 = scmp.ne.s32.totalorder %s161, %s163
      %p167 = scmp.eq.s32.totalorder %s43, 0
      %p168 = por %p166, %p167
      %p169 = scmp.ne.s32.totalorder %s161, %s163
      %p170 = scmp.eq.s32.totalorder %s48, 1
      %p171 = por %p169, %p170
      %p172 = scmp.ne.s32.totalorder %s163, %s164
      %p173 = scmp.eq.s32.totalorder %s48, 0
      %p174 = por %p172, %p173
      %p175 = scmp.ne.s32.totalorder %s163, %s164
      %p176 = scmp.eq.s32.totalorder %s49, 1
      %p177 = por %p175, %p176
      %p179 = scmp.ne.s32.totalorder %s164, %s178
      %p180 = scmp.eq.s32.totalorder %s49, 0
      %p181 = por %p179, %p180
      %s183 = sadd.s32 %s182, 1
      %p186 = scmp.eq.s32.totalorder %s43, 1
      %p187 = scmp.ne.s32.totalorder %s182, %s184
      %p188 = scmp.eq.s32.totalorder %s43, 0
      %p189 = por %p187, %p188
      %p190 = scmp.ne.s32.totalorder %s182, %s184
      %p191 = scmp.eq.s32.totalorder %s48, 1
      %p192 = por %p190, %p191
      %p193 = scmp.ne.s32.totalorder %s184, %s185
      %p194 = scmp.eq.s32.totalorder %s48, 0
      %p195 = por %p193, %p194
      %p196 = scmp.ne.s32.totalorder %s184, %s185
      %p197 = scmp.eq.s32.totalorder %s49, 1
      %p198 = por %p196, %p197
      %p200 = scmp.ne.s32.totalorder %s185, %s199
      %p201 = scmp.eq.s32.totalorder %s49, 0
      %p202 = por %p200, %p201
      %s204 = sadd.s32 %s203, 1
      %p207 = scmp.eq.s32.totalorder %s43, 1
      %p208 = scmp.ne.s32.totalorder %s203, %s205
      %p209 = scmp.eq.s32.totalorder %s43, 0
      %p210 = por %p208, %p209
      %p211 = scmp.ne.s32.totalorder %s203, %s205
      %p212 = scmp.eq.s32.totalorder %s48, 1
      %p213 = por %p211, %p212
      %p214 = scmp.ne.s32.totalorder %s205, %s206
      %p215 = scmp.eq.s32.totalorder %s48, 0
      %p216 = por %p214, %p215
      %p217 = scmp.ne.s32.totalorder %s205, %s206
      %p218 = scmp.eq.s32.totalorder %s49, 1
      %p219 = por %p217, %p218
      %p221 = scmp.ne.s32.totalorder %s206, %s220
      %p222 = scmp.eq.s32.totalorder %s49, 0
      %p223 = por %p221, %p222
      %s225 = sadd.s32 %s224, 1
      %p228 = scmp.eq.s32.totalorder %s43, 1
      %p229 = scmp.ne.s32.totalorder %s224, %s226
      %p230 = scmp.eq.s32.totalorder %s43, 0
      %p231 = por %p229, %p230
      %p232 = scmp.ne.s32.totalorder %s224, %s226
      %p233 = scmp.eq.s32.totalorder %s48, 1
      %p234 = por %p232, %p233
      %p235 = scmp.ne.s32.totalorder %s226, %s227
      %p236 = scmp.eq.s32.totalorder %s48, 0
      %p237 = por %p235, %p236
      %p238 = scmp.ne.s32.totalorder %s226, %s227
      %p239 = scmp.eq.s32.totalorder %s49, 1
      %p240 = por %p238, %p239
      %p242 = scmp.ne.s32.totalorder %s227, %s241
      %p243 = scmp.eq.s32.totalorder %s49, 0
      %p244 = por %p242, %p243
      %s246 = sadd.s32 %s245, 1
      %p249 = scmp.eq.s32.totalorder %s43, 1
      %p250 = scmp.ne.s32.totalorder %s245, %s247
      %p251 = scmp.eq.s32.totalorder %s43, 0
      %p252 = por %p250, %p251
      %p253 = scmp.ne.s32.totalorder %s245, %s247
      %p254 = scmp.eq.s32.totalorder %s48, 1
      %p255 = por %p253, %p254
      %p256 = scmp.ne.s32.totalorder %s247, %s248
      %p257 = scmp.eq.s32.totalorder %s48, 0
      %p258 = por %p256, %p257
      %p259 = scmp.ne.s32.totalorder %s247, %s248
      %p260 = scmp.eq.s32.totalorder %s49, 1
      %p261 = por %p259, %p260
      %p263 = scmp.ne.s32.totalorder %s248, %s262
      %p264 = scmp.eq.s32.totalorder %s49, 0
      %p265 = por %p263, %p264
      %s267 = sadd.s32 %s266, 1
      %p270 = scmp.eq.s32.totalorder %s43, 1
      %p271 = scmp.ne.s32.totalorder %s266, %s268
      %p272 = scmp.eq.s32.totalorder %s43, 0
      %p273 = por %p271, %p272
      %p274 = scmp.ne.s32.totalorder %s266, %s268
      %p275 = scmp.eq.s32.totalorder %s48, 1
      %p276 = por %p274, %p275
      %p277 = scmp.ne.s32.totalorder %s268, %s269
      %p278 = scmp.eq.s32.totalorder %s48, 0
      %p279 = por %p277, %p278
      %p280 = scmp.ne.s32.totalorder %s268, %s269
      %p281 = scmp.eq.s32.totalorder %s49, 1
      %p282 = por %p280, %p281
      %p284 = scmp.ne.s32.totalorder %s269, %s283
      %p285 = scmp.eq.s32.totalorder %s49, 0
      %p286 = por %p284, %p285
      %s288 = sadd.s32 %s287, 1
      %p291 = scmp.eq.s32.totalorder %s43, 1
      %p292 = scmp.ne.s32.totalorder %s287, %s289
      %p293 = scmp.eq.s32.totalorder %s43, 0
      %p294 = por %p292, %p293
      %p295 = scmp.ne.s32.totalorder %s287, %s289
      %p296 = scmp.eq.s32.totalorder %s48, 1
      %p297 = por %p295, %p296
      %p298 = scmp.ne.s32.totalorder %s289, %s290
      %p299 = scmp.eq.s32.totalorder %s48, 0
      %p300 = por %p298, %p299
      %p301 = scmp.ne.s32.totalorder %s289, %s290
      %p302 = scmp.eq.s32.totalorder %s49, 1
      %p303 = por %p301, %p302
      %p305 = scmp.ne.s32.totalorder %s290, %s304
      %p306 = scmp.eq.s32.totalorder %s49, 0
      %p307 = por %p305, %p306
      %s309 = sadd.s32 %s308, 1
      %p312 = scmp.eq.s32.totalorder %s43, 1
      %p313 = scmp.ne.s32.totalorder %s308, %s310
      %p314 = scmp.eq.s32.totalorder %s43, 0
      %p315 = por %p313, %p314
      %p316 = scmp.ne.s32.totalorder %s308, %s310
      %p317 = scmp.eq.s32.totalorder %s48, 1
      %p318 = por %p316, %p317
      %p319 = scmp.ne.s32.totalorder %s310, %s311
      %p320 = scmp.eq.s32.totalorder %s48, 0
      %p321 = por %p319, %p320
      %p322 = scmp.ne.s32.totalorder %s310, %s311
      %p323 = scmp.eq.s32.totalorder %s49, 1
      %p324 = por %p322, %p323
      %p326 = scmp.ne.s32.totalorder %s311, %s325
      %p327 = scmp.eq.s32.totalorder %s49, 0
      %p328 = por %p326, %p327
      %s330 = sadd.s32 %s329, 1
      %p333 = scmp.eq.s32.totalorder %s43, 1
      %p334 = scmp.ne.s32.totalorder %s329, %s331
      %p335 = scmp.eq.s32.totalorder %s43, 0
      %p336 = por %p334, %p335
      %p337 = scmp.ne.s32.totalorder %s329, %s331
      %p338 = scmp.eq.s32.totalorder %s48, 1
      %p339 = por %p337, %p338
      %p340 = scmp.ne.s32.totalorder %s331, %s332
      %p341 = scmp.eq.s32.totalorder %s48, 0
      %p342 = por %p340, %p341
      %p343 = scmp.ne.s32.totalorder %s331, %s332
      %p344 = scmp.eq.s32.totalorder %s49, 1
      %p345 = por %p343, %p344
      %p347 = scmp.ne.s32.totalorder %s332, %s346
      %p348 = scmp.eq.s32.totalorder %s49, 0
      %p349 = por %p347, %p348
      %s350 = ssub.s32 %s43, %s50
      %p351 = scmp.eq.s32.totalorder %s350, 0
      %s353 = sadd.s32 %s352, 1
      %s354 = scalar_select %p351, %s352, %s353
      %p357 = pneg %p351
      %p358 = scmp.eq.s32.totalorder %s43, 1
      %p359 = por %p357, %p358
      %p360 = scmp.ne.s32.totalorder %s352, %s355
      %p361 = scmp.eq.s32.totalorder %s43, 0
      %p362 = por %p360, %p361
      %p363 = scmp.ne.s32.totalorder %s352, %s355
      %p364 = scmp.eq.s32.totalorder %s48, 1
      %p365 = por %p363, %p364
      %p366 = scmp.ne.s32.totalorder %s355, %s356
      %p367 = scmp.eq.s32.totalorder %s48, 0
      %p368 = por %p366, %p367
      %p369 = scmp.ne.s32.totalorder %s355, %s356
      %p370 = scmp.eq.s32.totalorder %s49, 1
      %p371 = por %p369, %p370
      %p373 = scmp.ne.s32.totalorder %s356, %s372
      %p374 = scmp.eq.s32.totalorder %s49, 0
      %p375 = por %p373, %p374
      %s377 = sadd.s32 %s376, 1
      %p380 = scmp.eq.s32.totalorder %s43, 1
      %p381 = scmp.ne.s32.totalorder %s376, %s378
      %p382 = scmp.eq.s32.totalorder %s43, 0
      %p383 = por %p381, %p382
      %p384 = scmp.ne.s32.totalorder %s376, %s378
      %p385 = scmp.eq.s32.totalorder %s48, 1
      %p386 = por %p384, %p385
      %p387 = scmp.ne.s32.totalorder %s378, %s379
      %p388 = scmp.eq.s32.totalorder %s48, 0
      %p389 = por %p387, %p388
      %p390 = scmp.ne.s32.totalorder %s378, %s379
      %p391 = scmp.eq.s32.totalorder %s49, 1
      %p392 = por %p390, %p391
      %p394 = scmp.ne.s32.totalorder %s379, %s393
      %p395 = scmp.eq.s32.totalorder %s49, 0
      %p396 = por %p394, %p395
      %s398 = sadd.s32 %s397, 1
      %p401 = scmp.eq.s32.totalorder %s43, 1
      %p402 = scmp.ne.s32.totalorder %s397, %s399
      %p403 = scmp.eq.s32.totalorder %s43, 0
      %p404 = por %p402, %p403
      %p405 = scmp.ne.s32.totalorder %s397, %s399
      %p406 = scmp.eq.s32.totalorder %s48, 1
      %p407 = por %p405, %p406
      %p408 = scmp.ne.s32.totalorder %s399, %s400
      %p409 = scmp.eq.s32.totalorder %s48, 0
      %p410 = por %p408, %p409
      %p411 = scmp.ne.s32.totalorder %s399, %s400
      %p412 = scmp.eq.s32.totalorder %s49, 1
      %p413 = por %p411, %p412
      %p415 = scmp.ne.s32.totalorder %s400, %s414
      %p416 = scmp.eq.s32.totalorder %s49, 0
      %p417 = por %p415, %p416
      %s418 = ssub.s32 %s43, %s50
      %p419 = scmp.eq.s32.totalorder %s418, 0
      %s421 = sadd.s32 %s420, 1
      %s422 = scalar_select %p419, %s420, %s421
      %p425 = pneg %p419
      %p426 = scmp.eq.s32.totalorder %s43, 1
      %p427 = por %p425, %p426
      %p428 = scmp.ne.s32.totalorder %s420, %s423
      %p429 = scmp.eq.s32.totalorder %s43, 0
      %p430 = por %p428, %p429
      %p431 = scmp.ne.s32.totalorder %s420, %s423
      %p432 = scmp.eq.s32.totalorder %s48, 1
      %p433 = por %p431, %p432
      %p434 = scmp.ne.s32.totalorder %s423, %s424
      %p435 = scmp.eq.s32.totalorder %s48, 0
      %p436 = por %p434, %p435
      %p437 = scmp.ne.s32.totalorder %s423, %s424
      %p438 = scmp.eq.s32.totalorder %s49, 1
      %p439 = por %p437, %p438
      %p441 = scmp.ne.s32.totalorder %s424, %s440
      %p442 = scmp.eq.s32.totalorder %s49, 0
      %p443 = por %p441, %p442
      %s445 = sadd.s32 %s444, 1
      %p448 = scmp.eq.s32.totalorder %s43, 1
      %p449 = scmp.ne.s32.totalorder %s444, %s446
      %p450 = scmp.eq.s32.totalorder %s43, 0
      %p451 = por %p449, %p450
      %p452 = scmp.ne.s32.totalorder %s444, %s446
      %p453 = scmp.eq.s32.totalorder %s48, 1
      %p454 = por %p452, %p453
      %p455 = scmp.ne.s32.totalorder %s446, %s447
      %p456 = scmp.eq.s32.totalorder %s48, 0
      %p457 = por %p455, %p456
      %p458 = scmp.ne.s32.totalorder %s446, %s447
      %p459 = scmp.eq.s32.totalorder %s49, 1
      %p460 = por %p458, %p459
      %p462 = scmp.ne.s32.totalorder %s447, %s461
      %p463 = scmp.eq.s32.totalorder %s49, 0
      %p464 = por %p462, %p463
      %s466 = sadd.s32 %s465, 1
      %p469 = scmp.eq.s32.totalorder %s43, 1
      %p470 = scmp.ne.s32.totalorder %s465, %s467
      %p471 = scmp.eq.s32.totalorder %s43, 0
      %p472 = por %p470, %p471
      %p473 = scmp.ne.s32.totalorder %s465, %s467
      %p474 = scmp.eq.s32.totalorder %s48, 1
      %p475 = por %p473, %p474
      %p476 = scmp.ne.s32.totalorder %s467, %s468
      %p477 = scmp.eq.s32.totalorder %s48, 0
      %p478 = por %p476, %p477
      %p479 = scmp.ne.s32.totalorder %s467, %s468
      %p480 = scmp.eq.s32.totalorder %s49, 1
      %p481 = por %p479, %p480
      %p483 = scmp.ne.s32.totalorder %s468, %s482
      %p484 = scmp.eq.s32.totalorder %s49, 0
      %p485 = por %p483, %p484
      %s487 = sadd.s32 %s486, 1
      %p490 = scmp.eq.s32.totalorder %s43, 1
      %p491 = scmp.ne.s32.totalorder %s486, %s488
      %p492 = scmp.eq.s32.totalorder %s43, 0
      %p493 = por %p491, %p492
      %p494 = scmp.ne.s32.totalorder %s486, %s488
      %p495 = scmp.eq.s32.totalorder %s48, 1
      %p496 = por %p494, %p495
      %p497 = scmp.ne.s32.totalorder %s488, %s489
      %p498 = scmp.eq.s32.totalorder %s48, 0
      %p499 = por %p497, %p498
      %p500 = scmp.ne.s32.totalorder %s488, %s489
      %p501 = scmp.eq.s32.totalorder %s49, 1
      %p502 = por %p500, %p501
      %p504 = scmp.ne.s32.totalorder %s489, %s503
      %p505 = scmp.eq.s32.totalorder %s49, 0
      %p506 = por %p504, %p505
      %s507 = ssub.s32 %s43, %s50
      %p508 = scmp.eq.s32.totalorder %s507, 0
      %s510 = sadd.s32 %s509, 1
      %s511 = scalar_select %p508, %s509, %s510
      %p514 = pneg %p508
      %p515 = scmp.eq.s32.totalorder %s43, 1
      %p516 = por %p514, %p515
      %p517 = scmp.ne.s32.totalorder %s509, %s512
      %p518 = scmp.eq.s32.totalorder %s43, 0
      %p519 = por %p517, %p518
      %p520 = scmp.ne.s32.totalorder %s509, %s512
      %p521 = scmp.eq.s32.totalorder %s48, 1
      %p522 = por %p520, %p521
      %p523 = scmp.ne.s32.totalorder %s512, %s513
      %p524 = scmp.eq.s32.totalorder %s48, 0
      %p525 = por %p523, %p524
      %p526 = scmp.ne.s32.totalorder %s512, %s513
      %p527 = scmp.eq.s32.totalorder %s49, 1
      %p528 = por %p526, %p527
      %p530 = scmp.ne.s32.totalorder %s513, %s529
      %p531 = scmp.eq.s32.totalorder %s49, 0
      %p532 = por %p530, %p531
      %p533 = scmp.le.s32.totalorder 1, %s43
      %p534 = scmp.lt.s32.totalorder %s43, 3
      %p535 = pnand %p533, %p534
      %p536 = pneg %p535
      // Predicated region
      $region9: #{tpu_custom_call.1} parent=5 // pred_check
        _
      $region10: #{tpu_custom_call.1} parent=5 // pred_check_branch
        %538 = sbr.rel (%p535) target = $region12
      $region11: #{tpu_custom_call.1} parent=5 // pred_region
        %s539 = ssub.s32 %s43, 1
        // Predicated region
        $region13: #{tpu_custom_call.1} parent=11 // pred_check
          %p540 = pneg %p90
        $region14: #{tpu_custom_call.1} parent=11 // pred_check_branch
          %542 = sbr.rel (%p540) target = $region16
        $region15: #{tpu_custom_call.1} parent=11 // pred_region
          %s544 = ssub.s32 128, 128
          %545 = vsyncadd [#allocation8], %s544
          %s547 = sshll.u32 [#allocation7], 4
          %s548 = int_to_ptr.vmem [resolvable:$true] %s547
          %550 = dma.hbm_to_vmem [thread:$0]  %s2, 128, %s548, [#allocation8]
        $region16: #{tpu_custom_call.1} parent=11 // pred_fallthru
          _
        // Predicated region
        $region17: #{tpu_custom_call.1} parent=11 // pred_check
          %p551 = pneg %p111
        $region18: #{tpu_custom_call.1} parent=11 // pred_check_branch
          %553 = sbr.rel (%p551) target = $region20
        $region19: #{tpu_custom_call.1} parent=11 // pred_region
          _
        $region20: #{tpu_custom_call.1} parent=11 // pred_fallthru
          _
        // Predicated region
        $region21: #{tpu_custom_call.1} parent=11 // pred_check
          %p554 = pneg %p132
        $region22: #{tpu_custom_call.1} parent=11 // pred_check_branch
          %556 = sbr.rel (%p554) target = $region24
        $region23: #{tpu_custom_call.1} parent=11 // pred_region
          %s558 = ssub.s32 32, 32
          %559 = vsyncadd [#allocation8], %s558
          %s560 = sshll.u32 [#allocation9], 4
          %s561 = int_to_ptr.vmem [resolvable:$true] %s560
          %566 = dma.hbm_to_vmem [thread:$0]  %s4, 32, %s561, [#allocation8], 16, 16, 1
        $region24: #{tpu_custom_call.1} parent=11 // pred_fallthru
          _
        // Predicated region
        $region25: #{tpu_custom_call.1} parent=11 // pred_check
          %p567 = pneg %p153
        $region26: #{tpu_custom_call.1} parent=11 // pred_check_branch
          %569 = sbr.rel (%p567) target = $region28
        $region27: #{tpu_custom_call.1} parent=11 // pred_region
          _
        $region28: #{tpu_custom_call.1} parent=11 // pred_fallthru
          _
        // Predicated region
        $region29: #{tpu_custom_call.1} parent=11 // pred_check
          %p570 = pneg %p174
        $region30: #{tpu_custom_call.1} parent=11 // pred_check_branch
          %572 = sbr.rel (%p570) target = $region32
        $region31: #{tpu_custom_call.1} parent=11 // pred_region
          %s574 = ssub.s32 32, 32
          %575 = vsyncadd [#allocation11], %s574
          %s576 = sshll.u32 [#allocation10], 4
          %s577 = int_to_ptr.vmem [resolvable:$true] %s576
          %582 = dma.hbm_to_vmem [thread:$0]  %s6, 32, %s577, [#allocation11], 16, 16, 1
        $region32: #{tpu_custom_call.1} parent=11 // pred_fallthru
          _
        // Predicated region
        $region33: #{tpu_custom_call.1} parent=11 // pred_check
          %p583 = pneg %p195
        $region34: #{tpu_custom_call.1} parent=11 // pred_check_branch
          %585 = sbr.rel (%p583) target = $region36
        $region35: #{tpu_custom_call.1} parent=11 // pred_region
          %s587 = ssub.s32 32, 32
          %588 = vsyncadd [#allocation11], %s587
          %s589 = sshll.u32 [#allocation12], 4
          %s590 = int_to_ptr.vmem [resolvable:$true] %s589
          %595 = dma.hbm_to_vmem [thread:$0]  %s7, 32, %s590, [#allocation11], 16, 16, 1
        $region36: #{tpu_custom_call.1} parent=11 // pred_fallthru
          _
        // Predicated region
        $region37: #{tpu_custom_call.1} parent=11 // pred_check
          %p596 = pneg %p216
        $region38: #{tpu_custom_call.1} parent=11 // pred_check_branch
          %598 = sbr.rel (%p596) target = $region40
        $region39: #{tpu_custom_call.1} parent=11 // pred_region
          %s600 = ssub.s32 32, 32
          %601 = vsyncadd [#allocation14], %s600
          %s602 = sshll.u32 [#allocation13], 4
          %s603 = int_to_ptr.vmem [resolvable:$true] %s602
          %608 = dma.hbm_to_vmem [thread:$0]  %s8, 32, %s603, [#allocation14], 16, 16, 1
        $region40: #{tpu_custom_call.1} parent=11 // pred_fallthru
          _
        // Predicated region
        $region41: #{tpu_custom_call.1} parent=11 // pred_check
          %p609 = pneg %p237
        $region42: #{tpu_custom_call.1} parent=11 // pred_check_branch
          %611 = sbr.rel (%p609) target = $region44
        $region43: #{tpu_custom_call.1} parent=11 // pred_region
          _
        $region44: #{tpu_custom_call.1} parent=11 // pred_fallthru
          _
        // Predicated region
        $region45: #{tpu_custom_call.1} parent=11 // pred_check
          %p612 = pneg %p258
        $region46: #{tpu_custom_call.1} parent=11 // pred_check_branch
          %614 = sbr.rel (%p612) target = $region48
        $region47: #{tpu_custom_call.1} parent=11 // pred_region
          %s616 = ssub.s32 32, 32
          %617 = vsyncadd [#allocation14], %s616
          %s618 = sshll.u32 [#allocation15], 4
          %s619 = int_to_ptr.vmem [resolvable:$true] %s618
          %624 = dma.hbm_to_vmem [thread:$0]  %s10, 32, %s619, [#allocation14], 16, 16, 1
        $region48: #{tpu_custom_call.1} parent=11 // pred_fallthru
          _
        // Predicated region
        $region49: #{tpu_custom_call.1} parent=11 // pred_check
          %p625 = pneg %p279
        $region50: #{tpu_custom_call.1} parent=11 // pred_check_branch
          %627 = sbr.rel (%p625) target = $region52
        $region51: #{tpu_custom_call.1} parent=11 // pred_region
          _
        $region52: #{tpu_custom_call.1} parent=11 // pred_fallthru
          _
        // Predicated region
        $region53: #{tpu_custom_call.1} parent=11 // pred_check
          %p628 = pneg %p300
        $region54: #{tpu_custom_call.1} parent=11 // pred_check_branch
          %630 = sbr.rel (%p628) target = $region56
        $region55: #{tpu_custom_call.1} parent=11 // pred_region
          %s632 = ssub.s32 32, 32
          %633 = vsyncadd [#allocation17], %s632
          %s634 = sshll.u32 [#allocation16], 4
          %s635 = int_to_ptr.vmem [resolvable:$true] %s634
          %640 = dma.hbm_to_vmem [thread:$0]  %s12, 32, %s635, [#allocation17], 16, 16, 1
        $region56: #{tpu_custom_call.1} parent=11 // pred_fallthru
          _
        // Predicated region
        $region57: #{tpu_custom_call.1} parent=11 // pred_check
          %p641 = pneg %p321
        $region58: #{tpu_custom_call.1} parent=11 // pred_check_branch
          %643 = sbr.rel (%p641) target = $region60
        $region59: #{tpu_custom_call.1} parent=11 // pred_region
          %s645 = ssub.s32 32, 32
          %646 = vsyncadd [#allocation17], %s645
          %s647 = sshll.u32 [#allocation18], 4
          %s648 = int_to_ptr.vmem [resolvable:$true] %s647
          %653 = dma.hbm_to_vmem [thread:$0]  %s13, 32, %s648, [#allocation17], 16, 16, 1
        $region60: #{tpu_custom_call.1} parent=11 // pred_fallthru
          _
        // Predicated region
        $region61: #{tpu_custom_call.1} parent=11 // pred_check
          %p654 = pneg %p342
        $region62: #{tpu_custom_call.1} parent=11 // pred_check_branch
          %656 = sbr.rel (%p654) target = $region64
        $region63: #{tpu_custom_call.1} parent=11 // pred_region
          %s658 = ssub.s32 32, 32
          %659 = vsyncadd [#allocation20], %s658
          %s660 = sshll.u32 [#allocation19], 4
          %s661 = int_to_ptr.vmem [resolvable:$true] %s660
          %666 = dma.hbm_to_vmem [thread:$0]  %s14, 32, %s661, [#allocation20], 16, 16, 1
        $region64: #{tpu_custom_call.1} parent=11 // pred_fallthru
          _
        // Predicated region
        $region65: #{tpu_custom_call.1} parent=11 // pred_check
          %p667 = pneg %p389
        $region66: #{tpu_custom_call.1} parent=11 // pred_check_branch
          %669 = sbr.rel (%p667) target = $region68
        $region67: #{tpu_custom_call.1} parent=11 // pred_region
          _
        $region68: #{tpu_custom_call.1} parent=11 // pred_fallthru
          _
        // Predicated region
        $region69: #{tpu_custom_call.1} parent=11 // pred_check
          %p670 = pneg %p410
        $region70: #{tpu_custom_call.1} parent=11 // pred_check_branch
          %672 = sbr.rel (%p670) target = $region72
        $region71: #{tpu_custom_call.1} parent=11 // pred_region
          %s674 = ssub.s32 16, 16
          %675 = vsyncadd [#allocation8], %s674
          %s677 = sshll.u32 [#allocation22], 4
          %s678 = int_to_ptr.vmem [resolvable:$true] %s677
          %680 = dma.hbm_to_vmem [thread:$0]  %s17, 16, %s678, [#allocation8]
        $region72: #{tpu_custom_call.1} parent=11 // pred_fallthru
          _
        // Predicated region
        $region73: #{tpu_custom_call.1} parent=11 // pred_check
          %p681 = pneg %p457
        $region74: #{tpu_custom_call.1} parent=11 // pred_check_branch
          %683 = sbr.rel (%p681) target = $region76
        $region75: #{tpu_custom_call.1} parent=11 // pred_region
          %s685 = ssub.s32 64, 64
          %686 = vsyncadd [#allocation8], %s685
          %s688 = sshll.u32 [#allocation24], 4
          %s689 = int_to_ptr.vmem [resolvable:$true] %s688
          %691 = dma.hbm_to_vmem [thread:$0]  %s19, 64, %s689, [#allocation8]
        $region76: #{tpu_custom_call.1} parent=11 // pred_fallthru
          _
        // Predicated region
        $region77: #{tpu_custom_call.1} parent=11 // pred_check
          %p692 = pneg %p478
        $region78: #{tpu_custom_call.1} parent=11 // pred_check_branch
          %694 = sbr.rel (%p692) target = $region80
        $region79: #{tpu_custom_call.1} parent=11 // pred_region
          _
        $region80: #{tpu_custom_call.1} parent=11 // pred_fallthru
          _
        // Predicated region
        $region81: #{tpu_custom_call.1} parent=11 // pred_check
          %p695 = pneg %p499
        $region82: #{tpu_custom_call.1} parent=11 // pred_check_branch
          %697 = sbr.rel (%p695) target = $region84
        $region83: #{tpu_custom_call.1} parent=11 // pred_region
          _
        $region84: #{tpu_custom_call.1} parent=11 // pred_fallthru
          _
      $region12: #{tpu_custom_call.1} parent=5 // pred_fallthru
        _
      %p698 = scmp.lt.s32.totalorder %s43, 2
      // Predicated region
      $region85: #{tpu_custom_call.1} parent=5 // pred_check
        %p699 = pneg %p698
      $region86: #{tpu_custom_call.1} parent=5 // pred_check_branch
        %701 = sbr.rel (%p699) target = $region88
      $region87: #{tpu_custom_call.1} parent=5 // pred_region
        // Predicated region
        $region89: #{tpu_custom_call.1} parent=87 // pred_check
          %p702 = pneg %p63
        $region90: #{tpu_custom_call.1} parent=87 // pred_check_branch
          %704 = sbr.rel (%p702) target = $region92
        $region91: #{tpu_custom_call.1} parent=87 // pred_region
          %s705 = sand.u32 %s43, 1
          %s706 = scalar_lea.sflag [#allocation5], %s705
          %s707 = sand.u32 %s53, 1
          %s708 = smul.addr %s707, 8
          %s709 = scalar_lea.vmem [#allocation4], %s708
          %s711 = ssub.s32 128, 128
          %712 = vsyncadd %s706, %s711
          %s713 = smul.addr %s43, 128
          %s714 = scalar_lea.hbm %s1, %s713
          %s716 = sshll.u32 %s709, 4
          %s717 = int_to_ptr.vmem [resolvable:$true] %s716
          %719 = dma.hbm_to_vmem [thread:$0]  %s714, 128, %s717, %s706
        $region92: #{tpu_custom_call.1} parent=87 // pred_fallthru
          _
        // Predicated region
        $region93: #{tpu_custom_call.1} parent=87 // pred_check
          %p720 = pneg %p362
        $region94: #{tpu_custom_call.1} parent=87 // pred_check_branch
          %722 = sbr.rel (%p720) target = $region96
        $region95: #{tpu_custom_call.1} parent=87 // pred_region
          %s723 = sand.u32 %s43, 1
          %s724 = scalar_lea.sflag [#allocation5], %s723
          %s725 = sand.u32 %s352, 1
          %s726 = scalar_lea.vmem [#allocation21], %s725
          %s728 = ssub.s32 16, 16
          %729 = vsyncadd %s724, %s728
          %s730 = smul.addr %s43, 16
          %s731 = scalar_lea.hbm %s15, %s730
          %s733 = sshll.u32 %s726, 4
          %s734 = int_to_ptr.vmem [resolvable:$true] %s733
          %736 = dma.hbm_to_vmem [thread:$0]  %s731, 16, %s734, %s724
        $region96: #{tpu_custom_call.1} parent=87 // pred_fallthru
          _
        // Predicated region
        $region97: #{tpu_custom_call.1} parent=87 // pred_check
          %p737 = pneg %p430
        $region98: #{tpu_custom_call.1} parent=87 // pred_check_branch
          %739 = sbr.rel (%p737) target = $region100
        $region99: #{tpu_custom_call.1} parent=87 // pred_region
          %s740 = sand.u32 %s43, 1
          %s741 = scalar_lea.sflag [#allocation5], %s740
          %s742 = sand.u32 %s420, 1
          %s743 = scalar_lea.vmem [#allocation23], %s742
          %s745 = ssub.s32 16, 16
          %746 = vsyncadd %s741, %s745
          %s747 = smul.addr %s43, 16
          %s748 = scalar_lea.hbm %s18, %s747
          %s750 = sshll.u32 %s743, 4
          %s751 = int_to_ptr.vmem [resolvable:$true] %s750
          %753 = dma.hbm_to_vmem [thread:$0]  %s748, 16, %s751, %s741
        $region100: #{tpu_custom_call.1} parent=87 // pred_fallthru
          _
      $region88: #{tpu_custom_call.1} parent=5 // pred_fallthru
        _
      %p754 = scmp.le.s32.totalorder 1, %s43
      %p755 = scmp.lt.s32.totalorder %s43, 3
      %p756 = pnand %p754, %p755
      %p757 = pneg %p756
      // Predicated region
      $region101: #{tpu_custom_call.1} parent=5 // pred_check
        _
      $region102: #{tpu_custom_call.1} parent=5 // pred_check_branch
        %759 = sbr.rel (%p756) target = $region104
      $region103: #{tpu_custom_call.1} parent=5 // pred_region
        %s760 = ssub.s32 %s43, 1
        %s761 = sand.u32 %s48, 1
        %s762 = scalar_lea.sflag [#allocation5], %s761
        %s763 = sand.u32 %s56, 1
        %s764 = smul.addr %s763, 8
        %s765 = scalar_lea.vmem [#allocation4], %s764
        // Predicated region
        $region105: #{tpu_custom_call.1} parent=103 // pred_check
          %p766 = pneg %p69
        $region106: #{tpu_custom_call.1} parent=103 // pred_check_branch
          %768 = sbr.rel (%p766) target = $region108
        $region107: #{tpu_custom_call.1} parent=103 // pred_region
          %769 = dma.done %s762, 128
        $region108: #{tpu_custom_call.1} parent=103 // pred_fallthru
          _
        // Predicated region
        $region109: #{tpu_custom_call.1} parent=103 // pred_check
          %p770 = pneg %p90
        $region110: #{tpu_custom_call.1} parent=103 // pred_check_branch
          %772 = sbr.rel (%p770) target = $region112
        $region111: #{tpu_custom_call.1} parent=103 // pred_region
          %773 = dma.done [#allocation8], 128
        $region112: #{tpu_custom_call.1} parent=103 // pred_fallthru
          _
        // Predicated region
        $region113: #{tpu_custom_call.1} parent=103 // pred_check
          %p774 = pneg %p132
        $region114: #{tpu_custom_call.1} parent=103 // pred_check_branch
          %776 = sbr.rel (%p774) target = $region116
        $region115: #{tpu_custom_call.1} parent=103 // pred_region
          %777 = dma.done [#allocation8], 32
        $region116: #{tpu_custom_call.1} parent=103 // pred_fallthru
          _
        // Predicated region
        $region117: #{tpu_custom_call.1} parent=103 // pred_check
          %p778 = pneg %p174
        $region118: #{tpu_custom_call.1} parent=103 // pred_check_branch
          %780 = sbr.rel (%p778) target = $region120
        $region119: #{tpu_custom_call.1} parent=103 // pred_region
          %781 = dma.done [#allocation11], 32
        $region120: #{tpu_custom_call.1} parent=103 // pred_fallthru
          _
        // Predicated region
        $region121: #{tpu_custom_call.1} parent=103 // pred_check
          %p782 = pneg %p195
        $region122: #{tpu_custom_call.1} parent=103 // pred_check_branch
          %784 = sbr.rel (%p782) target = $region124
        $region123: #{tpu_custom_call.1} parent=103 // pred_region
          %785 = dma.done [#allocation11], 32
        $region124: #{tpu_custom_call.1} parent=103 // pred_fallthru
          _
        // Predicated region
        $region125: #{tpu_custom_call.1} parent=103 // pred_check
          %p786 = pneg %p216
        $region126: #{tpu_custom_call.1} parent=103 // pred_check_branch
          %788 = sbr.rel (%p786) target = $region128
        $region127: #{tpu_custom_call.1} parent=103 // pred_region
          %789 = dma.done [#allocation14], 32
        $region128: #{tpu_custom_call.1} parent=103 // pred_fallthru
          _
        // Predicated region
        $region129: #{tpu_custom_call.1} parent=103 // pred_check
          %p790 = pneg %p258
        $region130: #{tpu_custom_call.1} parent=103 // pred_check_branch
          %792 = sbr.rel (%p790) target = $region132
        $region131: #{tpu_custom_call.1} parent=103 // pred_region
          %793 = dma.done [#allocation14], 32
        $region132: #{tpu_custom_call.1} parent=103 // pred_fallthru
          _
        // Predicated region
        $region133: #{tpu_custom_call.1} parent=103 // pred_check
          %p794 = pneg %p300
        $region134: #{tpu_custom_call.1} parent=103 // pred_check_branch
          %796 = sbr.rel (%p794) target = $region136
        $region135: #{tpu_custom_call.1} parent=103 // pred_region
          %797 = dma.done [#allocation17], 32
        $region136: #{tpu_custom_call.1} parent=103 // pred_fallthru
          _
        // Predicated region
        $region137: #{tpu_custom_call.1} parent=103 // pred_check
          %p798 = pneg %p321
        $region138: #{tpu_custom_call.1} parent=103 // pred_check_branch
          %800 = sbr.rel (%p798) target = $region140
        $region139: #{tpu_custom_call.1} parent=103 // pred_region
          %801 = dma.done [#allocation17], 32
        $region140: #{tpu_custom_call.1} parent=103 // pred_fallthru
          _
        // Predicated region
        $region141: #{tpu_custom_call.1} parent=103 // pred_check
          %p802 = pneg %p342
        $region142: #{tpu_custom_call.1} parent=103 // pred_check_branch
          %804 = sbr.rel (%p802) target = $region144
        $region143: #{tpu_custom_call.1} parent=103 // pred_region
          %805 = dma.done [#allocation20], 32
        $region144: #{tpu_custom_call.1} parent=103 // pred_fallthru
          _
        %s806 = sand.u32 %s48, 1
        %s807 = scalar_lea.sflag [#allocation5], %s806
        %s808 = sand.u32 %s355, 1
        %s809 = scalar_lea.vmem [#allocation21], %s808
        // Predicated region
        $region145: #{tpu_custom_call.1} parent=103 // pred_check
          %p810 = pneg %p368
        $region146: #{tpu_custom_call.1} parent=103 // pred_check_branch
          %812 = sbr.rel (%p810) target = $region148
        $region147: #{tpu_custom_call.1} parent=103 // pred_region
          %813 = dma.done %s807, 16
        $region148: #{tpu_custom_call.1} parent=103 // pred_fallthru
          _
        // Predicated region
        $region149: #{tpu_custom_call.1} parent=103 // pred_check
          %p814 = pneg %p410
        $region150: #{tpu_custom_call.1} parent=103 // pred_check_branch
          %816 = sbr.rel (%p814) target = $region152
        $region151: #{tpu_custom_call.1} parent=103 // pred_region
          %817 = dma.done [#allocation8], 16
        $region152: #{tpu_custom_call.1} parent=103 // pred_fallthru
          _
        %s818 = sand.u32 %s48, 1
        %s819 = scalar_lea.sflag [#allocation5], %s818
        %s820 = sand.u32 %s423, 1
        %s821 = scalar_lea.vmem [#allocation23], %s820
        // Predicated region
        $region153: #{tpu_custom_call.1} parent=103 // pred_check
          %p822 = pneg %p436
        $region154: #{tpu_custom_call.1} parent=103 // pred_check_branch
          %824 = sbr.rel (%p822) target = $region156
        $region155: #{tpu_custom_call.1} parent=103 // pred_region
          %825 = dma.done %s819, 16
        $region156: #{tpu_custom_call.1} parent=103 // pred_fallthru
          _
        // Predicated region
        $region157: #{tpu_custom_call.1} parent=103 // pred_check
          %p826 = pneg %p457
        $region158: #{tpu_custom_call.1} parent=103 // pred_check_branch
          %828 = sbr.rel (%p826) target = $region160
        $region159: #{tpu_custom_call.1} parent=103 // pred_region
          %829 = dma.done [#allocation8], 64
        $region160: #{tpu_custom_call.1} parent=103 // pred_fallthru
          _
        %s830 = sand.u32 %s48, 1
        %s831 = scalar_lea.sflag [#allocation5], %s830
        %s832 = sand.u32 %s56, 1
        %s833 = smul.addr %s832, 8
        %s834 = scalar_lea.vmem [#allocation4], %s833
        %p835 = pneg %p69
        %p836 = pneg %p66
        %p837 = pneg %p90
        %p838 = pneg %p87
        %p839 = pneg %p111
        %p840 = pneg %p108
        %p841 = pneg %p132
        %p842 = pneg %p129
        %p843 = pneg %p153
        %p844 = pneg %p150
        %p845 = pneg %p174
        %p846 = pneg %p171
        %p847 = pneg %p195
        %p848 = pneg %p192
        %p849 = pneg %p216
        %p850 = pneg %p213
        %p851 = pneg %p237
        %p852 = pneg %p234
        %p853 = pneg %p258
        %p854 = pneg %p255
        %p855 = pneg %p279
        %p856 = pneg %p276
        %p857 = pneg %p300
        %p858 = pneg %p297
        %p859 = pneg %p321
        %p860 = pneg %p318
        %p861 = pneg %p342
        %p862 = pneg %p339
        %s863 = sand.u32 %s48, 1
        %s864 = scalar_lea.sflag [#allocation5], %s863
        %s865 = sand.u32 %s355, 1
        %s866 = scalar_lea.vmem [#allocation21], %s865
        %p867 = pneg %p368
        %p868 = pneg %p365
        %p869 = pneg %p389
        %p870 = pneg %p386
        %p871 = pneg %p410
        %p872 = pneg %p407
        %s873 = sand.u32 %s48, 1
        %s874 = scalar_lea.sflag [#allocation5], %s873
        %s875 = sand.u32 %s423, 1
        %s876 = scalar_lea.vmem [#allocation23], %s875
        %p877 = pneg %p436
        %p878 = pneg %p433
        %p879 = pneg %p457
        %p880 = pneg %p454
        %p881 = pneg %p478
        %p882 = pneg %p475
        %p883 = pneg %p499
        %p884 = pneg %p496
        %p885 = pneg %p525
        %p886 = pneg %p522
        %s887 = sand.u32 %s512, 1
        %s888 = scalar_lea.sflag [#allocation6], %s887
        %s889 = sand.u32 %s512, 1
        %s890 = smul.addr %s889, 8
        %s891 = scalar_lea.vmem [#allocation25], %s890
        %s892 = sld [smem:[#allocation3 + %s48]]
        %v893 = vld [vmem:[%s765] sm:$0xff]
        %v894 = vld [vmem:[#allocation7] sm:$0xff]
        %v895 = vadd.f32 %v893, %v894
        %v896 = vlaneseq
        %v897 = vand.u32 %v896, 127
        %v898 = vstv %s892
        %vm899 = vcmp.lt.s32.totalorder %v897, %v898
        %v900 = vld [vmem:[%s3] sm:$0xff]
        %v901 = vld [vmem:[%s3 + $0x8] sm:$0xff]
        %v902 = vld [vmem:[%s3 + $0x10] sm:$0xff]
        %v903 = vld [vmem:[%s3 + $0x18] sm:$0xff]
        %v904 = vld [vmem:[#allocation9] sm:$0x1]
        %v906 = vlaneseq
        %v907 = vshrl.u32 %v906, 7
        %v908 = vsub.s32 0, %v907
        %v909 = vrot.slane %v904, %v908
        %vm911 = vcmask 261120
        %v913 = vsel %vm911, %v895, 0
        %915 = vmatprep.subr.mxu0 0.0
        %916 = vmatpush1.msra.mxu0 0.0
        %917 = vmatprep.subr.mxu0 0.0
        %918 = vmatpush1.msra.mxu0 0.0
        %919 = vmatprep.subr.mxu0 0.0
        %920 = vmatpush1.msra.mxu0 0.0
        %921 = vmatprep.subr.mxu0 0.0
        %922 = vmatpush1.msra.mxu0 0.0
        %923 = vmatprep.subr.mxu0 0.0
        %924 = vmatpush1.msra.mxu0 0.0
        %925 = vmatprep.subr.mxu0 0.0
        %926 = vmatpush1.msra.mxu0 0.0
        %927 = vmatprep.subr.mxu0 0.0
        %928 = vmatpush1.msra.mxu0 0.0
        %929 = vmatprep.subr.mxu0 0.0
        %930 = vmatpush1.msra.mxu0 0.0
        %931 = vmatprep.subr.mxu0 0.0
        %932 = vmatpush1.msra.mxu0 0.0
        %933 = vmatprep.subr.mxu0 0.0
        %934 = vmatpush1.msra.mxu0 0.0
        %935 = vmatprep.subr.mxu0 0.0
        %936 = vmatpush1.msra.mxu0 0.0
        %937 = vmatprep.subr.mxu0 0.0
        %938 = vmatpush1.msra.mxu0 0.0
        %939 = vmatprep.subr.mxu0 0.0
        %940 = vmatpush1.msra.mxu0 %v903
        %941 = vmatprep.subr.mxu0 0.0
        %942 = vmatpush1.msra.mxu0 %v902
        %943 = vmatprep.subr.mxu0 0.0
        %944 = vmatpush1.msra.mxu0 %v901
        %945 = vmatprep.subr.mxu0 0.0
        %946 = vmatpush1.msra.mxu0 %v900
        %947 = vmatprep.subr.mxu0 0.0
        %948 = vmatpush2.msra.mxu0 0.0
        %949 = vmatprep.subr.mxu0 0.0
        %950 = vmatpush2.msra.mxu0 0.0
        %951 = vmatprep.subr.mxu0 0.0
        %952 = vmatpush2.msra.mxu0 0.0
        %953 = vmatprep.subr.mxu0 0.0
        %954 = vmatpush2.msra.mxu0 0.0
        %955 = vmatprep.subr.mxu0 0.0
        %956 = vmatpush2.msra.mxu0 0.0
        %957 = vmatprep.subr.mxu0 0.0
        %958 = vmatpush2.msra.mxu0 0.0
        %959 = vmatprep.subr.mxu0 0.0
        %960 = vmatpush2.msra.mxu0 0.0
        %961 = vmatprep.subr.mxu0 0.0
        %962 = vmatpush2.msra.mxu0 0.0
        %963 = vmatprep.subr.mxu0 0.0
        %964 = vmatpush2.msra.mxu0 0.0
        %965 = vmatprep.subr.mxu0 0.0
        %966 = vmatpush2.msra.mxu0 0.0
        %967 = vmatprep.subr.mxu0 0.0
        %968 = vmatpush2.msra.mxu0 0.0
        %969 = vmatprep.subr.mxu0 0.0
        %970 = vmatpush2.msra.mxu0 0.0
        %971 = vmatprep.subr.mxu0 0.0
        %972 = vmatpush2.msra.mxu0 0.0
        %973 = vmatprep.subr.mxu0 0.0
        %974 = vmatpush2.msra.mxu0 0.0
        %975 = vmatprep.subr.mxu0 0.0
        %976 = vmatpush2.msra.mxu0 0.0
        %977 = vmatprep.subr.mxu0 0.0
        %978 = vmatpush2.msra.mxu0 0.0
        %979 = vmatprep.mubr.f32.mxu0 0.0
        %980 = vmatmul.mubr.f32.gmra.mxu0 %v913
        %v981 = vpop.f32.mrf.mxu0
        %v982 = vadd.f32 %v909, %v981
        %v983 = vpop.f32.mrf.mxu0
        %984 = vdwg.mxu0
        %v985 = vmul.f32 %v982, 0.35355338
        %987 = vrot.lane.b32.xlu0 %v982, 96
        %v988 = vpop.permute.xlu0 %987
        %vm989 = vcmask 64512
        %v991 = vsel %vm989, %v985, 0
        %v993 = vsel %vm989, %v988, 0
        %995 = vmatprep.subr.mxu0 0.0
        %996 = vmatpush1.xpose.msra.mxu0 0.0
        %997 = vmatprep.subr.mxu0 0.0
        %998 = vmatpush1.xpose.msra.mxu0 0.0
        %999 = vmatprep.subr.mxu0 0.0
        %1000 = vmatpush1.xpose.msra.mxu0 0.0
        %1001 = vmatprep.subr.mxu0 0.0
        %1002 = vmatpush1.xpose.msra.mxu0 0.0
        %1003 = vmatprep.subr.mxu0 0.0
        %1004 = vmatpush1.xpose.msra.mxu0 0.0
        %1005 = vmatprep.subr.mxu0 0.0
        %1006 = vmatpush1.xpose.msra.mxu0 0.0
        %1007 = vmatprep.subr.mxu0 0.0
        %1008 = vmatpush1.xpose.msra.mxu0 0.0
        %1009 = vmatprep.subr.mxu0 0.0
        %1010 = vmatpush1.xpose.msra.mxu0 0.0
        %1011 = vmatprep.subr.mxu0 0.0
        %1012 = vmatpush1.xpose.msra.mxu0 0.0
        %1013 = vmatprep.subr.mxu0 0.0
        %1014 = vmatpush1.xpose.msra.mxu0 0.0
        %1015 = vmatprep.subr.mxu0 0.0
        %1016 = vmatpush1.xpose.msra.mxu0 0.0
        %1017 = vmatprep.subr.mxu0 0.0
        %1018 = vmatpush1.xpose.msra.mxu0 0.0
        %1019 = vmatprep.subr.mxu0 0.0
        %1020 = vmatpush1.xpose.msra.mxu0 0.0
        %1021 = vmatprep.subr.mxu0 0.0
        %1022 = vmatpush1.xpose.msra.mxu0 0.0
        %1023 = vmatprep.subr.mxu0 0.0
        %1024 = vmatpush1.xpose.msra.mxu0 0.0
        %1025 = vmatprep.subr.mxu0 0.0
        %1026 = vmatpush1.xpose.msra.mxu0 %v993
        %1027 = vmatprep.subr.mxu0 0.0
        %1028 = vmatpush2.xpose.msra.mxu0 0.0
        %1029 = vmatprep.subr.mxu0 0.0
        %1030 = vmatpush2.xpose.msra.mxu0 0.0
        %1031 = vmatprep.subr.mxu0 0.0
        %1032 = vmatpush2.xpose.msra.mxu0 0.0
        %1033 = vmatprep.subr.mxu0 0.0
        %1034 = vmatpush2.xpose.msra.mxu0 0.0
        %1035 = vmatprep.subr.mxu0 0.0
        %1036 = vmatpush2.xpose.msra.mxu0 0.0
        %1037 = vmatprep.subr.mxu0 0.0
        %1038 = vmatpush2.xpose.msra.mxu0 0.0
        %1039 = vmatprep.subr.mxu0 0.0
        %1040 = vmatpush2.xpose.msra.mxu0 0.0
        %1041 = vmatprep.subr.mxu0 0.0
        %1042 = vmatpush2.xpose.msra.mxu0 0.0
        %1043 = vmatprep.subr.mxu0 0.0
        %1044 = vmatpush2.xpose.msra.mxu0 0.0
        %1045 = vmatprep.subr.mxu0 0.0
        %1046 = vmatpush2.xpose.msra.mxu0 0.0
        %1047 = vmatprep.subr.mxu0 0.0
        %1048 = vmatpush2.xpose.msra.mxu0 0.0
        %1049 = vmatprep.subr.mxu0 0.0
        %1050 = vmatpush2.xpose.msra.mxu0 0.0
        %1051 = vmatprep.subr.mxu0 0.0
        %1052 = vmatpush2.xpose.msra.mxu0 0.0
        %1053 = vmatprep.subr.mxu0 0.0
        %1054 = vmatpush2.xpose.msra.mxu0 0.0
        %1055 = vmatprep.subr.mxu0 0.0
        %1056 = vmatpush2.xpose.msra.mxu0 0.0
        %1057 = vmatprep.subr.mxu0 0.0
        %1058 = vmatpush2.xpose.msra.mxu0 0.0
        %1059 = vmatprep.mubr.f32.mxu0 0.0
        %1060 = vmatmul.mubr.f32.gmra.mxu0 %v991
        %v1061 = vpop.f32.mrf.mxu0
        %v1062 = vadd.f32 0.0, %v1061
        %v1063 = vpop.f32.mrf.mxu0
        %1064 = vdwg.mxu0
        %v1065 = vsel %vm899, %v1062, -1e+30
        %v1066 = vsel %vm989, %v1065, -inf
        %1067 = vmax.xlane.f32.xlu0 %v1066
        %v1068 = vpop.xlane.xlu0 %1067
        %v1069 = vsub.f32 %v1065, %v1068
        %v1070 = vmul.f32 %v1069, 1.442695
        %v1071 = vpow.pop %v1070
        %v1072 = vsel %vm989, %v1071, 0.0
        %1073 = vadd.xlane.f32.xlu0 %v1072
        %v1074 = vpop.xlane.xlu0 %1073
        %v1075 = vrcp.pop %v1074
        %v1076 = vmul.f32 %v1071, %v1075
        %1077 = vrot.lane.b32.xlu0 %v982, 64
        %v1078 = vpop.permute.xlu0 %1077
        %v1081 = vsel %vm989, %v1076, 0
        %1083 = vmatprep.subr.mxu0 0.0
        %1084 = vmatpush1.msra.mxu0 0.0
        %1085 = vmatprep.subr.mxu0 0.0
        %1086 = vmatpush1.msra.mxu0 0.0
        %1087 = vmatprep.subr.mxu0 0.0
        %1088 = vmatpush1.msra.mxu0 0.0
        %1089 = vmatprep.subr.mxu0 0.0
        %1090 = vmatpush1.msra.mxu0 0.0
        %1091 = vmatprep.subr.mxu0 0.0
        %1092 = vmatpush1.msra.mxu0 0.0
        %1093 = vmatprep.subr.mxu0 0.0
        %1094 = vmatpush1.msra.mxu0 0.0
        %1095 = vmatprep.subr.mxu0 0.0
        %1096 = vmatpush1.msra.mxu0 0.0
        %1097 = vmatprep.subr.mxu0 0.0
        %1098 = vmatpush1.msra.mxu0 0.0
        %1099 = vmatprep.subr.mxu0 0.0
        %1100 = vmatpush1.msra.mxu0 0.0
        %1101 = vmatprep.subr.mxu0 0.0
        %1102 = vmatpush1.msra.mxu0 0.0
        %1103 = vmatprep.subr.mxu0 0.0
        %1104 = vmatpush1.msra.mxu0 0.0
        %1105 = vmatprep.subr.mxu0 0.0
        %1106 = vmatpush1.msra.mxu0 0.0
        %1107 = vmatprep.subr.mxu0 0.0
        %1108 = vmatpush1.msra.mxu0 0.0
        %1109 = vmatprep.subr.mxu0 0.0
        %1110 = vmatpush1.msra.mxu0 0.0
        %1111 = vmatprep.subr.mxu0 0.0
        %1112 = vmatpush1.msra.mxu0 0.0
        %1113 = vmatprep.subr.mxu0 0.0
        %1114 = vmatpush1.msra.mxu0 %v1078
        %1115 = vmatprep.subr.mxu0 0.0
        %1116 = vmatpush2.msra.mxu0 0.0
        %1117 = vmatprep.subr.mxu0 0.0
        %1118 = vmatpush2.msra.mxu0 0.0
        %1119 = vmatprep.subr.mxu0 0.0
        %1120 = vmatpush2.msra.mxu0 0.0
        %1121 = vmatprep.subr.mxu0 0.0
        %1122 = vmatpush2.msra.mxu0 0.0
        %1123 = vmatprep.subr.mxu0 0.0
        %1124 = vmatpush2.msra.mxu0 0.0
        %1125 = vmatprep.subr.mxu0 0.0
        %1126 = vmatpush2.msra.mxu0 0.0
        %1127 = vmatprep.subr.mxu0 0.0
        %1128 = vmatpush2.msra.mxu0 0.0
        %1129 = vmatprep.subr.mxu0 0.0
        %1130 = vmatpush2.msra.mxu0 0.0
        %1131 = vmatprep.subr.mxu0 0.0
        %1132 = vmatpush2.msra.mxu0 0.0
        %1133 = vmatprep.subr.mxu0 0.0
        %1134 = vmatpush2.msra.mxu0 0.0
        %1135 = vmatprep.subr.mxu0 0.0
        %1136 = vmatpush2.msra.mxu0 0.0
        %1137 = vmatprep.subr.mxu0 0.0
        %1138 = vmatpush2.msra.mxu0 0.0
        %1139 = vmatprep.subr.mxu0 0.0
        %1140 = vmatpush2.msra.mxu0 0.0
        %1141 = vmatprep.subr.mxu0 0.0
        %1142 = vmatpush2.msra.mxu0 0.0
        %1143 = vmatprep.subr.mxu0 0.0
        %1144 = vmatpush2.msra.mxu0 0.0
        %1145 = vmatprep.subr.mxu0 0.0
        %1146 = vmatpush2.msra.mxu0 0.0
        %1147 = vmatprep.mubr.f32.mxu0 0.0
        %1148 = vmatmul.mubr.f32.gmra.mxu0 %v1081
        %v1149 = vpop.f32.mrf.mxu0
        %v1150 = vadd.f32 0.0, %v1149
        %v1151 = vpop.f32.mrf.mxu0
        %1152 = vdwg.mxu0
        %1153 = vrot.lane.b32.xlu0 %v985, 120
        %v1154 = vpop.permute.xlu0 %1153
        %1155 = vrot.lane.b32.xlu0 %v982, 88
        %v1156 = vpop.permute.xlu0 %1155
        %v1157 = vsel %vm989, %v1154, 0
        %v1159 = vsel %vm989, %v1156, 0
        %1161 = vmatprep.subr.mxu0 0.0
        %1162 = vmatpush1.xpose.msra.mxu0 0.0
        %1163 = vmatprep.subr.mxu0 0.0
        %1164 = vmatpush1.xpose.msra.mxu0 0.0
        %1165 = vmatprep.subr.mxu0 0.0
        %1166 = vmatpush1.xpose.msra.mxu0 0.0
        %1167 = vmatprep.subr.mxu0 0.0
        %1168 = vmatpush1.xpose.msra.mxu0 0.0
        %1169 = vmatprep.subr.mxu0 0.0
        %1170 = vmatpush1.xpose.msra.mxu0 0.0
        %1171 = vmatprep.subr.mxu0 0.0
        %1172 = vmatpush1.xpose.msra.mxu0 0.0
        %1173 = vmatprep.subr.mxu0 0.0
        %1174 = vmatpush1.xpose.msra.mxu0 0.0
        %1175 = vmatprep.subr.mxu0 0.0
        %1176 = vmatpush1.xpose.msra.mxu0 0.0
        %1177 = vmatprep.subr.mxu0 0.0
        %1178 = vmatpush1.xpose.msra.mxu0 0.0
        %1179 = vmatprep.subr.mxu0 0.0
        %1180 = vmatpush1.xpose.msra.mxu0 0.0
        %1181 = vmatprep.subr.mxu0 0.0
        %1182 = vmatpush1.xpose.msra.mxu0 0.0
        %1183 = vmatprep.subr.mxu0 0.0
        %1184 = vmatpush1.xpose.msra.mxu0 0.0
        %1185 = vmatprep.subr.mxu0 0.0
        %1186 = vmatpush1.xpose.msra.mxu0 0.0
        %1187 = vmatprep.subr.mxu0 0.0
        %1188 = vmatpush1.xpose.msra.mxu0 0.0
        %1189 = vmatprep.subr.mxu0 0.0
        %1190 = vmatpush1.xpose.msra.mxu0 0.0
        %1191 = vmatprep.subr.mxu0 0.0
        %1192 = vmatpush1.xpose.msra.mxu0 %v1159
        %1193 = vmatprep.subr.mxu0 0.0
        %1194 = vmatpush2.xpose.msra.mxu0 0.0
        %1195 = vmatprep.subr.mxu0 0.0
        %1196 = vmatpush2.xpose.msra.mxu0 0.0
        %1197 = vmatprep.subr.mxu0 0.0
        %1198 = vmatpush2.xpose.msra.mxu0 0.0
        %1199 = vmatprep.subr.mxu0 0.0
        %1200 = vmatpush2.xpose.msra.mxu0 0.0
        %1201 = vmatprep.subr.mxu0 0.0
        %1202 = vmatpush2.xpose.msra.mxu0 0.0
        %1203 = vmatprep.subr.mxu0 0.0
        %1204 = vmatpush2.xpose.msra.mxu0 0.0
        %1205 = vmatprep.subr.mxu0 0.0
        %1206 = vmatpush2.xpose.msra.mxu0 0.0
        %1207 = vmatprep.subr.mxu0 0.0
        %1208 = vmatpush2.xpose.msra.mxu0 0.0
        %1209 = vmatprep.subr.mxu0 0.0
        %1210 = vmatpush2.xpose.msra.mxu0 0.0
        %1211 = vmatprep.subr.mxu0 0.0
        %1212 = vmatpush2.xpose.msra.mxu0 0.0
        %1213 = vmatprep.subr.mxu0 0.0
        %1214 = vmatpush2.xpose.msra.mxu0 0.0
        %1215 = vmatprep.subr.mxu0 0.0
        %1216 = vmatpush2.xpose.msra.mxu0 0.0
        %1217 = vmatprep.subr.mxu0 0.0
        %1218 = vmatpush2.xpose.msra.mxu0 0.0
        %1219 = vmatprep.subr.mxu0 0.0
        %1220 = vmatpush2.xpose.msra.mxu0 0.0
        %1221 = vmatprep.subr.mxu0 0.0
        %1222 = vmatpush2.xpose.msra.mxu0 0.0
        %1223 = vmatprep.subr.mxu0 0.0
        %1224 = vmatpush2.xpose.msra.mxu0 0.0
        %1225 = vmatprep.mubr.f32.mxu0 0.0
        %1226 = vmatmul.mubr.f32.gmra.mxu0 %v1157
        %v1227 = vpop.f32.mrf.mxu0
        %v1228 = vadd.f32 0.0, %v1227
        %v1229 = vpop.f32.mrf.mxu0
        %1230 = vdwg.mxu0
        %v1231 = vsel %vm899, %v1228, -1e+30
        %v1232 = vsel %vm989, %v1231, -inf
        %1233 = vmax.xlane.f32.xlu0 %v1232
        %v1234 = vpop.xlane.xlu0 %1233
        %v1235 = vsub.f32 %v1231, %v1234
        %v1236 = vmul.f32 %v1235, 1.442695
        %v1237 = vpow.pop %v1236
        %v1238 = vsel %vm989, %v1237, 0.0
        %1239 = vadd.xlane.f32.xlu0 %v1238
        %v1240 = vpop.xlane.xlu0 %1239
        %v1241 = vrcp.pop %v1240
        %v1242 = vmul.f32 %v1237, %v1241
        %1243 = vrot.lane.b32.xlu0 %v982, 56
        %v1244 = vpop.permute.xlu0 %1243
        %v1247 = vsel %vm989, %v1242, 0
        %1249 = vmatprep.subr.mxu0 0.0
        %1250 = vmatpush1.msra.mxu0 0.0
        %1251 = vmatprep.subr.mxu0 0.0
        %1252 = vmatpush1.msra.mxu0 0.0
        %1253 = vmatprep.subr.mxu0 0.0
        %1254 = vmatpush1.msra.mxu0 0.0
        %1255 = vmatprep.subr.mxu0 0.0
        %1256 = vmatpush1.msra.mxu0 0.0
        %1257 = vmatprep.subr.mxu0 0.0
        %1258 = vmatpush1.msra.mxu0 0.0
        %1259 = vmatprep.subr.mxu0 0.0
        %1260 = vmatpush1.msra.mxu0 0.0
        %1261 = vmatprep.subr.mxu0 0.0
        %1262 = vmatpush1.msra.mxu0 0.0
        %1263 = vmatprep.subr.mxu0 0.0
        %1264 = vmatpush1.msra.mxu0 0.0
        %1265 = vmatprep.subr.mxu0 0.0
        %1266 = vmatpush1.msra.mxu0 0.0
        %1267 = vmatprep.subr.mxu0 0.0
        %1268 = vmatpush1.msra.mxu0 0.0
        %1269 = vmatprep.subr.mxu0 0.0
        %1270 = vmatpush1.msra.mxu0 0.0
        %1271 = vmatprep.subr.mxu0 0.0
        %1272 = vmatpush1.msra.mxu0 0.0
        %1273 = vmatprep.subr.mxu0 0.0
        %1274 = vmatpush1.msra.mxu0 0.0
        %1275 = vmatprep.subr.mxu0 0.0
        %1276 = vmatpush1.msra.mxu0 0.0
        %1277 = vmatprep.subr.mxu0 0.0
        %1278 = vmatpush1.msra.mxu0 0.0
        %1279 = vmatprep.subr.mxu0 0.0
        %1280 = vmatpush1.msra.mxu0 %v1244
        %1281 = vmatprep.subr.mxu0 0.0
        %1282 = vmatpush2.msra.mxu0 0.0
        %1283 = vmatprep.subr.mxu0 0.0
        %1284 = vmatpush2.msra.mxu0 0.0
        %1285 = vmatprep.subr.mxu0 0.0
        %1286 = vmatpush2.msra.mxu0 0.0
        %1287 = vmatprep.subr.mxu0 0.0
        %1288 = vmatpush2.msra.mxu0 0.0
        %1289 = vmatprep.subr.mxu0 0.0
        %1290 = vmatpush2.msra.mxu0 0.0
        %1291 = vmatprep.subr.mxu0 0.0
        %1292 = vmatpush2.msra.mxu0 0.0
        %1293 = vmatprep.subr.mxu0 0.0
        %1294 = vmatpush2.msra.mxu0 0.0
        %1295 = vmatprep.subr.mxu0 0.0
        %1296 = vmatpush2.msra.mxu0 0.0
        %1297 = vmatprep.subr.mxu0 0.0
        %1298 = vmatpush2.msra.mxu0 0.0
        %1299 = vmatprep.subr.mxu0 0.0
        %1300 = vmatpush2.msra.mxu0 0.0
        %1301 = vmatprep.subr.mxu0 0.0
        %1302 = vmatpush2.msra.mxu0 0.0
        %1303 = vmatprep.subr.mxu0 0.0
        %1304 = vmatpush2.msra.mxu0 0.0
        %1305 = vmatprep.subr.mxu0 0.0
        %1306 = vmatpush2.msra.mxu0 0.0
        %1307 = vmatprep.subr.mxu0 0.0
        %1308 = vmatpush2.msra.mxu0 0.0
        %1309 = vmatprep.subr.mxu0 0.0
        %1310 = vmatpush2.msra.mxu0 0.0
        %1311 = vmatprep.subr.mxu0 0.0
        %1312 = vmatpush2.msra.mxu0 0.0
        %1313 = vmatprep.mubr.f32.mxu0 0.0
        %1314 = vmatmul.mubr.f32.gmra.mxu0 %v1247
        %v1315 = vpop.f32.mrf.mxu0
        %v1316 = vadd.f32 0.0, %v1315
        %v1317 = vpop.f32.mrf.mxu0
        %1318 = vdwg.mxu0
        %1319 = vrot.lane.b32.xlu0 %v985, 112
        %v1320 = vpop.permute.xlu0 %1319
        %1321 = vrot.lane.b32.xlu0 %v982, 80
        %v1322 = vpop.permute.xlu0 %1321
        %v1323 = vsel %vm989, %v1320, 0
        %v1325 = vsel %vm989, %v1322, 0
        %1327 = vmatprep.subr.mxu0 0.0
        %1328 = vmatpush1.xpose.msra.mxu0 0.0
        %1329 = vmatprep.subr.mxu0 0.0
        %1330 = vmatpush1.xpose.msra.mxu0 0.0
        %1331 = vmatprep.subr.mxu0 0.0
        %1332 = vmatpush1.xpose.msra.mxu0 0.0
        %1333 = vmatprep.subr.mxu0 0.0
        %1334 = vmatpush1.xpose.msra.mxu0 0.0
        %1335 = vmatprep.subr.mxu0 0.0
        %1336 = vmatpush1.xpose.msra.mxu0 0.0
        %1337 = vmatprep.subr.mxu0 0.0
        %1338 = vmatpush1.xpose.msra.mxu0 0.0
        %1339 = vmatprep.subr.mxu0 0.0
        %1340 = vmatpush1.xpose.msra.mxu0 0.0
        %1341 = vmatprep.subr.mxu0 0.0
        %1342 = vmatpush1.xpose.msra.mxu0 0.0
        %1343 = vmatprep.subr.mxu0 0.0
        %1344 = vmatpush1.xpose.msra.mxu0 0.0
        %1345 = vmatprep.subr.mxu0 0.0
        %1346 = vmatpush1.xpose.msra.mxu0 0.0
        %1347 = vmatprep.subr.mxu0 0.0
        %1348 = vmatpush1.xpose.msra.mxu0 0.0
        %1349 = vmatprep.subr.mxu0 0.0
        %1350 = vmatpush1.xpose.msra.mxu0 0.0
        %1351 = vmatprep.subr.mxu0 0.0
        %1352 = vmatpush1.xpose.msra.mxu0 0.0
        %1353 = vmatprep.subr.mxu0 0.0
        %1354 = vmatpush1.xpose.msra.mxu0 0.0
        %1355 = vmatprep.subr.mxu0 0.0
        %1356 = vmatpush1.xpose.msra.mxu0 0.0
        %1357 = vmatprep.subr.mxu0 0.0
        %1358 = vmatpush1.xpose.msra.mxu0 %v1325
        %1359 = vmatprep.subr.mxu0 0.0
        %1360 = vmatpush2.xpose.msra.mxu0 0.0
        %1361 = vmatprep.subr.mxu0 0.0
        %1362 = vmatpush2.xpose.msra.mxu0 0.0
        %1363 = vmatprep.subr.mxu0 0.0
        %1364 = vmatpush2.xpose.msra.mxu0 0.0
        %1365 = vmatprep.subr.mxu0 0.0
        %1366 = vmatpush2.xpose.msra.mxu0 0.0
        %1367 = vmatprep.subr.mxu0 0.0
        %1368 = vmatpush2.xpose.msra.mxu0 0.0
        %1369 = vmatprep.subr.mxu0 0.0
        %1370 = vmatpush2.xpose.msra.mxu0 0.0
        %1371 = vmatprep.subr.mxu0 0.0
        %1372 = vmatpush2.xpose.msra.mxu0 0.0
        %1373 = vmatprep.subr.mxu0 0.0
        %1374 = vmatpush2.xpose.msra.mxu0 0.0
        %1375 = vmatprep.subr.mxu0 0.0
        %1376 = vmatpush2.xpose.msra.mxu0 0.0
        %1377 = vmatprep.subr.mxu0 0.0
        %1378 = vmatpush2.xpose.msra.mxu0 0.0
        %1379 = vmatprep.subr.mxu0 0.0
        %1380 = vmatpush2.xpose.msra.mxu0 0.0
        %1381 = vmatprep.subr.mxu0 0.0
        %1382 = vmatpush2.xpose.msra.mxu0 0.0
        %1383 = vmatprep.subr.mxu0 0.0
        %1384 = vmatpush2.xpose.msra.mxu0 0.0
        %1385 = vmatprep.subr.mxu0 0.0
        %1386 = vmatpush2.xpose.msra.mxu0 0.0
        %1387 = vmatprep.subr.mxu0 0.0
        %1388 = vmatpush2.xpose.msra.mxu0 0.0
        %1389 = vmatprep.subr.mxu0 0.0
        %1390 = vmatpush2.xpose.msra.mxu0 0.0
        %1391 = vmatprep.mubr.f32.mxu0 0.0
        %1392 = vmatmul.mubr.f32.gmra.mxu0 %v1323
        %v1393 = vpop.f32.mrf.mxu0
        %v1394 = vadd.f32 0.0, %v1393
        %v1395 = vpop.f32.mrf.mxu0
        %1396 = vdwg.mxu0
        %v1397 = vsel %vm899, %v1394, -1e+30
        %v1398 = vsel %vm989, %v1397, -inf
        %1399 = vmax.xlane.f32.xlu0 %v1398
        %v1400 = vpop.xlane.xlu0 %1399
        %v1401 = vsub.f32 %v1397, %v1400
        %v1402 = vmul.f32 %v1401, 1.442695
        %v1403 = vpow.pop %v1402
        %v1404 = vsel %vm989, %v1403, 0.0
        %1405 = vadd.xlane.f32.xlu0 %v1404
        %v1406 = vpop.xlane.xlu0 %1405
        %v1407 = vrcp.pop %v1406
        %v1408 = vmul.f32 %v1403, %v1407
        %1409 = vrot.lane.b32.xlu0 %v982, 48
        %v1410 = vpop.permute.xlu0 %1409
        %v1413 = vsel %vm989, %v1408, 0
        %1415 = vmatprep.subr.mxu0 0.0
        %1416 = vmatpush1.msra.mxu0 0.0
        %1417 = vmatprep.subr.mxu0 0.0
        %1418 = vmatpush1.msra.mxu0 0.0
        %1419 = vmatprep.subr.mxu0 0.0
        %1420 = vmatpush1.msra.mxu0 0.0
        %1421 = vmatprep.subr.mxu0 0.0
        %1422 = vmatpush1.msra.mxu0 0.0
        %1423 = vmatprep.subr.mxu0 0.0
        %1424 = vmatpush1.msra.mxu0 0.0
        %1425 = vmatprep.subr.mxu0 0.0
        %1426 = vmatpush1.msra.mxu0 0.0
        %1427 = vmatprep.subr.mxu0 0.0
        %1428 = vmatpush1.msra.mxu0 0.0
        %1429 = vmatprep.subr.mxu0 0.0
        %1430 = vmatpush1.msra.mxu0 0.0
        %1431 = vmatprep.subr.mxu0 0.0
        %1432 = vmatpush1.msra.mxu0 0.0
        %1433 = vmatprep.subr.mxu0 0.0
        %1434 = vmatpush1.msra.mxu0 0.0
        %1435 = vmatprep.subr.mxu0 0.0
        %1436 = vmatpush1.msra.mxu0 0.0
        %1437 = vmatprep.subr.mxu0 0.0
        %1438 = vmatpush1.msra.mxu0 0.0
        %1439 = vmatprep.subr.mxu0 0.0
        %1440 = vmatpush1.msra.mxu0 0.0
        %1441 = vmatprep.subr.mxu0 0.0
        %1442 = vmatpush1.msra.mxu0 0.0
        %1443 = vmatprep.subr.mxu0 0.0
        %1444 = vmatpush1.msra.mxu0 0.0
        %1445 = vmatprep.subr.mxu0 0.0
        %1446 = vmatpush1.msra.mxu0 %v1410
        %1447 = vmatprep.subr.mxu0 0.0
        %1448 = vmatpush2.msra.mxu0 0.0
        %1449 = vmatprep.subr.mxu0 0.0
        %1450 = vmatpush2.msra.mxu0 0.0
        %1451 = vmatprep.subr.mxu0 0.0
        %1452 = vmatpush2.msra.mxu0 0.0
        %1453 = vmatprep.subr.mxu0 0.0
        %1454 = vmatpush2.msra.mxu0 0.0
        %1455 = vmatprep.subr.mxu0 0.0
        %1456 = vmatpush2.msra.mxu0 0.0
        %1457 = vmatprep.subr.mxu0 0.0
        %1458 = vmatpush2.msra.mxu0 0.0
        %1459 = vmatprep.subr.mxu0 0.0
        %1460 = vmatpush2.msra.mxu0 0.0
        %1461 = vmatprep.subr.mxu0 0.0
        %1462 = vmatpush2.msra.mxu0 0.0
        %1463 = vmatprep.subr.mxu0 0.0
        %1464 = vmatpush2.msra.mxu0 0.0
        %1465 = vmatprep.subr.mxu0 0.0
        %1466 = vmatpush2.msra.mxu0 0.0
        %1467 = vmatprep.subr.mxu0 0.0
        %1468 = vmatpush2.msra.mxu0 0.0
        %1469 = vmatprep.subr.mxu0 0.0
        %1470 = vmatpush2.msra.mxu0 0.0
        %1471 = vmatprep.subr.mxu0 0.0
        %1472 = vmatpush2.msra.mxu0 0.0
        %1473 = vmatprep.subr.mxu0 0.0
        %1474 = vmatpush2.msra.mxu0 0.0
        %1475 = vmatprep.subr.mxu0 0.0
        %1476 = vmatpush2.msra.mxu0 0.0
        %1477 = vmatprep.subr.mxu0 0.0
        %1478 = vmatpush2.msra.mxu0 0.0
        %1479 = vmatprep.mubr.f32.mxu0 0.0
        %1480 = vmatmul.mubr.f32.gmra.mxu0 %v1413
        %v1481 = vpop.f32.mrf.mxu0
        %v1482 = vadd.f32 0.0, %v1481
        %v1483 = vpop.f32.mrf.mxu0
        %1484 = vdwg.mxu0
        %1485 = vrot.lane.b32.xlu0 %v985, 104
        %v1486 = vpop.permute.xlu0 %1485
        %1487 = vrot.lane.b32.xlu0 %v982, 72
        %v1488 = vpop.permute.xlu0 %1487
        %v1489 = vsel %vm989, %v1486, 0
        %v1491 = vsel %vm989, %v1488, 0
        %1493 = vmatprep.subr.mxu0 0.0
        %1494 = vmatpush1.xpose.msra.mxu0 0.0
        %1495 = vmatprep.subr.mxu0 0.0
        %1496 = vmatpush1.xpose.msra.mxu0 0.0
        %1497 = vmatprep.subr.mxu0 0.0
        %1498 = vmatpush1.xpose.msra.mxu0 0.0
        %1499 = vmatprep.subr.mxu0 0.0
        %1500 = vmatpush1.xpose.msra.mxu0 0.0
        %1501 = vmatprep.subr.mxu0 0.0
        %1502 = vmatpush1.xpose.msra.mxu0 0.0
        %1503 = vmatprep.subr.mxu0 0.0
        %1504 = vmatpush1.xpose.msra.mxu0 0.0
        %1505 = vmatprep.subr.mxu0 0.0
        %1506 = vmatpush1.xpose.msra.mxu0 0.0
        %1507 = vmatprep.subr.mxu0 0.0
        %1508 = vmatpush1.xpose.msra.mxu0 0.0
        %1509 = vmatprep.subr.mxu0 0.0
        %1510 = vmatpush1.xpose.msra.mxu0 0.0
        %1511 = vmatprep.subr.mxu0 0.0
        %1512 = vmatpush1.xpose.msra.mxu0 0.0
        %1513 = vmatprep.subr.mxu0 0.0
        %1514 = vmatpush1.xpose.msra.mxu0 0.0
        %1515 = vmatprep.subr.mxu0 0.0
        %1516 = vmatpush1.xpose.msra.mxu0 0.0
        %1517 = vmatprep.subr.mxu0 0.0
        %1518 = vmatpush1.xpose.msra.mxu0 0.0
        %1519 = vmatprep.subr.mxu0 0.0
        %1520 = vmatpush1.xpose.msra.mxu0 0.0
        %1521 = vmatprep.subr.mxu0 0.0
        %1522 = vmatpush1.xpose.msra.mxu0 0.0
        %1523 = vmatprep.subr.mxu0 0.0
        %1524 = vmatpush1.xpose.msra.mxu0 %v1491
        %1525 = vmatprep.subr.mxu0 0.0
        %1526 = vmatpush2.xpose.msra.mxu0 0.0
        %1527 = vmatprep.subr.mxu0 0.0
        %1528 = vmatpush2.xpose.msra.mxu0 0.0
        %1529 = vmatprep.subr.mxu0 0.0
        %1530 = vmatpush2.xpose.msra.mxu0 0.0
        %1531 = vmatprep.subr.mxu0 0.0
        %1532 = vmatpush2.xpose.msra.mxu0 0.0
        %1533 = vmatprep.subr.mxu0 0.0
        %1534 = vmatpush2.xpose.msra.mxu0 0.0
        %1535 = vmatprep.subr.mxu0 0.0
        %1536 = vmatpush2.xpose.msra.mxu0 0.0
        %1537 = vmatprep.subr.mxu0 0.0
        %1538 = vmatpush2.xpose.msra.mxu0 0.0
        %1539 = vmatprep.subr.mxu0 0.0
        %1540 = vmatpush2.xpose.msra.mxu0 0.0
        %1541 = vmatprep.subr.mxu0 0.0
        %1542 = vmatpush2.xpose.msra.mxu0 0.0
        %1543 = vmatprep.subr.mxu0 0.0
        %1544 = vmatpush2.xpose.msra.mxu0 0.0
        %1545 = vmatprep.subr.mxu0 0.0
        %1546 = vmatpush2.xpose.msra.mxu0 0.0
        %1547 = vmatprep.subr.mxu0 0.0
        %1548 = vmatpush2.xpose.msra.mxu0 0.0
        %1549 = vmatprep.subr.mxu0 0.0
        %1550 = vmatpush2.xpose.msra.mxu0 0.0
        %1551 = vmatprep.subr.mxu0 0.0
        %1552 = vmatpush2.xpose.msra.mxu0 0.0
        %1553 = vmatprep.subr.mxu0 0.0
        %1554 = vmatpush2.xpose.msra.mxu0 0.0
        %1555 = vmatprep.subr.mxu0 0.0
        %1556 = vmatpush2.xpose.msra.mxu0 0.0
        %1557 = vmatprep.mubr.f32.mxu0 0.0
        %1558 = vmatmul.mubr.f32.gmra.mxu0 %v1489
        %v1559 = vpop.f32.mrf.mxu0
        %v1560 = vadd.f32 0.0, %v1559
        %v1561 = vpop.f32.mrf.mxu0
        %1562 = vdwg.mxu0
        %v1563 = vsel %vm899, %v1560, -1e+30
        %v1564 = vsel %vm989, %v1563, -inf
        %1565 = vmax.xlane.f32.xlu0 %v1564
        %v1566 = vpop.xlane.xlu0 %1565
        %v1567 = vsub.f32 %v1563, %v1566
        %v1568 = vmul.f32 %v1567, 1.442695
        %v1569 = vpow.pop %v1568
        %v1570 = vsel %vm989, %v1569, 0.0
        %1571 = vadd.xlane.f32.xlu0 %v1570
        %v1572 = vpop.xlane.xlu0 %1571
        %v1573 = vrcp.pop %v1572
        %v1574 = vmul.f32 %v1569, %v1573
        %1575 = vrot.lane.b32.xlu0 %v982, 40
        %v1576 = vpop.permute.xlu0 %1575
        %v1579 = vsel %vm989, %v1574, 0
        %1581 = vmatprep.subr.mxu0 0.0
        %1582 = vmatpush1.msra.mxu0 0.0
        %1583 = vmatprep.subr.mxu0 0.0
        %1584 = vmatpush1.msra.mxu0 0.0
        %1585 = vmatprep.subr.mxu0 0.0
        %1586 = vmatpush1.msra.mxu0 0.0
        %1587 = vmatprep.subr.mxu0 0.0
        %1588 = vmatpush1.msra.mxu0 0.0
        %1589 = vmatprep.subr.mxu0 0.0
        %1590 = vmatpush1.msra.mxu0 0.0
        %1591 = vmatprep.subr.mxu0 0.0
        %1592 = vmatpush1.msra.mxu0 0.0
        %1593 = vmatprep.subr.mxu0 0.0
        %1594 = vmatpush1.msra.mxu0 0.0
        %1595 = vmatprep.subr.mxu0 0.0
        %1596 = vmatpush1.msra.mxu0 0.0
        %1597 = vmatprep.subr.mxu0 0.0
        %1598 = vmatpush1.msra.mxu0 0.0
        %1599 = vmatprep.subr.mxu0 0.0
        %1600 = vmatpush1.msra.mxu0 0.0
        %1601 = vmatprep.subr.mxu0 0.0
        %1602 = vmatpush1.msra.mxu0 0.0
        %1603 = vmatprep.subr.mxu0 0.0
        %1604 = vmatpush1.msra.mxu0 0.0
        %1605 = vmatprep.subr.mxu0 0.0
        %1606 = vmatpush1.msra.mxu0 0.0
        %1607 = vmatprep.subr.mxu0 0.0
        %1608 = vmatpush1.msra.mxu0 0.0
        %1609 = vmatprep.subr.mxu0 0.0
        %1610 = vmatpush1.msra.mxu0 0.0
        %1611 = vmatprep.subr.mxu0 0.0
        %1612 = vmatpush1.msra.mxu0 %v1576
        %1613 = vmatprep.subr.mxu0 0.0
        %1614 = vmatpush2.msra.mxu0 0.0
        %1615 = vmatprep.subr.mxu0 0.0
        %1616 = vmatpush2.msra.mxu0 0.0
        %1617 = vmatprep.subr.mxu0 0.0
        %1618 = vmatpush2.msra.mxu0 0.0
        %1619 = vmatprep.subr.mxu0 0.0
        %1620 = vmatpush2.msra.mxu0 0.0
        %1621 = vmatprep.subr.mxu0 0.0
        %1622 = vmatpush2.msra.mxu0 0.0
        %1623 = vmatprep.subr.mxu0 0.0
        %1624 = vmatpush2.msra.mxu0 0.0
        %1625 = vmatprep.subr.mxu0 0.0
        %1626 = vmatpush2.msra.mxu0 0.0
        %1627 = vmatprep.subr.mxu0 0.0
        %1628 = vmatpush2.msra.mxu0 0.0
        %1629 = vmatprep.subr.mxu0 0.0
        %1630 = vmatpush2.msra.mxu0 0.0
        %1631 = vmatprep.subr.mxu0 0.0
        %1632 = vmatpush2.msra.mxu0 0.0
        %1633 = vmatprep.subr.mxu0 0.0
        %1634 = vmatpush2.msra.mxu0 0.0
        %1635 = vmatprep.subr.mxu0 0.0
        %1636 = vmatpush2.msra.mxu0 0.0
        %1637 = vmatprep.subr.mxu0 0.0
        %1638 = vmatpush2.msra.mxu0 0.0
        %1639 = vmatprep.subr.mxu0 0.0
        %1640 = vmatpush2.msra.mxu0 0.0
        %1641 = vmatprep.subr.mxu0 0.0
        %1642 = vmatpush2.msra.mxu0 0.0
        %1643 = vmatprep.subr.mxu0 0.0
        %1644 = vmatpush2.msra.mxu0 0.0
        %1645 = vmatprep.mubr.f32.mxu0 0.0
        %1646 = vmatmul.mubr.f32.gmra.mxu0 %v1579
        %v1647 = vpop.f32.mrf.mxu0
        %v1648 = vadd.f32 0.0, %v1647
        %v1649 = vpop.f32.mrf.mxu0
        %1650 = vdwg.mxu0
        %1652 = vrot.lane.b32.xlu0 %v1316, 8
        %v1653 = vpop.permute.xlu0 %1652
        %1656 = vrot.lane.b32.xlu0 %v1482, 16
        %v1657 = vpop.permute.xlu0 %1656
        %1660 = vrot.lane.b32.xlu0 %v1648, 24
        %v1661 = vpop.permute.xlu0 %1660
        %v1663 = vsel %vm989, %v1150, %v1653
        %vm1664 = vcmask 130048
        %v1665 = vsel %vm1664, %v1663, %v1657
        %vm1666 = vcmask 195584
        %v1667 = vsel %vm1666, %v1665, %v1661
        %v1668 = vld [vmem:[%s5] sm:$0xff]
        %v1669 = vld [vmem:[%s5 + $0x8] sm:$0xff]
        %v1670 = vld [vmem:[%s5 + $0x10] sm:$0xff]
        %v1671 = vld [vmem:[%s5 + $0x18] sm:$0xff]
        %v1672 = vld [vmem:[#allocation10] sm:$0x1]
        %v1674 = vlaneseq
        %v1675 = vshrl.u32 %v1674, 7
        %v1676 = vsub.s32 0, %v1675
        %v1677 = vrot.slane %v1672, %v1676
        %v1680 = vsel %vm911, %v1667, 0
        %1682 = vmatprep.subr.mxu0 0.0
        %1683 = vmatpush1.msra.mxu0 0.0
        %1684 = vmatprep.subr.mxu0 0.0
        %1685 = vmatpush1.msra.mxu0 0.0
        %1686 = vmatprep.subr.mxu0 0.0
        %1687 = vmatpush1.msra.mxu0 0.0
        %1688 = vmatprep.subr.mxu0 0.0
        %1689 = vmatpush1.msra.mxu0 0.0
        %1690 = vmatprep.subr.mxu0 0.0
        %1691 = vmatpush1.msra.mxu0 0.0
        %1692 = vmatprep.subr.mxu0 0.0
        %1693 = vmatpush1.msra.mxu0 0.0
        %1694 = vmatprep.subr.mxu0 0.0
        %1695 = vmatpush1.msra.mxu0 0.0
        %1696 = vmatprep.subr.mxu0 0.0
        %1697 = vmatpush1.msra.mxu0 0.0
        %1698 = vmatprep.subr.mxu0 0.0
        %1699 = vmatpush1.msra.mxu0 0.0
        %1700 = vmatprep.subr.mxu0 0.0
        %1701 = vmatpush1.msra.mxu0 0.0
        %1702 = vmatprep.subr.mxu0 0.0
        %1703 = vmatpush1.msra.mxu0 0.0
        %1704 = vmatprep.subr.mxu0 0.0
        %1705 = vmatpush1.msra.mxu0 0.0
        %1706 = vmatprep.subr.mxu0 0.0
        %1707 = vmatpush1.msra.mxu0 %v1671
        %1708 = vmatprep.subr.mxu0 0.0
        %1709 = vmatpush1.msra.mxu0 %v1670
        %1710 = vmatprep.subr.mxu0 0.0
        %1711 = vmatpush1.msra.mxu0 %v1669
        %1712 = vmatprep.subr.mxu0 0.0
        %1713 = vmatpush1.msra.mxu0 %v1668
        %1714 = vmatprep.subr.mxu0 0.0
        %1715 = vmatpush2.msra.mxu0 0.0
        %1716 = vmatprep.subr.mxu0 0.0
        %1717 = vmatpush2.msra.mxu0 0.0
        %1718 = vmatprep.subr.mxu0 0.0
        %1719 = vmatpush2.msra.mxu0 0.0
        %1720 = vmatprep.subr.mxu0 0.0
        %1721 = vmatpush2.msra.mxu0 0.0
        %1722 = vmatprep.subr.mxu0 0.0
        %1723 = vmatpush2.msra.mxu0 0.0
        %1724 = vmatprep.subr.mxu0 0.0
        %1725 = vmatpush2.msra.mxu0 0.0
        %1726 = vmatprep.subr.mxu0 0.0
        %1727 = vmatpush2.msra.mxu0 0.0
        %1728 = vmatprep.subr.mxu0 0.0
        %1729 = vmatpush2.msra.mxu0 0.0
        %1730 = vmatprep.subr.mxu0 0.0
        %1731 = vmatpush2.msra.mxu0 0.0
        %1732 = vmatprep.subr.mxu0 0.0
        %1733 = vmatpush2.msra.mxu0 0.0
        %1734 = vmatprep.subr.mxu0 0.0
        %1735 = vmatpush2.msra.mxu0 0.0
        %1736 = vmatprep.subr.mxu0 0.0
        %1737 = vmatpush2.msra.mxu0 0.0
        %1738 = vmatprep.subr.mxu0 0.0
        %1739 = vmatpush2.msra.mxu0 0.0
        %1740 = vmatprep.subr.mxu0 0.0
        %1741 = vmatpush2.msra.mxu0 0.0
        %1742 = vmatprep.subr.mxu0 0.0
        %1743 = vmatpush2.msra.mxu0 0.0
        %1744 = vmatprep.subr.mxu0 0.0
        %1745 = vmatpush2.msra.mxu0 0.0
        %1746 = vmatprep.mubr.f32.mxu0 0.0
        %1747 = vmatmul.mubr.f32.gmra.mxu0 %v1680
        %v1748 = vpop.f32.mrf.mxu0
        %v1749 = vadd.f32 %v1677, %v1748
        %v1750 = vpop.f32.mrf.mxu0
        %1751 = vdwg.mxu0
        %v1752 = vadd.f32 %v895, %v1749
        %v1753 = vld [vmem:[#allocation12] sm:$0x1]
        %v1754 = vld [vmem:[#allocation13] sm:$0x1]
        %v1755 = vsel %vm911, %v1752, 0.0
        %1756 = vadd.xlane.f32.xlu0 %v1755
        %v1757 = vpop.xlane.xlu0 %1756
        %v1758 = vrcp.pop 32.0
        %v1759 = vmul.f32 %v1757, %v1758
        %v1760 = vsub.f32 %v1752, %v1759
        %v1761 = vmul.f32 %v1760, %v1760
        %v1762 = vsel %vm911, %v1761, 0.0
        %1763 = vadd.xlane.f32.xlu0 %v1762
        %v1764 = vpop.xlane.xlu0 %1763
        %v1765 = vmul.f32 %v1764, %v1758
        %v1766 = vadd.f32 %v1765, 1e-05
        %v1767 = vrsqrt.pop %v1766
        %v1768 = vmul.f32 %v1760, %v1767
        %v1770 = vlaneseq
        %v1771 = vshrl.u32 %v1770, 7
        %v1772 = vsub.s32 0, %v1771
        %v1773 = vrot.slane %v1753, %v1772
        %v1775 = vmul.f32 %v1768, %v1773
        %v1777 = vlaneseq
        %v1778 = vshrl.u32 %v1777, 7
        %v1779 = vsub.s32 0, %v1778
        %v1780 = vrot.slane %v1754, %v1779
        %v1782 = vadd.f32 %v1775, %v1780
        %v1783 = vld [vmem:[%s9] sm:$0xff]
        %v1784 = vld [vmem:[%s9 + $0x8] sm:$0xff]
        %v1785 = vld [vmem:[%s9 + $0x10] sm:$0xff]
        %v1786 = vld [vmem:[%s9 + $0x18] sm:$0xff]
        %v1787 = vld [vmem:[#allocation15] sm:$0x1]
        %v1789 = vlaneseq
        %v1790 = vshrl.u32 %v1789, 7
        %v1791 = vsub.s32 0, %v1790
        %v1792 = vrot.slane %v1787, %v1791
        %v1795 = vsel %vm911, %v1782, 0
        %1797 = vmatprep.subr.mxu0 0.0
        %1798 = vmatpush1.msra.mxu0 0.0
        %1799 = vmatprep.subr.mxu0 0.0
        %1800 = vmatpush1.msra.mxu0 0.0
        %1801 = vmatprep.subr.mxu0 0.0
        %1802 = vmatpush1.msra.mxu0 0.0
        %1803 = vmatprep.subr.mxu0 0.0
        %1804 = vmatpush1.msra.mxu0 0.0
        %1805 = vmatprep.subr.mxu0 0.0
        %1806 = vmatpush1.msra.mxu0 0.0
        %1807 = vmatprep.subr.mxu0 0.0
        %1808 = vmatpush1.msra.mxu0 0.0
        %1809 = vmatprep.subr.mxu0 0.0
        %1810 = vmatpush1.msra.mxu0 0.0
        %1811 = vmatprep.subr.mxu0 0.0
        %1812 = vmatpush1.msra.mxu0 0.0
        %1813 = vmatprep.subr.mxu0 0.0
        %1814 = vmatpush1.msra.mxu0 0.0
        %1815 = vmatprep.subr.mxu0 0.0
        %1816 = vmatpush1.msra.mxu0 0.0
        %1817 = vmatprep.subr.mxu0 0.0
        %1818 = vmatpush1.msra.mxu0 0.0
        %1819 = vmatprep.subr.mxu0 0.0
        %1820 = vmatpush1.msra.mxu0 0.0
        %1821 = vmatprep.subr.mxu0 0.0
        %1822 = vmatpush1.msra.mxu0 %v1786
        %1823 = vmatprep.subr.mxu0 0.0
        %1824 = vmatpush1.msra.mxu0 %v1785
        %1825 = vmatprep.subr.mxu0 0.0
        %1826 = vmatpush1.msra.mxu0 %v1784
        %1827 = vmatprep.subr.mxu0 0.0
        %1828 = vmatpush1.msra.mxu0 %v1783
        %1829 = vmatprep.subr.mxu0 0.0
        %1830 = vmatpush2.msra.mxu0 0.0
        %1831 = vmatprep.subr.mxu0 0.0
        %1832 = vmatpush2.msra.mxu0 0.0
        %1833 = vmatprep.subr.mxu0 0.0
        %1834 = vmatpush2.msra.mxu0 0.0
        %1835 = vmatprep.subr.mxu0 0.0
        %1836 = vmatpush2.msra.mxu0 0.0
        %1837 = vmatprep.subr.mxu0 0.0
        %1838 = vmatpush2.msra.mxu0 0.0
        %1839 = vmatprep.subr.mxu0 0.0
        %1840 = vmatpush2.msra.mxu0 0.0
        %1841 = vmatprep.subr.mxu0 0.0
        %1842 = vmatpush2.msra.mxu0 0.0
        %1843 = vmatprep.subr.mxu0 0.0
        %1844 = vmatpush2.msra.mxu0 0.0
        %1845 = vmatprep.subr.mxu0 0.0
        %1846 = vmatpush2.msra.mxu0 0.0
        %1847 = vmatprep.subr.mxu0 0.0
        %1848 = vmatpush2.msra.mxu0 0.0
        %1849 = vmatprep.subr.mxu0 0.0
        %1850 = vmatpush2.msra.mxu0 0.0
        %1851 = vmatprep.subr.mxu0 0.0
        %1852 = vmatpush2.msra.mxu0 0.0
        %1853 = vmatprep.subr.mxu0 0.0
        %1854 = vmatpush2.msra.mxu0 0.0
        %1855 = vmatprep.subr.mxu0 0.0
        %1856 = vmatpush2.msra.mxu0 0.0
        %1857 = vmatprep.subr.mxu0 0.0
        %1858 = vmatpush2.msra.mxu0 0.0
        %1859 = vmatprep.subr.mxu0 0.0
        %1860 = vmatpush2.msra.mxu0 0.0
        %1861 = vmatprep.mubr.f32.mxu0 0.0
        %1862 = vmatmul.mubr.f32.gmra.mxu0 %v1795
        %v1863 = vpop.f32.mrf.mxu0
        %v1864 = vadd.f32 %v1792, %v1863
        %v1865 = vpop.f32.mrf.mxu0
        %1866 = vdwg.mxu0
        %v1867 = vmax.f32 %v1864, 0.0
        %v1868 = vld [vmem:[%s11] sm:$0xff]
        %v1869 = vld [vmem:[%s11 + $0x8] sm:$0xff]
        %v1870 = vld [vmem:[%s11 + $0x10] sm:$0xff]
        %v1871 = vld [vmem:[%s11 + $0x18] sm:$0xff]
        %v1872 = vld [vmem:[%s11 + $0x20] sm:$0xff]
        %v1873 = vld [vmem:[%s11 + $0x28] sm:$0xff]
        %v1874 = vld [vmem:[%s11 + $0x30] sm:$0xff]
        %v1875 = vld [vmem:[%s11 + $0x38] sm:$0xff]
        %v1876 = vld [vmem:[#allocation16] sm:$0x1]
        %v1878 = vlaneseq
        %v1879 = vshrl.u32 %v1878, 7
        %v1880 = vsub.s32 0, %v1879
        %v1881 = vrot.slane %v1876, %v1880
        %vm1883 = vcmask 523264
        %v1885 = vsel %vm1883, %v1867, 0
        %1887 = vmatprep.subr.mxu0 0.0
        %1888 = vmatpush1.msra.mxu0 0.0
        %1889 = vmatprep.subr.mxu0 0.0
        %1890 = vmatpush1.msra.mxu0 0.0
        %1891 = vmatprep.subr.mxu0 0.0
        %1892 = vmatpush1.msra.mxu0 0.0
        %1893 = vmatprep.subr.mxu0 0.0
        %1894 = vmatpush1.msra.mxu0 0.0
        %1895 = vmatprep.subr.mxu0 0.0
        %1896 = vmatpush1.msra.mxu0 0.0
        %1897 = vmatprep.subr.mxu0 0.0
        %1898 = vmatpush1.msra.mxu0 0.0
        %1899 = vmatprep.subr.mxu0 0.0
        %1900 = vmatpush1.msra.mxu0 0.0
        %1901 = vmatprep.subr.mxu0 0.0
        %1902 = vmatpush1.msra.mxu0 0.0
        %1903 = vmatprep.subr.mxu0 0.0
        %1904 = vmatpush1.msra.mxu0 %v1875
        %1905 = vmatprep.subr.mxu0 0.0
        %1906 = vmatpush1.msra.mxu0 %v1874
        %1907 = vmatprep.subr.mxu0 0.0
        %1908 = vmatpush1.msra.mxu0 %v1873
        %1909 = vmatprep.subr.mxu0 0.0
        %1910 = vmatpush1.msra.mxu0 %v1872
        %1911 = vmatprep.subr.mxu0 0.0
        %1912 = vmatpush1.msra.mxu0 %v1871
        %1913 = vmatprep.subr.mxu0 0.0
        %1914 = vmatpush1.msra.mxu0 %v1870
        %1915 = vmatprep.subr.mxu0 0.0
        %1916 = vmatpush1.msra.mxu0 %v1869
        %1917 = vmatprep.subr.mxu0 0.0
        %1918 = vmatpush1.msra.mxu0 %v1868
        %1919 = vmatprep.subr.mxu0 0.0
        %1920 = vmatpush2.msra.mxu0 0.0
        %1921 = vmatprep.subr.mxu0 0.0
        %1922 = vmatpush2.msra.mxu0 0.0
        %1923 = vmatprep.subr.mxu0 0.0
        %1924 = vmatpush2.msra.mxu0 0.0
        %1925 = vmatprep.subr.mxu0 0.0
        %1926 = vmatpush2.msra.mxu0 0.0
        %1927 = vmatprep.subr.mxu0 0.0
        %1928 = vmatpush2.msra.mxu0 0.0
        %1929 = vmatprep.subr.mxu0 0.0
        %1930 = vmatpush2.msra.mxu0 0.0
        %1931 = vmatprep.subr.mxu0 0.0
        %1932 = vmatpush2.msra.mxu0 0.0
        %1933 = vmatprep.subr.mxu0 0.0
        %1934 = vmatpush2.msra.mxu0 0.0
        %1935 = vmatprep.subr.mxu0 0.0
        %1936 = vmatpush2.msra.mxu0 0.0
        %1937 = vmatprep.subr.mxu0 0.0
        %1938 = vmatpush2.msra.mxu0 0.0
        %1939 = vmatprep.subr.mxu0 0.0
        %1940 = vmatpush2.msra.mxu0 0.0
        %1941 = vmatprep.subr.mxu0 0.0
        %1942 = vmatpush2.msra.mxu0 0.0
        %1943 = vmatprep.subr.mxu0 0.0
        %1944 = vmatpush2.msra.mxu0 0.0
        %1945 = vmatprep.subr.mxu0 0.0
        %1946 = vmatpush2.msra.mxu0 0.0
        %1947 = vmatprep.subr.mxu0 0.0
        %1948 = vmatpush2.msra.mxu0 0.0
        %1949 = vmatprep.subr.mxu0 0.0
        %1950 = vmatpush2.msra.mxu0 0.0
        %1951 = vmatprep.mubr.f32.mxu0 0.0
        %1952 = vmatmul.mubr.f32.gmra.mxu0 %v1885
        %v1953 = vpop.f32.mrf.mxu0
        %v1954 = vadd.f32 %v1881, %v1953
        %v1955 = vpop.f32.mrf.mxu0
        %1956 = vdwg.mxu0
        %v1957 = vadd.f32 %v1782, %v1954
        %v1958 = vld [vmem:[#allocation18] sm:$0x1]
        %v1959 = vld [vmem:[#allocation19] sm:$0x1]
        %v1960 = vsel %vm911, %v1957, 0.0
        %1961 = vadd.xlane.f32.xlu0 %v1960
        %v1962 = vpop.xlane.xlu0 %1961
        %v1963 = vmul.f32 %v1962, %v1758
        %v1964 = vsub.f32 %v1957, %v1963
        %v1965 = vmul.f32 %v1964, %v1964
        %v1966 = vsel %vm911, %v1965, 0.0
        %1967 = vadd.xlane.f32.xlu0 %v1966
        %v1968 = vpop.xlane.xlu0 %1967
        %v1969 = vmul.f32 %v1968, %v1758
        %v1970 = vadd.f32 %v1969, 1e-05
        %v1971 = vrsqrt.pop %v1970
        %v1972 = vmul.f32 %v1964, %v1971
        %v1974 = vlaneseq
        %v1975 = vshrl.u32 %v1974, 7
        %v1976 = vsub.s32 0, %v1975
        %v1977 = vrot.slane %v1958, %v1976
        %v1979 = vmul.f32 %v1972, %v1977
        %v1981 = vlaneseq
        %v1982 = vshrl.u32 %v1981, 7
        %v1983 = vsub.s32 0, %v1982
        %v1984 = vrot.slane %v1959, %v1983
        %v1986 = vadd.f32 %v1979, %v1984
        %s1987 = scalar_lea.vmem %s3, 32
        %v1988 = vld [vmem:[%s1987] sm:$0xff]
        %v1989 = vld [vmem:[%s1987 + $0x8] sm:$0xff]
        %v1990 = vld [vmem:[%s1987 + $0x10] sm:$0xff]
        %v1991 = vld [vmem:[%s1987 + $0x18] sm:$0xff]
        %s1992 = scalar_lea.vmem [#allocation9], 1
        %v1993 = vld [vmem:[%s1992] sm:$0x1]
        %v1995 = vlaneseq
        %v1996 = vshrl.u32 %v1995, 7
        %v1997 = vsub.s32 0, %v1996
        %v1998 = vrot.slane %v1993, %v1997
        %v2001 = vsel %vm911, %v1986, 0
        %2003 = vmatprep.subr.mxu0 0.0
        %2004 = vmatpush1.msra.mxu0 0.0
        %2005 = vmatprep.subr.mxu0 0.0
        %2006 = vmatpush1.msra.mxu0 0.0
        %2007 = vmatprep.subr.mxu0 0.0
        %2008 = vmatpush1.msra.mxu0 0.0
        %2009 = vmatprep.subr.mxu0 0.0
        %2010 = vmatpush1.msra.mxu0 0.0
        %2011 = vmatprep.subr.mxu0 0.0
        %2012 = vmatpush1.msra.mxu0 0.0
        %2013 = vmatprep.subr.mxu0 0.0
        %2014 = vmatpush1.msra.mxu0 0.0
        %2015 = vmatprep.subr.mxu0 0.0
        %2016 = vmatpush1.msra.mxu0 0.0
        %2017 = vmatprep.subr.mxu0 0.0
        %2018 = vmatpush1.msra.mxu0 0.0
        %2019 = vmatprep.subr.mxu0 0.0
        %2020 = vmatpush1.msra.mxu0 0.0
        %2021 = vmatprep.subr.mxu0 0.0
        %2022 = vmatpush1.msra.mxu0 0.0
        %2023 = vmatprep.subr.mxu0 0.0
        %2024 = vmatpush1.msra.mxu0 0.0
        %2025 = vmatprep.subr.mxu0 0.0
        %2026 = vmatpush1.msra.mxu0 0.0
        %2027 = vmatprep.subr.mxu0 0.0
        %2028 = vmatpush1.msra.mxu0 %v1991
        %2029 = vmatprep.subr.mxu0 0.0
        %2030 = vmatpush1.msra.mxu0 %v1990
        %2031 = vmatprep.subr.mxu0 0.0
        %2032 = vmatpush1.msra.mxu0 %v1989
        %2033 = vmatprep.subr.mxu0 0.0
        %2034 = vmatpush1.msra.mxu0 %v1988
        %2035 = vmatprep.subr.mxu0 0.0
        %2036 = vmatpush2.msra.mxu0 0.0
        %2037 = vmatprep.subr.mxu0 0.0
        %2038 = vmatpush2.msra.mxu0 0.0
        %2039 = vmatprep.subr.mxu0 0.0
        %2040 = vmatpush2.msra.mxu0 0.0
        %2041 = vmatprep.subr.mxu0 0.0
        %2042 = vmatpush2.msra.mxu0 0.0
        %2043 = vmatprep.subr.mxu0 0.0
        %2044 = vmatpush2.msra.mxu0 0.0
        %2045 = vmatprep.subr.mxu0 0.0
        %2046 = vmatpush2.msra.mxu0 0.0
        %2047 = vmatprep.subr.mxu0 0.0
        %2048 = vmatpush2.msra.mxu0 0.0
        %2049 = vmatprep.subr.mxu0 0.0
        %2050 = vmatpush2.msra.mxu0 0.0
        %2051 = vmatprep.subr.mxu0 0.0
        %2052 = vmatpush2.msra.mxu0 0.0
        %2053 = vmatprep.subr.mxu0 0.0
        %2054 = vmatpush2.msra.mxu0 0.0
        %2055 = vmatprep.subr.mxu0 0.0
        %2056 = vmatpush2.msra.mxu0 0.0
        %2057 = vmatprep.subr.mxu0 0.0
        %2058 = vmatpush2.msra.mxu0 0.0
        %2059 = vmatprep.subr.mxu0 0.0
        %2060 = vmatpush2.msra.mxu0 0.0
        %2061 = vmatprep.subr.mxu0 0.0
        %2062 = vmatpush2.msra.mxu0 0.0
        %2063 = vmatprep.subr.mxu0 0.0
        %2064 = vmatpush2.msra.mxu0 0.0
        %2065 = vmatprep.subr.mxu0 0.0
        %2066 = vmatpush2.msra.mxu0 0.0
        %2067 = vmatprep.mubr.f32.mxu0 0.0
        %2068 = vmatmul.mubr.f32.gmra.mxu0 %v2001
        %v2069 = vpop.f32.mrf.mxu0
        %v2070 = vadd.f32 %v1998, %v2069
        %v2071 = vpop.f32.mrf.mxu0
        %2072 = vdwg.mxu0
        %v2073 = vmul.f32 %v2070, 0.35355338
        %2075 = vrot.lane.b32.xlu0 %v2070, 96
        %v2076 = vpop.permute.xlu0 %2075
        %v2078 = vsel %vm989, %v2073, 0
        %v2080 = vsel %vm989, %v2076, 0
        %2082 = vmatprep.subr.mxu0 0.0
        %2083 = vmatpush1.xpose.msra.mxu0 0.0
        %2084 = vmatprep.subr.mxu0 0.0
        %2085 = vmatpush1.xpose.msra.mxu0 0.0
        %2086 = vmatprep.subr.mxu0 0.0
        %2087 = vmatpush1.xpose.msra.mxu0 0.0
        %2088 = vmatprep.subr.mxu0 0.0
        %2089 = vmatpush1.xpose.msra.mxu0 0.0
        %2090 = vmatprep.subr.mxu0 0.0
        %2091 = vmatpush1.xpose.msra.mxu0 0.0
        %2092 = vmatprep.subr.mxu0 0.0
        %2093 = vmatpush1.xpose.msra.mxu0 0.0
        %2094 = vmatprep.subr.mxu0 0.0
        %2095 = vmatpush1.xpose.msra.mxu0 0.0
        %2096 = vmatprep.subr.mxu0 0.0
        %2097 = vmatpush1.xpose.msra.mxu0 0.0
        %2098 = vmatprep.subr.mxu0 0.0
        %2099 = vmatpush1.xpose.msra.mxu0 0.0
        %2100 = vmatprep.subr.mxu0 0.0
        %2101 = vmatpush1.xpose.msra.mxu0 0.0
        %2102 = vmatprep.subr.mxu0 0.0
        %2103 = vmatpush1.xpose.msra.mxu0 0.0
        %2104 = vmatprep.subr.mxu0 0.0
        %2105 = vmatpush1.xpose.msra.mxu0 0.0
        %2106 = vmatprep.subr.mxu0 0.0
        %2107 = vmatpush1.xpose.msra.mxu0 0.0
        %2108 = vmatprep.subr.mxu0 0.0
        %2109 = vmatpush1.xpose.msra.mxu0 0.0
        %2110 = vmatprep.subr.mxu0 0.0
        %2111 = vmatpush1.xpose.msra.mxu0 0.0
        %2112 = vmatprep.subr.mxu0 0.0
        %2113 = vmatpush1.xpose.msra.mxu0 %v2080
        %2114 = vmatprep.subr.mxu0 0.0
        %2115 = vmatpush2.xpose.msra.mxu0 0.0
        %2116 = vmatprep.subr.mxu0 0.0
        %2117 = vmatpush2.xpose.msra.mxu0 0.0
        %2118 = vmatprep.subr.mxu0 0.0
        %2119 = vmatpush2.xpose.msra.mxu0 0.0
        %2120 = vmatprep.subr.mxu0 0.0
        %2121 = vmatpush2.xpose.msra.mxu0 0.0
        %2122 = vmatprep.subr.mxu0 0.0
        %2123 = vmatpush2.xpose.msra.mxu0 0.0
        %2124 = vmatprep.subr.mxu0 0.0
        %2125 = vmatpush2.xpose.msra.mxu0 0.0
        %2126 = vmatprep.subr.mxu0 0.0
        %2127 = vmatpush2.xpose.msra.mxu0 0.0
        %2128 = vmatprep.subr.mxu0 0.0
        %2129 = vmatpush2.xpose.msra.mxu0 0.0
        %2130 = vmatprep.subr.mxu0 0.0
        %2131 = vmatpush2.xpose.msra.mxu0 0.0
        %2132 = vmatprep.subr.mxu0 0.0
        %2133 = vmatpush2.xpose.msra.mxu0 0.0
        %2134 = vmatprep.subr.mxu0 0.0
        %2135 = vmatpush2.xpose.msra.mxu0 0.0
        %2136 = vmatprep.subr.mxu0 0.0
        %2137 = vmatpush2.xpose.msra.mxu0 0.0
        %2138 = vmatprep.subr.mxu0 0.0
        %2139 = vmatpush2.xpose.msra.mxu0 0.0
        %2140 = vmatprep.subr.mxu0 0.0
        %2141 = vmatpush2.xpose.msra.mxu0 0.0
        %2142 = vmatprep.subr.mxu0 0.0
        %2143 = vmatpush2.xpose.msra.mxu0 0.0
        %2144 = vmatprep.subr.mxu0 0.0
        %2145 = vmatpush2.xpose.msra.mxu0 0.0
        %2146 = vmatprep.mubr.f32.mxu0 0.0
        %2147 = vmatmul.mubr.f32.gmra.mxu0 %v2078
        %v2148 = vpop.f32.mrf.mxu0
        %v2149 = vadd.f32 0.0, %v2148
        %v2150 = vpop.f32.mrf.mxu0
        %2151 = vdwg.mxu0
        %v2152 = vsel %vm899, %v2149, -1e+30
        %v2153 = vsel %vm989, %v2152, -inf
        %2154 = vmax.xlane.f32.xlu0 %v2153
        %v2155 = vpop.xlane.xlu0 %2154
        %v2156 = vsub.f32 %v2152, %v2155
        %v2157 = vmul.f32 %v2156, 1.442695
        %v2158 = vpow.pop %v2157
        %v2159 = vsel %vm989, %v2158, 0.0
        %2160 = vadd.xlane.f32.xlu0 %v2159
        %v2161 = vpop.xlane.xlu0 %2160
        %v2162 = vrcp.pop %v2161
        %v2163 = vmul.f32 %v2158, %v2162
        %2164 = vrot.lane.b32.xlu0 %v2070, 64
        %v2165 = vpop.permute.xlu0 %2164
        %v2168 = vsel %vm989, %v2163, 0
        %2170 = vmatprep.subr.mxu0 0.0
        %2171 = vmatpush1.msra.mxu0 0.0
        %2172 = vmatprep.subr.mxu0 0.0
        %2173 = vmatpush1.msra.mxu0 0.0
        %2174 = vmatprep.subr.mxu0 0.0
        %2175 = vmatpush1.msra.mxu0 0.0
        %2176 = vmatprep.subr.mxu0 0.0
        %2177 = vmatpush1.msra.mxu0 0.0
        %2178 = vmatprep.subr.mxu0 0.0
        %2179 = vmatpush1.msra.mxu0 0.0
        %2180 = vmatprep.subr.mxu0 0.0
        %2181 = vmatpush1.msra.mxu0 0.0
        %2182 = vmatprep.subr.mxu0 0.0
        %2183 = vmatpush1.msra.mxu0 0.0
        %2184 = vmatprep.subr.mxu0 0.0
        %2185 = vmatpush1.msra.mxu0 0.0
        %2186 = vmatprep.subr.mxu0 0.0
        %2187 = vmatpush1.msra.mxu0 0.0
        %2188 = vmatprep.subr.mxu0 0.0
        %2189 = vmatpush1.msra.mxu0 0.0
        %2190 = vmatprep.subr.mxu0 0.0
        %2191 = vmatpush1.msra.mxu0 0.0
        %2192 = vmatprep.subr.mxu0 0.0
        %2193 = vmatpush1.msra.mxu0 0.0
        %2194 = vmatprep.subr.mxu0 0.0
        %2195 = vmatpush1.msra.mxu0 0.0
        %2196 = vmatprep.subr.mxu0 0.0
        %2197 = vmatpush1.msra.mxu0 0.0
        %2198 = vmatprep.subr.mxu0 0.0
        %2199 = vmatpush1.msra.mxu0 0.0
        %2200 = vmatprep.subr.mxu0 0.0
        %2201 = vmatpush1.msra.mxu0 %v2165
        %2202 = vmatprep.subr.mxu0 0.0
        %2203 = vmatpush2.msra.mxu0 0.0
        %2204 = vmatprep.subr.mxu0 0.0
        %2205 = vmatpush2.msra.mxu0 0.0
        %2206 = vmatprep.subr.mxu0 0.0
        %2207 = vmatpush2.msra.mxu0 0.0
        %2208 = vmatprep.subr.mxu0 0.0
        %2209 = vmatpush2.msra.mxu0 0.0
        %2210 = vmatprep.subr.mxu0 0.0
        %2211 = vmatpush2.msra.mxu0 0.0
        %2212 = vmatprep.subr.mxu0 0.0
        %2213 = vmatpush2.msra.mxu0 0.0
        %2214 = vmatprep.subr.mxu0 0.0
        %2215 = vmatpush2.msra.mxu0 0.0
        %2216 = vmatprep.subr.mxu0 0.0
        %2217 = vmatpush2.msra.mxu0 0.0
        %2218 = vmatprep.subr.mxu0 0.0
        %2219 = vmatpush2.msra.mxu0 0.0
        %2220 = vmatprep.subr.mxu0 0.0
        %2221 = vmatpush2.msra.mxu0 0.0
        %2222 = vmatprep.subr.mxu0 0.0
        %2223 = vmatpush2.msra.mxu0 0.0
        %2224 = vmatprep.subr.mxu0 0.0
        %2225 = vmatpush2.msra.mxu0 0.0
        %2226 = vmatprep.subr.mxu0 0.0
        %2227 = vmatpush2.msra.mxu0 0.0
        %2228 = vmatprep.subr.mxu0 0.0
        %2229 = vmatpush2.msra.mxu0 0.0
        %2230 = vmatprep.subr.mxu0 0.0
        %2231 = vmatpush2.msra.mxu0 0.0
        %2232 = vmatprep.subr.mxu0 0.0
        %2233 = vmatpush2.msra.mxu0 0.0
        %2234 = vmatprep.mubr.f32.mxu0 0.0
        %2235 = vmatmul.mubr.f32.gmra.mxu0 %v2168
        %v2236 = vpop.f32.mrf.mxu0
        %v2237 = vadd.f32 0.0, %v2236
        %v2238 = vpop.f32.mrf.mxu0
        %2239 = vdwg.mxu0
        %2240 = vrot.lane.b32.xlu0 %v2073, 120
        %v2241 = vpop.permute.xlu0 %2240
        %2242 = vrot.lane.b32.xlu0 %v2070, 88
        %v2243 = vpop.permute.xlu0 %2242
        %v2244 = vsel %vm989, %v2241, 0
        %v2246 = vsel %vm989, %v2243, 0
        %2248 = vmatprep.subr.mxu0 0.0
        %2249 = vmatpush1.xpose.msra.mxu0 0.0
        %2250 = vmatprep.subr.mxu0 0.0
        %2251 = vmatpush1.xpose.msra.mxu0 0.0
        %2252 = vmatprep.subr.mxu0 0.0
        %2253 = vmatpush1.xpose.msra.mxu0 0.0
        %2254 = vmatprep.subr.mxu0 0.0
        %2255 = vmatpush1.xpose.msra.mxu0 0.0
        %2256 = vmatprep.subr.mxu0 0.0
        %2257 = vmatpush1.xpose.msra.mxu0 0.0
        %2258 = vmatprep.subr.mxu0 0.0
        %2259 = vmatpush1.xpose.msra.mxu0 0.0
        %2260 = vmatprep.subr.mxu0 0.0
        %2261 = vmatpush1.xpose.msra.mxu0 0.0
        %2262 = vmatprep.subr.mxu0 0.0
        %2263 = vmatpush1.xpose.msra.mxu0 0.0
        %2264 = vmatprep.subr.mxu0 0.0
        %2265 = vmatpush1.xpose.msra.mxu0 0.0
        %2266 = vmatprep.subr.mxu0 0.0
        %2267 = vmatpush1.xpose.msra.mxu0 0.0
        %2268 = vmatprep.subr.mxu0 0.0
        %2269 = vmatpush1.xpose.msra.mxu0 0.0
        %2270 = vmatprep.subr.mxu0 0.0
        %2271 = vmatpush1.xpose.msra.mxu0 0.0
        %2272 = vmatprep.subr.mxu0 0.0
        %2273 = vmatpush1.xpose.msra.mxu0 0.0
        %2274 = vmatprep.subr.mxu0 0.0
        %2275 = vmatpush1.xpose.msra.mxu0 0.0
        %2276 = vmatprep.subr.mxu0 0.0
        %2277 = vmatpush1.xpose.msra.mxu0 0.0
        %2278 = vmatprep.subr.mxu0 0.0
        %2279 = vmatpush1.xpose.msra.mxu0 %v2246
        %2280 = vmatprep.subr.mxu0 0.0
        %2281 = vmatpush2.xpose.msra.mxu0 0.0
        %2282 = vmatprep.subr.mxu0 0.0
        %2283 = vmatpush2.xpose.msra.mxu0 0.0
        %2284 = vmatprep.subr.mxu0 0.0
        %2285 = vmatpush2.xpose.msra.mxu0 0.0
        %2286 = vmatprep.subr.mxu0 0.0
        %2287 = vmatpush2.xpose.msra.mxu0 0.0
        %2288 = vmatprep.subr.mxu0 0.0
        %2289 = vmatpush2.xpose.msra.mxu0 0.0
        %2290 = vmatprep.subr.mxu0 0.0
        %2291 = vmatpush2.xpose.msra.mxu0 0.0
        %2292 = vmatprep.subr.mxu0 0.0
        %2293 = vmatpush2.xpose.msra.mxu0 0.0
        %2294 = vmatprep.subr.mxu0 0.0
        %2295 = vmatpush2.xpose.msra.mxu0 0.0
        %2296 = vmatprep.subr.mxu0 0.0
        %2297 = vmatpush2.xpose.msra.mxu0 0.0
        %2298 = vmatprep.subr.mxu0 0.0
        %2299 = vmatpush2.xpose.msra.mxu0 0.0
        %2300 = vmatprep.subr.mxu0 0.0
        %2301 = vmatpush2.xpose.msra.mxu0 0.0
        %2302 = vmatprep.subr.mxu0 0.0
        %2303 = vmatpush2.xpose.msra.mxu0 0.0
        %2304 = vmatprep.subr.mxu0 0.0
        %2305 = vmatpush2.xpose.msra.mxu0 0.0
        %2306 = vmatprep.subr.mxu0 0.0
        %2307 = vmatpush2.xpose.msra.mxu0 0.0
        %2308 = vmatprep.subr.mxu0 0.0
        %2309 = vmatpush2.xpose.msra.mxu0 0.0
        %2310 = vmatprep.subr.mxu0 0.0
        %2311 = vmatpush2.xpose.msra.mxu0 0.0
        %2312 = vmatprep.mubr.f32.mxu0 0.0
        %2313 = vmatmul.mubr.f32.gmra.mxu0 %v2244
        %v2314 = vpop.f32.mrf.mxu0
        %v2315 = vadd.f32 0.0, %v2314
        %v2316 = vpop.f32.mrf.mxu0
        %2317 = vdwg.mxu0
        %v2318 = vsel %vm899, %v2315, -1e+30
        %v2319 = vsel %vm989, %v2318, -inf
        %2320 = vmax.xlane.f32.xlu0 %v2319
        %v2321 = vpop.xlane.xlu0 %2320
        %v2322 = vsub.f32 %v2318, %v2321
        %v2323 = vmul.f32 %v2322, 1.442695
        %v2324 = vpow.pop %v2323
        %v2325 = vsel %vm989, %v2324, 0.0
        %2326 = vadd.xlane.f32.xlu0 %v2325
        %v2327 = vpop.xlane.xlu0 %2326
        %v2328 = vrcp.pop %v2327
        %v2329 = vmul.f32 %v2324, %v2328
        %2330 = vrot.lane.b32.xlu0 %v2070, 56
        %v2331 = vpop.permute.xlu0 %2330
        %v2334 = vsel %vm989, %v2329, 0
        %2336 = vmatprep.subr.mxu0 0.0
        %2337 = vmatpush1.msra.mxu0 0.0
        %2338 = vmatprep.subr.mxu0 0.0
        %2339 = vmatpush1.msra.mxu0 0.0
        %2340 = vmatprep.subr.mxu0 0.0
        %2341 = vmatpush1.msra.mxu0 0.0
        %2342 = vmatprep.subr.mxu0 0.0
        %2343 = vmatpush1.msra.mxu0 0.0
        %2344 = vmatprep.subr.mxu0 0.0
        %2345 = vmatpush1.msra.mxu0 0.0
        %2346 = vmatprep.subr.mxu0 0.0
        %2347 = vmatpush1.msra.mxu0 0.0
        %2348 = vmatprep.subr.mxu0 0.0
        %2349 = vmatpush1.msra.mxu0 0.0
        %2350 = vmatprep.subr.mxu0 0.0
        %2351 = vmatpush1.msra.mxu0 0.0
        %2352 = vmatprep.subr.mxu0 0.0
        %2353 = vmatpush1.msra.mxu0 0.0
        %2354 = vmatprep.subr.mxu0 0.0
        %2355 = vmatpush1.msra.mxu0 0.0
        %2356 = vmatprep.subr.mxu0 0.0
        %2357 = vmatpush1.msra.mxu0 0.0
        %2358 = vmatprep.subr.mxu0 0.0
        %2359 = vmatpush1.msra.mxu0 0.0
        %2360 = vmatprep.subr.mxu0 0.0
        %2361 = vmatpush1.msra.mxu0 0.0
        %2362 = vmatprep.subr.mxu0 0.0
        %2363 = vmatpush1.msra.mxu0 0.0
        %2364 = vmatprep.subr.mxu0 0.0
        %2365 = vmatpush1.msra.mxu0 0.0
        %2366 = vmatprep.subr.mxu0 0.0
        %2367 = vmatpush1.msra.mxu0 %v2331
        %2368 = vmatprep.subr.mxu0 0.0
        %2369 = vmatpush2.msra.mxu0 0.0
        %2370 = vmatprep.subr.mxu0 0.0
        %2371 = vmatpush2.msra.mxu0 0.0
        %2372 = vmatprep.subr.mxu0 0.0
        %2373 = vmatpush2.msra.mxu0 0.0
        %2374 = vmatprep.subr.mxu0 0.0
        %2375 = vmatpush2.msra.mxu0 0.0
        %2376 = vmatprep.subr.mxu0 0.0
        %2377 = vmatpush2.msra.mxu0 0.0
        %2378 = vmatprep.subr.mxu0 0.0
        %2379 = vmatpush2.msra.mxu0 0.0
        %2380 = vmatprep.subr.mxu0 0.0
        %2381 = vmatpush2.msra.mxu0 0.0
        %2382 = vmatprep.subr.mxu0 0.0
        %2383 = vmatpush2.msra.mxu0 0.0
        %2384 = vmatprep.subr.mxu0 0.0
        %2385 = vmatpush2.msra.mxu0 0.0
        %2386 = vmatprep.subr.mxu0 0.0
        %2387 = vmatpush2.msra.mxu0 0.0
        %2388 = vmatprep.subr.mxu0 0.0
        %2389 = vmatpush2.msra.mxu0 0.0
        %2390 = vmatprep.subr.mxu0 0.0
        %2391 = vmatpush2.msra.mxu0 0.0
        %2392 = vmatprep.subr.mxu0 0.0
        %2393 = vmatpush2.msra.mxu0 0.0
        %2394 = vmatprep.subr.mxu0 0.0
        %2395 = vmatpush2.msra.mxu0 0.0
        %2396 = vmatprep.subr.mxu0 0.0
        %2397 = vmatpush2.msra.mxu0 0.0
        %2398 = vmatprep.subr.mxu0 0.0
        %2399 = vmatpush2.msra.mxu0 0.0
        %2400 = vmatprep.mubr.f32.mxu0 0.0
        %2401 = vmatmul.mubr.f32.gmra.mxu0 %v2334
        %v2402 = vpop.f32.mrf.mxu0
        %v2403 = vadd.f32 0.0, %v2402
        %v2404 = vpop.f32.mrf.mxu0
        %2405 = vdwg.mxu0
        %2406 = vrot.lane.b32.xlu0 %v2073, 112
        %v2407 = vpop.permute.xlu0 %2406
        %2408 = vrot.lane.b32.xlu0 %v2070, 80
        %v2409 = vpop.permute.xlu0 %2408
        %v2410 = vsel %vm989, %v2407, 0
        %v2412 = vsel %vm989, %v2409, 0
        %2414 = vmatprep.subr.mxu0 0.0
        %2415 = vmatpush1.xpose.msra.mxu0 0.0
        %2416 = vmatprep.subr.mxu0 0.0
        %2417 = vmatpush1.xpose.msra.mxu0 0.0
        %2418 = vmatprep.subr.mxu0 0.0
        %2419 = vmatpush1.xpose.msra.mxu0 0.0
        %2420 = vmatprep.subr.mxu0 0.0
        %2421 = vmatpush1.xpose.msra.mxu0 0.0
        %2422 = vmatprep.subr.mxu0 0.0
        %2423 = vmatpush1.xpose.msra.mxu0 0.0
        %2424 = vmatprep.subr.mxu0 0.0
        %2425 = vmatpush1.xpose.msra.mxu0 0.0
        %2426 = vmatprep.subr.mxu0 0.0
        %2427 = vmatpush1.xpose.msra.mxu0 0.0
        %2428 = vmatprep.subr.mxu0 0.0
        %2429 = vmatpush1.xpose.msra.mxu0 0.0
        %2430 = vmatprep.subr.mxu0 0.0
        %2431 = vmatpush1.xpose.msra.mxu0 0.0
        %2432 = vmatprep.subr.mxu0 0.0
        %2433 = vmatpush1.xpose.msra.mxu0 0.0
        %2434 = vmatprep.subr.mxu0 0.0
        %2435 = vmatpush1.xpose.msra.mxu0 0.0
        %2436 = vmatprep.subr.mxu0 0.0
        %2437 = vmatpush1.xpose.msra.mxu0 0.0
        %2438 = vmatprep.subr.mxu0 0.0
        %2439 = vmatpush1.xpose.msra.mxu0 0.0
        %2440 = vmatprep.subr.mxu0 0.0
        %2441 = vmatpush1.xpose.msra.mxu0 0.0
        %2442 = vmatprep.subr.mxu0 0.0
        %2443 = vmatpush1.xpose.msra.mxu0 0.0
        %2444 = vmatprep.subr.mxu0 0.0
        %2445 = vmatpush1.xpose.msra.mxu0 %v2412
        %2446 = vmatprep.subr.mxu0 0.0
        %2447 = vmatpush2.xpose.msra.mxu0 0.0
        %2448 = vmatprep.subr.mxu0 0.0
        %2449 = vmatpush2.xpose.msra.mxu0 0.0
        %2450 = vmatprep.subr.mxu0 0.0
        %2451 = vmatpush2.xpose.msra.mxu0 0.0
        %2452 = vmatprep.subr.mxu0 0.0
        %2453 = vmatpush2.xpose.msra.mxu0 0.0
        %2454 = vmatprep.subr.mxu0 0.0
        %2455 = vmatpush2.xpose.msra.mxu0 0.0
        %2456 = vmatprep.subr.mxu0 0.0
        %2457 = vmatpush2.xpose.msra.mxu0 0.0
        %2458 = vmatprep.subr.mxu0 0.0
        %2459 = vmatpush2.xpose.msra.mxu0 0.0
        %2460 = vmatprep.subr.mxu0 0.0
        %2461 = vmatpush2.xpose.msra.mxu0 0.0
        %2462 = vmatprep.subr.mxu0 0.0
        %2463 = vmatpush2.xpose.msra.mxu0 0.0
        %2464 = vmatprep.subr.mxu0 0.0
        %2465 = vmatpush2.xpose.msra.mxu0 0.0
        %2466 = vmatprep.subr.mxu0 0.0
        %2467 = vmatpush2.xpose.msra.mxu0 0.0
        %2468 = vmatprep.subr.mxu0 0.0
        %2469 = vmatpush2.xpose.msra.mxu0 0.0
        %2470 = vmatprep.subr.mxu0 0.0
        %2471 = vmatpush2.xpose.msra.mxu0 0.0
        %2472 = vmatprep.subr.mxu0 0.0
        %2473 = vmatpush2.xpose.msra.mxu0 0.0
        %2474 = vmatprep.subr.mxu0 0.0
        %2475 = vmatpush2.xpose.msra.mxu0 0.0
        %2476 = vmatprep.subr.mxu0 0.0
        %2477 = vmatpush2.xpose.msra.mxu0 0.0
        %2478 = vmatprep.mubr.f32.mxu0 0.0
        %2479 = vmatmul.mubr.f32.gmra.mxu0 %v2410
        %v2480 = vpop.f32.mrf.mxu0
        %v2481 = vadd.f32 0.0, %v2480
        %v2482 = vpop.f32.mrf.mxu0
        %2483 = vdwg.mxu0
        %v2484 = vsel %vm899, %v2481, -1e+30
        %v2485 = vsel %vm989, %v2484, -inf
        %2486 = vmax.xlane.f32.xlu0 %v2485
        %v2487 = vpop.xlane.xlu0 %2486
        %v2488 = vsub.f32 %v2484, %v2487
        %v2489 = vmul.f32 %v2488, 1.442695
        %v2490 = vpow.pop %v2489
        %v2491 = vsel %vm989, %v2490, 0.0
        %2492 = vadd.xlane.f32.xlu0 %v2491
        %v2493 = vpop.xlane.xlu0 %2492
        %v2494 = vrcp.pop %v2493
        %v2495 = vmul.f32 %v2490, %v2494
        %2496 = vrot.lane.b32.xlu0 %v2070, 48
        %v2497 = vpop.permute.xlu0 %2496
        %v2500 = vsel %vm989, %v2495, 0
        %2502 = vmatprep.subr.mxu0 0.0
        %2503 = vmatpush1.msra.mxu0 0.0
        %2504 = vmatprep.subr.mxu0 0.0
        %2505 = vmatpush1.msra.mxu0 0.0
        %2506 = vmatprep.subr.mxu0 0.0
        %2507 = vmatpush1.msra.mxu0 0.0
        %2508 = vmatprep.subr.mxu0 0.0
        %2509 = vmatpush1.msra.mxu0 0.0
        %2510 = vmatprep.subr.mxu0 0.0
        %2511 = vmatpush1.msra.mxu0 0.0
        %2512 = vmatprep.subr.mxu0 0.0
        %2513 = vmatpush1.msra.mxu0 0.0
        %2514 = vmatprep.subr.mxu0 0.0
        %2515 = vmatpush1.msra.mxu0 0.0
        %2516 = vmatprep.subr.mxu0 0.0
        %2517 = vmatpush1.msra.mxu0 0.0
        %2518 = vmatprep.subr.mxu0 0.0
        %2519 = vmatpush1.msra.mxu0 0.0
        %2520 = vmatprep.subr.mxu0 0.0
        %2521 = vmatpush1.msra.mxu0 0.0
        %2522 = vmatprep.subr.mxu0 0.0
        %2523 = vmatpush1.msra.mxu0 0.0
        %2524 = vmatprep.subr.mxu0 0.0
        %2525 = vmatpush1.msra.mxu0 0.0
        %2526 = vmatprep.subr.mxu0 0.0
        %2527 = vmatpush1.msra.mxu0 0.0
        %2528 = vmatprep.subr.mxu0 0.0
        %2529 = vmatpush1.msra.mxu0 0.0
        %2530 = vmatprep.subr.mxu0 0.0
        %2531 = vmatpush1.msra.mxu0 0.0
        %2532 = vmatprep.subr.mxu0 0.0
        %2533 = vmatpush1.msra.mxu0 %v2497
        %2534 = vmatprep.subr.mxu0 0.0
        %2535 = vmatpush2.msra.mxu0 0.0
        %2536 = vmatprep.subr.mxu0 0.0
        %2537 = vmatpush2.msra.mxu0 0.0
        %2538 = vmatprep.subr.mxu0 0.0
        %2539 = vmatpush2.msra.mxu0 0.0
        %2540 = vmatprep.subr.mxu0 0.0
        %2541 = vmatpush2.msra.mxu0 0.0
        %2542 = vmatprep.subr.mxu0 0.0
        %2543 = vmatpush2.msra.mxu0 0.0
        %2544 = vmatprep.subr.mxu0 0.0
        %2545 = vmatpush2.msra.mxu0 0.0
        %2546 = vmatprep.subr.mxu0 0.0
        %2547 = vmatpush2.msra.mxu0 0.0
        %2548 = vmatprep.subr.mxu0 0.0
        %2549 = vmatpush2.msra.mxu0 0.0
        %2550 = vmatprep.subr.mxu0 0.0
        %2551 = vmatpush2.msra.mxu0 0.0
        %2552 = vmatprep.subr.mxu0 0.0
        %2553 = vmatpush2.msra.mxu0 0.0
        %2554 = vmatprep.subr.mxu0 0.0
        %2555 = vmatpush2.msra.mxu0 0.0
        %2556 = vmatprep.subr.mxu0 0.0
        %2557 = vmatpush2.msra.mxu0 0.0
        %2558 = vmatprep.subr.mxu0 0.0
        %2559 = vmatpush2.msra.mxu0 0.0
        %2560 = vmatprep.subr.mxu0 0.0
        %2561 = vmatpush2.msra.mxu0 0.0
        %2562 = vmatprep.subr.mxu0 0.0
        %2563 = vmatpush2.msra.mxu0 0.0
        %2564 = vmatprep.subr.mxu0 0.0
        %2565 = vmatpush2.msra.mxu0 0.0
        %2566 = vmatprep.mubr.f32.mxu0 0.0
        %2567 = vmatmul.mubr.f32.gmra.mxu0 %v2500
        %v2568 = vpop.f32.mrf.mxu0
        %v2569 = vadd.f32 0.0, %v2568
        %v2570 = vpop.f32.mrf.mxu0
        %2571 = vdwg.mxu0
        %2572 = vrot.lane.b32.xlu0 %v2073, 104
        %v2573 = vpop.permute.xlu0 %2572
        %2574 = vrot.lane.b32.xlu0 %v2070, 72
        %v2575 = vpop.permute.xlu0 %2574
        %v2576 = vsel %vm989, %v2573, 0
        %v2578 = vsel %vm989, %v2575, 0
        %2580 = vmatprep.subr.mxu0 0.0
        %2581 = vmatpush1.xpose.msra.mxu0 0.0
        %2582 = vmatprep.subr.mxu0 0.0
        %2583 = vmatpush1.xpose.msra.mxu0 0.0
        %2584 = vmatprep.subr.mxu0 0.0
        %2585 = vmatpush1.xpose.msra.mxu0 0.0
        %2586 = vmatprep.subr.mxu0 0.0
        %2587 = vmatpush1.xpose.msra.mxu0 0.0
        %2588 = vmatprep.subr.mxu0 0.0
        %2589 = vmatpush1.xpose.msra.mxu0 0.0
        %2590 = vmatprep.subr.mxu0 0.0
        %2591 = vmatpush1.xpose.msra.mxu0 0.0
        %2592 = vmatprep.subr.mxu0 0.0
        %2593 = vmatpush1.xpose.msra.mxu0 0.0
        %2594 = vmatprep.subr.mxu0 0.0
        %2595 = vmatpush1.xpose.msra.mxu0 0.0
        %2596 = vmatprep.subr.mxu0 0.0
        %2597 = vmatpush1.xpose.msra.mxu0 0.0
        %2598 = vmatprep.subr.mxu0 0.0
        %2599 = vmatpush1.xpose.msra.mxu0 0.0
        %2600 = vmatprep.subr.mxu0 0.0
        %2601 = vmatpush1.xpose.msra.mxu0 0.0
        %2602 = vmatprep.subr.mxu0 0.0
        %2603 = vmatpush1.xpose.msra.mxu0 0.0
        %2604 = vmatprep.subr.mxu0 0.0
        %2605 = vmatpush1.xpose.msra.mxu0 0.0
        %2606 = vmatprep.subr.mxu0 0.0
        %2607 = vmatpush1.xpose.msra.mxu0 0.0
        %2608 = vmatprep.subr.mxu0 0.0
        %2609 = vmatpush1.xpose.msra.mxu0 0.0
        %2610 = vmatprep.subr.mxu0 0.0
        %2611 = vmatpush1.xpose.msra.mxu0 %v2578
        %2612 = vmatprep.subr.mxu0 0.0
        %2613 = vmatpush2.xpose.msra.mxu0 0.0
        %2614 = vmatprep.subr.mxu0 0.0
        %2615 = vmatpush2.xpose.msra.mxu0 0.0
        %2616 = vmatprep.subr.mxu0 0.0
        %2617 = vmatpush2.xpose.msra.mxu0 0.0
        %2618 = vmatprep.subr.mxu0 0.0
        %2619 = vmatpush2.xpose.msra.mxu0 0.0
        %2620 = vmatprep.subr.mxu0 0.0
        %2621 = vmatpush2.xpose.msra.mxu0 0.0
        %2622 = vmatprep.subr.mxu0 0.0
        %2623 = vmatpush2.xpose.msra.mxu0 0.0
        %2624 = vmatprep.subr.mxu0 0.0
        %2625 = vmatpush2.xpose.msra.mxu0 0.0
        %2626 = vmatprep.subr.mxu0 0.0
        %2627 = vmatpush2.xpose.msra.mxu0 0.0
        %2628 = vmatprep.subr.mxu0 0.0
        %2629 = vmatpush2.xpose.msra.mxu0 0.0
        %2630 = vmatprep.subr.mxu0 0.0
        %2631 = vmatpush2.xpose.msra.mxu0 0.0
        %2632 = vmatprep.subr.mxu0 0.0
        %2633 = vmatpush2.xpose.msra.mxu0 0.0
        %2634 = vmatprep.subr.mxu0 0.0
        %2635 = vmatpush2.xpose.msra.mxu0 0.0
        %2636 = vmatprep.subr.mxu0 0.0
        %2637 = vmatpush2.xpose.msra.mxu0 0.0
        %2638 = vmatprep.subr.mxu0 0.0
        %2639 = vmatpush2.xpose.msra.mxu0 0.0
        %2640 = vmatprep.subr.mxu0 0.0
        %2641 = vmatpush2.xpose.msra.mxu0 0.0
        %2642 = vmatprep.subr.mxu0 0.0
        %2643 = vmatpush2.xpose.msra.mxu0 0.0
        %2644 = vmatprep.mubr.f32.mxu0 0.0
        %2645 = vmatmul.mubr.f32.gmra.mxu0 %v2576
        %v2646 = vpop.f32.mrf.mxu0
        %v2647 = vadd.f32 0.0, %v2646
        %v2648 = vpop.f32.mrf.mxu0
        %2649 = vdwg.mxu0
        %v2650 = vsel %vm899, %v2647, -1e+30
        %v2651 = vsel %vm989, %v2650, -inf
        %2652 = vmax.xlane.f32.xlu0 %v2651
        %v2653 = vpop.xlane.xlu0 %2652
        %v2654 = vsub.f32 %v2650, %v2653
        %v2655 = vmul.f32 %v2654, 1.442695
        %v2656 = vpow.pop %v2655
        %v2657 = vsel %vm989, %v2656, 0.0
        %2658 = vadd.xlane.f32.xlu0 %v2657
        %v2659 = vpop.xlane.xlu0 %2658
        %v2660 = vrcp.pop %v2659
        %v2661 = vmul.f32 %v2656, %v2660
        %2662 = vrot.lane.b32.xlu0 %v2070, 40
        %v2663 = vpop.permute.xlu0 %2662
        %v2666 = vsel %vm989, %v2661, 0
        %2668 = vmatprep.subr.mxu0 0.0
        %2669 = vmatpush1.msra.mxu0 0.0
        %2670 = vmatprep.subr.mxu0 0.0
        %2671 = vmatpush1.msra.mxu0 0.0
        %2672 = vmatprep.subr.mxu0 0.0
        %2673 = vmatpush1.msra.mxu0 0.0
        %2674 = vmatprep.subr.mxu0 0.0
        %2675 = vmatpush1.msra.mxu0 0.0
        %2676 = vmatprep.subr.mxu0 0.0
        %2677 = vmatpush1.msra.mxu0 0.0
        %2678 = vmatprep.subr.mxu0 0.0
        %2679 = vmatpush1.msra.mxu0 0.0
        %2680 = vmatprep.subr.mxu0 0.0
        %2681 = vmatpush1.msra.mxu0 0.0
        %2682 = vmatprep.subr.mxu0 0.0
        %2683 = vmatpush1.msra.mxu0 0.0
        %2684 = vmatprep.subr.mxu0 0.0
        %2685 = vmatpush1.msra.mxu0 0.0
        %2686 = vmatprep.subr.mxu0 0.0
        %2687 = vmatpush1.msra.mxu0 0.0
        %2688 = vmatprep.subr.mxu0 0.0
        %2689 = vmatpush1.msra.mxu0 0.0
        %2690 = vmatprep.subr.mxu0 0.0
        %2691 = vmatpush1.msra.mxu0 0.0
        %2692 = vmatprep.subr.mxu0 0.0
        %2693 = vmatpush1.msra.mxu0 0.0
        %2694 = vmatprep.subr.mxu0 0.0
        %2695 = vmatpush1.msra.mxu0 0.0
        %2696 = vmatprep.subr.mxu0 0.0
        %2697 = vmatpush1.msra.mxu0 0.0
        %2698 = vmatprep.subr.mxu0 0.0
        %2699 = vmatpush1.msra.mxu0 %v2663
        %2700 = vmatprep.subr.mxu0 0.0
        %2701 = vmatpush2.msra.mxu0 0.0
        %2702 = vmatprep.subr.mxu0 0.0
        %2703 = vmatpush2.msra.mxu0 0.0
        %2704 = vmatprep.subr.mxu0 0.0
        %2705 = vmatpush2.msra.mxu0 0.0
        %2706 = vmatprep.subr.mxu0 0.0
        %2707 = vmatpush2.msra.mxu0 0.0
        %2708 = vmatprep.subr.mxu0 0.0
        %2709 = vmatpush2.msra.mxu0 0.0
        %2710 = vmatprep.subr.mxu0 0.0
        %2711 = vmatpush2.msra.mxu0 0.0
        %2712 = vmatprep.subr.mxu0 0.0
        %2713 = vmatpush2.msra.mxu0 0.0
        %2714 = vmatprep.subr.mxu0 0.0
        %2715 = vmatpush2.msra.mxu0 0.0
        %2716 = vmatprep.subr.mxu0 0.0
        %2717 = vmatpush2.msra.mxu0 0.0
        %2718 = vmatprep.subr.mxu0 0.0
        %2719 = vmatpush2.msra.mxu0 0.0
        %2720 = vmatprep.subr.mxu0 0.0
        %2721 = vmatpush2.msra.mxu0 0.0
        %2722 = vmatprep.subr.mxu0 0.0
        %2723 = vmatpush2.msra.mxu0 0.0
        %2724 = vmatprep.subr.mxu0 0.0
        %2725 = vmatpush2.msra.mxu0 0.0
        %2726 = vmatprep.subr.mxu0 0.0
        %2727 = vmatpush2.msra.mxu0 0.0
        %2728 = vmatprep.subr.mxu0 0.0
        %2729 = vmatpush2.msra.mxu0 0.0
        %2730 = vmatprep.subr.mxu0 0.0
        %2731 = vmatpush2.msra.mxu0 0.0
        %2732 = vmatprep.mubr.f32.mxu0 0.0
        %2733 = vmatmul.mubr.f32.gmra.mxu0 %v2666
        %v2734 = vpop.f32.mrf.mxu0
        %v2735 = vadd.f32 0.0, %v2734
        %v2736 = vpop.f32.mrf.mxu0
        %2737 = vdwg.mxu0
        %2739 = vrot.lane.b32.xlu0 %v2403, 8
        %v2740 = vpop.permute.xlu0 %2739
        %2743 = vrot.lane.b32.xlu0 %v2569, 16
        %v2744 = vpop.permute.xlu0 %2743
        %2747 = vrot.lane.b32.xlu0 %v2735, 24
        %v2748 = vpop.permute.xlu0 %2747
        %v2750 = vsel %vm989, %v2237, %v2740
        %v2751 = vsel %vm1664, %v2750, %v2744
        %v2752 = vsel %vm1666, %v2751, %v2748
        %s2753 = scalar_lea.vmem %s5, 32
        %v2754 = vld [vmem:[%s2753] sm:$0xff]
        %v2755 = vld [vmem:[%s2753 + $0x8] sm:$0xff]
        %v2756 = vld [vmem:[%s2753 + $0x10] sm:$0xff]
        %v2757 = vld [vmem:[%s2753 + $0x18] sm:$0xff]
        %s2758 = scalar_lea.vmem [#allocation10], 1
        %v2759 = vld [vmem:[%s2758] sm:$0x1]
        %v2761 = vlaneseq
        %v2762 = vshrl.u32 %v2761, 7
        %v2763 = vsub.s32 0, %v2762
        %v2764 = vrot.slane %v2759, %v2763
        %v2767 = vsel %vm911, %v2752, 0
        %2769 = vmatprep.subr.mxu0 0.0
        %2770 = vmatpush1.msra.mxu0 0.0
        %2771 = vmatprep.subr.mxu0 0.0
        %2772 = vmatpush1.msra.mxu0 0.0
        %2773 = vmatprep.subr.mxu0 0.0
        %2774 = vmatpush1.msra.mxu0 0.0
        %2775 = vmatprep.subr.mxu0 0.0
        %2776 = vmatpush1.msra.mxu0 0.0
        %2777 = vmatprep.subr.mxu0 0.0
        %2778 = vmatpush1.msra.mxu0 0.0
        %2779 = vmatprep.subr.mxu0 0.0
        %2780 = vmatpush1.msra.mxu0 0.0
        %2781 = vmatprep.subr.mxu0 0.0
        %2782 = vmatpush1.msra.mxu0 0.0
        %2783 = vmatprep.subr.mxu0 0.0
        %2784 = vmatpush1.msra.mxu0 0.0
        %2785 = vmatprep.subr.mxu0 0.0
        %2786 = vmatpush1.msra.mxu0 0.0
        %2787 = vmatprep.subr.mxu0 0.0
        %2788 = vmatpush1.msra.mxu0 0.0
        %2789 = vmatprep.subr.mxu0 0.0
        %2790 = vmatpush1.msra.mxu0 0.0
        %2791 = vmatprep.subr.mxu0 0.0
        %2792 = vmatpush1.msra.mxu0 0.0
        %2793 = vmatprep.subr.mxu0 0.0
        %2794 = vmatpush1.msra.mxu0 %v2757
        %2795 = vmatprep.subr.mxu0 0.0
        %2796 = vmatpush1.msra.mxu0 %v2756
        %2797 = vmatprep.subr.mxu0 0.0
        %2798 = vmatpush1.msra.mxu0 %v2755
        %2799 = vmatprep.subr.mxu0 0.0
        %2800 = vmatpush1.msra.mxu0 %v2754
        %2801 = vmatprep.subr.mxu0 0.0
        %2802 = vmatpush2.msra.mxu0 0.0
        %2803 = vmatprep.subr.mxu0 0.0
        %2804 = vmatpush2.msra.mxu0 0.0
        %2805 = vmatprep.subr.mxu0 0.0
        %2806 = vmatpush2.msra.mxu0 0.0
        %2807 = vmatprep.subr.mxu0 0.0
        %2808 = vmatpush2.msra.mxu0 0.0
        %2809 = vmatprep.subr.mxu0 0.0
        %2810 = vmatpush2.msra.mxu0 0.0
        %2811 = vmatprep.subr.mxu0 0.0
        %2812 = vmatpush2.msra.mxu0 0.0
        %2813 = vmatprep.subr.mxu0 0.0
        %2814 = vmatpush2.msra.mxu0 0.0
        %2815 = vmatprep.subr.mxu0 0.0
        %2816 = vmatpush2.msra.mxu0 0.0
        %2817 = vmatprep.subr.mxu0 0.0
        %2818 = vmatpush2.msra.mxu0 0.0
        %2819 = vmatprep.subr.mxu0 0.0
        %2820 = vmatpush2.msra.mxu0 0.0
        %2821 = vmatprep.subr.mxu0 0.0
        %2822 = vmatpush2.msra.mxu0 0.0
        %2823 = vmatprep.subr.mxu0 0.0
        %2824 = vmatpush2.msra.mxu0 0.0
        %2825 = vmatprep.subr.mxu0 0.0
        %2826 = vmatpush2.msra.mxu0 0.0
        %2827 = vmatprep.subr.mxu0 0.0
        %2828 = vmatpush2.msra.mxu0 0.0
        %2829 = vmatprep.subr.mxu0 0.0
        %2830 = vmatpush2.msra.mxu0 0.0
        %2831 = vmatprep.subr.mxu0 0.0
        %2832 = vmatpush2.msra.mxu0 0.0
        %2833 = vmatprep.mubr.f32.mxu0 0.0
        %2834 = vmatmul.mubr.f32.gmra.mxu0 %v2767
        %v2835 = vpop.f32.mrf.mxu0
        %v2836 = vadd.f32 %v2764, %v2835
        %v2837 = vpop.f32.mrf.mxu0
        %2838 = vdwg.mxu0
        %v2839 = vadd.f32 %v1986, %v2836
        %s2840 = scalar_lea.vmem [#allocation12], 1
        %v2841 = vld [vmem:[%s2840] sm:$0x1]
        %s2842 = scalar_lea.vmem [#allocation13], 1
        %v2843 = vld [vmem:[%s2842] sm:$0x1]
        %v2844 = vsel %vm911, %v2839, 0.0
        %2845 = vadd.xlane.f32.xlu0 %v2844
        %v2846 = vpop.xlane.xlu0 %2845
        %v2847 = vmul.f32 %v2846, %v1758
        %v2848 = vsub.f32 %v2839, %v2847
        %v2849 = vmul.f32 %v2848, %v2848
        %v2850 = vsel %vm911, %v2849, 0.0
        %2851 = vadd.xlane.f32.xlu0 %v2850
        %v2852 = vpop.xlane.xlu0 %2851
        %v2853 = vmul.f32 %v2852, %v1758
        %v2854 = vadd.f32 %v2853, 1e-05
        %v2855 = vrsqrt.pop %v2854
        %v2856 = vmul.f32 %v2848, %v2855
        %v2858 = vlaneseq
        %v2859 = vshrl.u32 %v2858, 7
        %v2860 = vsub.s32 0, %v2859
        %v2861 = vrot.slane %v2841, %v2860
        %v2863 = vmul.f32 %v2856, %v2861
        %v2865 = vlaneseq
        %v2866 = vshrl.u32 %v2865, 7
        %v2867 = vsub.s32 0, %v2866
        %v2868 = vrot.slane %v2843, %v2867
        %v2870 = vadd.f32 %v2863, %v2868
        %s2871 = scalar_lea.vmem %s9, 32
        %v2872 = vld [vmem:[%s2871] sm:$0xff]
        %v2873 = vld [vmem:[%s2871 + $0x8] sm:$0xff]
        %v2874 = vld [vmem:[%s2871 + $0x10] sm:$0xff]
        %v2875 = vld [vmem:[%s2871 + $0x18] sm:$0xff]
        %s2876 = scalar_lea.vmem [#allocation15], 1
        %v2877 = vld [vmem:[%s2876] sm:$0x1]
        %v2879 = vlaneseq
        %v2880 = vshrl.u32 %v2879, 7
        %v2881 = vsub.s32 0, %v2880
        %v2882 = vrot.slane %v2877, %v2881
        %v2885 = vsel %vm911, %v2870, 0
        %2887 = vmatprep.subr.mxu0 0.0
        %2888 = vmatpush1.msra.mxu0 0.0
        %2889 = vmatprep.subr.mxu0 0.0
        %2890 = vmatpush1.msra.mxu0 0.0
        %2891 = vmatprep.subr.mxu0 0.0
        %2892 = vmatpush1.msra.mxu0 0.0
        %2893 = vmatprep.subr.mxu0 0.0
        %2894 = vmatpush1.msra.mxu0 0.0
        %2895 = vmatprep.subr.mxu0 0.0
        %2896 = vmatpush1.msra.mxu0 0.0
        %2897 = vmatprep.subr.mxu0 0.0
        %2898 = vmatpush1.msra.mxu0 0.0
        %2899 = vmatprep.subr.mxu0 0.0
        %2900 = vmatpush1.msra.mxu0 0.0
        %2901 = vmatprep.subr.mxu0 0.0
        %2902 = vmatpush1.msra.mxu0 0.0
        %2903 = vmatprep.subr.mxu0 0.0
        %2904 = vmatpush1.msra.mxu0 0.0
        %2905 = vmatprep.subr.mxu0 0.0
        %2906 = vmatpush1.msra.mxu0 0.0
        %2907 = vmatprep.subr.mxu0 0.0
        %2908 = vmatpush1.msra.mxu0 0.0
        %2909 = vmatprep.subr.mxu0 0.0
        %2910 = vmatpush1.msra.mxu0 0.0
        %2911 = vmatprep.subr.mxu0 0.0
        %2912 = vmatpush1.msra.mxu0 %v2875
        %2913 = vmatprep.subr.mxu0 0.0
        %2914 = vmatpush1.msra.mxu0 %v2874
        %2915 = vmatprep.subr.mxu0 0.0
        %2916 = vmatpush1.msra.mxu0 %v2873
        %2917 = vmatprep.subr.mxu0 0.0
        %2918 = vmatpush1.msra.mxu0 %v2872
        %2919 = vmatprep.subr.mxu0 0.0
        %2920 = vmatpush2.msra.mxu0 0.0
        %2921 = vmatprep.subr.mxu0 0.0
        %2922 = vmatpush2.msra.mxu0 0.0
        %2923 = vmatprep.subr.mxu0 0.0
        %2924 = vmatpush2.msra.mxu0 0.0
        %2925 = vmatprep.subr.mxu0 0.0
        %2926 = vmatpush2.msra.mxu0 0.0
        %2927 = vmatprep.subr.mxu0 0.0
        %2928 = vmatpush2.msra.mxu0 0.0
        %2929 = vmatprep.subr.mxu0 0.0
        %2930 = vmatpush2.msra.mxu0 0.0
        %2931 = vmatprep.subr.mxu0 0.0
        %2932 = vmatpush2.msra.mxu0 0.0
        %2933 = vmatprep.subr.mxu0 0.0
        %2934 = vmatpush2.msra.mxu0 0.0
        %2935 = vmatprep.subr.mxu0 0.0
        %2936 = vmatpush2.msra.mxu0 0.0
        %2937 = vmatprep.subr.mxu0 0.0
        %2938 = vmatpush2.msra.mxu0 0.0
        %2939 = vmatprep.subr.mxu0 0.0
        %2940 = vmatpush2.msra.mxu0 0.0
        %2941 = vmatprep.subr.mxu0 0.0
        %2942 = vmatpush2.msra.mxu0 0.0
        %2943 = vmatprep.subr.mxu0 0.0
        %2944 = vmatpush2.msra.mxu0 0.0
        %2945 = vmatprep.subr.mxu0 0.0
        %2946 = vmatpush2.msra.mxu0 0.0
        %2947 = vmatprep.subr.mxu0 0.0
        %2948 = vmatpush2.msra.mxu0 0.0
        %2949 = vmatprep.subr.mxu0 0.0
        %2950 = vmatpush2.msra.mxu0 0.0
        %2951 = vmatprep.mubr.f32.mxu0 0.0
        %2952 = vmatmul.mubr.f32.gmra.mxu0 %v2885
        %v2953 = vpop.f32.mrf.mxu0
        %v2954 = vadd.f32 %v2882, %v2953
        %v2955 = vpop.f32.mrf.mxu0
        %2956 = vdwg.mxu0
        %v2957 = vmax.f32 %v2954, 0.0
        %s2958 = scalar_lea.vmem %s11, 64
        %v2959 = vld [vmem:[%s2958] sm:$0xff]
        %v2960 = vld [vmem:[%s2958 + $0x8] sm:$0xff]
        %v2961 = vld [vmem:[%s2958 + $0x10] sm:$0xff]
        %v2962 = vld [vmem:[%s2958 + $0x18] sm:$0xff]
        %v2963 = vld [vmem:[%s2958 + $0x20] sm:$0xff]
        %v2964 = vld [vmem:[%s2958 + $0x28] sm:$0xff]
        %v2965 = vld [vmem:[%s2958 + $0x30] sm:$0xff]
        %v2966 = vld [vmem:[%s2958 + $0x38] sm:$0xff]
        %s2967 = scalar_lea.vmem [#allocation16], 1
        %v2968 = vld [vmem:[%s2967] sm:$0x1]
        %v2970 = vlaneseq
        %v2971 = vshrl.u32 %v2970, 7
        %v2972 = vsub.s32 0, %v2971
        %v2973 = vrot.slane %v2968, %v2972
        %v2976 = vsel %vm1883, %v2957, 0
        %2978 = vmatprep.subr.mxu0 0.0
        %2979 = vmatpush1.msra.mxu0 0.0
        %2980 = vmatprep.subr.mxu0 0.0
        %2981 = vmatpush1.msra.mxu0 0.0
        %2982 = vmatprep.subr.mxu0 0.0
        %2983 = vmatpush1.msra.mxu0 0.0
        %2984 = vmatprep.subr.mxu0 0.0
        %2985 = vmatpush1.msra.mxu0 0.0
        %2986 = vmatprep.subr.mxu0 0.0
        %2987 = vmatpush1.msra.mxu0 0.0
        %2988 = vmatprep.subr.mxu0 0.0
        %2989 = vmatpush1.msra.mxu0 0.0
        %2990 = vmatprep.subr.mxu0 0.0
        %2991 = vmatpush1.msra.mxu0 0.0
        %2992 = vmatprep.subr.mxu0 0.0
        %2993 = vmatpush1.msra.mxu0 0.0
        %2994 = vmatprep.subr.mxu0 0.0
        %2995 = vmatpush1.msra.mxu0 %v2966
        %2996 = vmatprep.subr.mxu0 0.0
        %2997 = vmatpush1.msra.mxu0 %v2965
        %2998 = vmatprep.subr.mxu0 0.0
        %2999 = vmatpush1.msra.mxu0 %v2964
        %3000 = vmatprep.subr.mxu0 0.0
        %3001 = vmatpush1.msra.mxu0 %v2963
        %3002 = vmatprep.subr.mxu0 0.0
        %3003 = vmatpush1.msra.mxu0 %v2962
        %3004 = vmatprep.subr.mxu0 0.0
        %3005 = vmatpush1.msra.mxu0 %v2961
        %3006 = vmatprep.subr.mxu0 0.0
        %3007 = vmatpush1.msra.mxu0 %v2960
        %3008 = vmatprep.subr.mxu0 0.0
        %3009 = vmatpush1.msra.mxu0 %v2959
        %3010 = vmatprep.subr.mxu0 0.0
        %3011 = vmatpush2.msra.mxu0 0.0
        %3012 = vmatprep.subr.mxu0 0.0
        %3013 = vmatpush2.msra.mxu0 0.0
        %3014 = vmatprep.subr.mxu0 0.0
        %3015 = vmatpush2.msra.mxu0 0.0
        %3016 = vmatprep.subr.mxu0 0.0
        %3017 = vmatpush2.msra.mxu0 0.0
        %3018 = vmatprep.subr.mxu0 0.0
        %3019 = vmatpush2.msra.mxu0 0.0
        %3020 = vmatprep.subr.mxu0 0.0
        %3021 = vmatpush2.msra.mxu0 0.0
        %3022 = vmatprep.subr.mxu0 0.0
        %3023 = vmatpush2.msra.mxu0 0.0
        %3024 = vmatprep.subr.mxu0 0.0
        %3025 = vmatpush2.msra.mxu0 0.0
        %3026 = vmatprep.subr.mxu0 0.0
        %3027 = vmatpush2.msra.mxu0 0.0
        %3028 = vmatprep.subr.mxu0 0.0
        %3029 = vmatpush2.msra.mxu0 0.0
        %3030 = vmatprep.subr.mxu0 0.0
        %3031 = vmatpush2.msra.mxu0 0.0
        %3032 = vmatprep.subr.mxu0 0.0
        %3033 = vmatpush2.msra.mxu0 0.0
        %3034 = vmatprep.subr.mxu0 0.0
        %3035 = vmatpush2.msra.mxu0 0.0
        %3036 = vmatprep.subr.mxu0 0.0
        %3037 = vmatpush2.msra.mxu0 0.0
        %3038 = vmatprep.subr.mxu0 0.0
        %3039 = vmatpush2.msra.mxu0 0.0
        %3040 = vmatprep.subr.mxu0 0.0
        %3041 = vmatpush2.msra.mxu0 0.0
        %3042 = vmatprep.mubr.f32.mxu0 0.0
        %3043 = vmatmul.mubr.f32.gmra.mxu0 %v2976
        %v3044 = vpop.f32.mrf.mxu0
        %v3045 = vadd.f32 %v2973, %v3044
        %v3046 = vpop.f32.mrf.mxu0
        %3047 = vdwg.mxu0
        %v3048 = vadd.f32 %v2870, %v3045
        %s3049 = scalar_lea.vmem [#allocation18], 1
        %v3050 = vld [vmem:[%s3049] sm:$0x1]
        %s3051 = scalar_lea.vmem [#allocation19], 1
        %v3052 = vld [vmem:[%s3051] sm:$0x1]
        %v3053 = vsel %vm911, %v3048, 0.0
        %3054 = vadd.xlane.f32.xlu0 %v3053
        %v3055 = vpop.xlane.xlu0 %3054
        %v3056 = vmul.f32 %v3055, %v1758
        %v3057 = vsub.f32 %v3048, %v3056
        %v3058 = vmul.f32 %v3057, %v3057
        %v3059 = vsel %vm911, %v3058, 0.0
        %3060 = vadd.xlane.f32.xlu0 %v3059
        %v3061 = vpop.xlane.xlu0 %3060
        %v3062 = vmul.f32 %v3061, %v1758
        %v3063 = vadd.f32 %v3062, 1e-05
        %v3064 = vrsqrt.pop %v3063
        %v3065 = vmul.f32 %v3057, %v3064
        %v3067 = vlaneseq
        %v3068 = vshrl.u32 %v3067, 7
        %v3069 = vsub.s32 0, %v3068
        %v3070 = vrot.slane %v3050, %v3069
        %v3072 = vmul.f32 %v3065, %v3070
        %v3074 = vlaneseq
        %v3075 = vshrl.u32 %v3074, 7
        %v3076 = vsub.s32 0, %v3075
        %v3077 = vrot.slane %v3052, %v3076
        %v3079 = vadd.f32 %v3072, %v3077
        %v3080 = vld [vmem:[%s809] sm:$0x1]
        %v3081 = vld [vmem:[%s16] sm:$0xff]
        %v3082 = vld [vmem:[%s16 + $0x8] sm:$0xff]
        %v3083 = vld [vmem:[#allocation22] sm:$0x1]
        %v3085 = vsel %vm1664, %v3080, 0
        %3087 = vmatprep.subr.mxu0 0.0
        %3088 = vmatpush1.msra.mxu0 0.0
        %3089 = vmatprep.subr.mxu0 0.0
        %3090 = vmatpush1.msra.mxu0 0.0
        %3091 = vmatprep.subr.mxu0 0.0
        %3092 = vmatpush1.msra.mxu0 0.0
        %3093 = vmatprep.subr.mxu0 0.0
        %3094 = vmatpush1.msra.mxu0 0.0
        %3095 = vmatprep.subr.mxu0 0.0
        %3096 = vmatpush1.msra.mxu0 0.0
        %3097 = vmatprep.subr.mxu0 0.0
        %3098 = vmatpush1.msra.mxu0 0.0
        %3099 = vmatprep.subr.mxu0 0.0
        %3100 = vmatpush1.msra.mxu0 0.0
        %3101 = vmatprep.subr.mxu0 0.0
        %3102 = vmatpush1.msra.mxu0 0.0
        %3103 = vmatprep.subr.mxu0 0.0
        %3104 = vmatpush1.msra.mxu0 0.0
        %3105 = vmatprep.subr.mxu0 0.0
        %3106 = vmatpush1.msra.mxu0 0.0
        %3107 = vmatprep.subr.mxu0 0.0
        %3108 = vmatpush1.msra.mxu0 0.0
        %3109 = vmatprep.subr.mxu0 0.0
        %3110 = vmatpush1.msra.mxu0 0.0
        %3111 = vmatprep.subr.mxu0 0.0
        %3112 = vmatpush1.msra.mxu0 0.0
        %3113 = vmatprep.subr.mxu0 0.0
        %3114 = vmatpush1.msra.mxu0 0.0
        %3115 = vmatprep.subr.mxu0 0.0
        %3116 = vmatpush1.msra.mxu0 %v3082
        %3117 = vmatprep.subr.mxu0 0.0
        %3118 = vmatpush1.msra.mxu0 %v3081
        %3119 = vmatprep.subr.mxu0 0.0
        %3120 = vmatpush2.msra.mxu0 0.0
        %3121 = vmatprep.subr.mxu0 0.0
        %3122 = vmatpush2.msra.mxu0 0.0
        %3123 = vmatprep.subr.mxu0 0.0
        %3124 = vmatpush2.msra.mxu0 0.0
        %3125 = vmatprep.subr.mxu0 0.0
        %3126 = vmatpush2.msra.mxu0 0.0
        %3127 = vmatprep.subr.mxu0 0.0
        %3128 = vmatpush2.msra.mxu0 0.0
        %3129 = vmatprep.subr.mxu0 0.0
        %3130 = vmatpush2.msra.mxu0 0.0
        %3131 = vmatprep.subr.mxu0 0.0
        %3132 = vmatpush2.msra.mxu0 0.0
        %3133 = vmatprep.subr.mxu0 0.0
        %3134 = vmatpush2.msra.mxu0 0.0
        %3135 = vmatprep.subr.mxu0 0.0
        %3136 = vmatpush2.msra.mxu0 0.0
        %3137 = vmatprep.subr.mxu0 0.0
        %3138 = vmatpush2.msra.mxu0 0.0
        %3139 = vmatprep.subr.mxu0 0.0
        %3140 = vmatpush2.msra.mxu0 0.0
        %3141 = vmatprep.subr.mxu0 0.0
        %3142 = vmatpush2.msra.mxu0 0.0
        %3143 = vmatprep.subr.mxu0 0.0
        %3144 = vmatpush2.msra.mxu0 0.0
        %3145 = vmatprep.subr.mxu0 0.0
        %3146 = vmatpush2.msra.mxu0 0.0
        %3147 = vmatprep.subr.mxu0 0.0
        %3148 = vmatpush2.msra.mxu0 0.0
        %3149 = vmatprep.subr.mxu0 0.0
        %3150 = vmatpush2.msra.mxu0 0.0
        %3151 = vmatprep.mubr.f32.mxu0 0.0
        %3152 = vmatmul.mubr.f32.gmra.mxu0 %v3085
        %v3153 = vpop.f32.mrf.mxu0
        %v3154 = vadd.f32 %v3083, %v3153
        %v3155 = vpop.f32.mrf.mxu0
        %3156 = vdwg.mxu0
        %v3157 = vand.u32 2147483647, %v3154
        %v3158 = vadd.f32 %v3157, 1.0
        %v3159 = vrcp.pop %v3158
        %v3160 = vmul.f32 %v3154, %v3159
        %v3161 = vld [vmem:[%s821] sm:$0x1]
        %v3162 = vld [vmem:[#allocation24] sm:$0xf]
        %vm3163 = vcmask 31744
        %v3165 = vsel %vm3163, %v3161, 0
        %vm3167 = vcmask 1043456
        %v3169 = vsel %vm3167, %v3162, 0
        %3171 = vmatprep.subr.mxu0 0.0
        %3172 = vmatpush1.msra.mxu0 0.0
        %3173 = vmatprep.subr.mxu0 0.0
        %3174 = vmatpush1.msra.mxu0 0.0
        %3175 = vmatprep.subr.mxu0 0.0
        %3176 = vmatpush1.msra.mxu0 0.0
        %3177 = vmatprep.subr.mxu0 0.0
        %3178 = vmatpush1.msra.mxu0 0.0
        %3179 = vmatprep.subr.mxu0 0.0
        %3180 = vmatpush1.msra.mxu0 0.0
        %3181 = vmatprep.subr.mxu0 0.0
        %3182 = vmatpush1.msra.mxu0 0.0
        %3183 = vmatprep.subr.mxu0 0.0
        %3184 = vmatpush1.msra.mxu0 0.0
        %3185 = vmatprep.subr.mxu0 0.0
        %3186 = vmatpush1.msra.mxu0 0.0
        %3187 = vmatprep.subr.mxu0 0.0
        %3188 = vmatpush1.msra.mxu0 0.0
        %3189 = vmatprep.subr.mxu0 0.0
        %3190 = vmatpush1.msra.mxu0 0.0
        %3191 = vmatprep.subr.mxu0 0.0
        %3192 = vmatpush1.msra.mxu0 0.0
        %3193 = vmatprep.subr.mxu0 0.0
        %3194 = vmatpush1.msra.mxu0 0.0
        %3195 = vmatprep.subr.mxu0 0.0
        %3196 = vmatpush1.msra.mxu0 0.0
        %3197 = vmatprep.subr.mxu0 0.0
        %3198 = vmatpush1.msra.mxu0 0.0
        %3199 = vmatprep.subr.mxu0 0.0
        %3200 = vmatpush1.msra.mxu0 0.0
        %3201 = vmatprep.subr.mxu0 0.0
        %3202 = vmatpush1.msra.mxu0 %v3169
        %3203 = vmatprep.subr.mxu0 0.0
        %3204 = vmatpush2.msra.mxu0 0.0
        %3205 = vmatprep.subr.mxu0 0.0
        %3206 = vmatpush2.msra.mxu0 0.0
        %3207 = vmatprep.subr.mxu0 0.0
        %3208 = vmatpush2.msra.mxu0 0.0
        %3209 = vmatprep.subr.mxu0 0.0
        %3210 = vmatpush2.msra.mxu0 0.0
        %3211 = vmatprep.subr.mxu0 0.0
        %3212 = vmatpush2.msra.mxu0 0.0
        %3213 = vmatprep.subr.mxu0 0.0
        %3214 = vmatpush2.msra.mxu0 0.0
        %3215 = vmatprep.subr.mxu0 0.0
        %3216 = vmatpush2.msra.mxu0 0.0
        %3217 = vmatprep.subr.mxu0 0.0
        %3218 = vmatpush2.msra.mxu0 0.0
        %3219 = vmatprep.subr.mxu0 0.0
        %3220 = vmatpush2.msra.mxu0 0.0
        %3221 = vmatprep.subr.mxu0 0.0
        %3222 = vmatpush2.msra.mxu0 0.0
        %3223 = vmatprep.subr.mxu0 0.0
        %3224 = vmatpush2.msra.mxu0 0.0
        %3225 = vmatprep.subr.mxu0 0.0
        %3226 = vmatpush2.msra.mxu0 0.0
        %3227 = vmatprep.subr.mxu0 0.0
        %3228 = vmatpush2.msra.mxu0 0.0
        %3229 = vmatprep.subr.mxu0 0.0
        %3230 = vmatpush2.msra.mxu0 0.0
        %3231 = vmatprep.subr.mxu0 0.0
        %3232 = vmatpush2.msra.mxu0 0.0
        %3233 = vmatprep.subr.mxu0 0.0
        %3234 = vmatpush2.msra.mxu0 0.0
        %3235 = vmatprep.mubr.f32.mxu0 0.0
        %3236 = vmatmul.mubr.f32.gmra.mxu0 %v3165
        %v3237 = vpop.f32.mrf.mxu0
        %v3238 = vadd.f32 0.0, %v3237
        %v3239 = vpop.f32.mrf.mxu0
        %3240 = vdwg.mxu0
        %v3241 = vld [vmem:[%s20] sm:$0xff]
        %v3242 = vld [vmem:[%s20 + $0x8] sm:$0xff]
        %v3243 = vld [vmem:[%s21] sm:$0x1]
        %v3245 = vsel %vm1664, %v3238, 0
        %3247 = vmatprep.subr.mxu0 0.0
        %3248 = vmatpush1.msra.mxu0 0.0
        %3249 = vmatprep.subr.mxu0 0.0
        %3250 = vmatpush1.msra.mxu0 0.0
        %3251 = vmatprep.subr.mxu0 0.0
        %3252 = vmatpush1.msra.mxu0 0.0
        %3253 = vmatprep.subr.mxu0 0.0
        %3254 = vmatpush1.msra.mxu0 0.0
        %3255 = vmatprep.subr.mxu0 0.0
        %3256 = vmatpush1.msra.mxu0 0.0
        %3257 = vmatprep.subr.mxu0 0.0
        %3258 = vmatpush1.msra.mxu0 0.0
        %3259 = vmatprep.subr.mxu0 0.0
        %3260 = vmatpush1.msra.mxu0 0.0
        %3261 = vmatprep.subr.mxu0 0.0
        %3262 = vmatpush1.msra.mxu0 0.0
        %3263 = vmatprep.subr.mxu0 0.0
        %3264 = vmatpush1.msra.mxu0 0.0
        %3265 = vmatprep.subr.mxu0 0.0
        %3266 = vmatpush1.msra.mxu0 0.0
        %3267 = vmatprep.subr.mxu0 0.0
        %3268 = vmatpush1.msra.mxu0 0.0
        %3269 = vmatprep.subr.mxu0 0.0
        %3270 = vmatpush1.msra.mxu0 0.0
        %3271 = vmatprep.subr.mxu0 0.0
        %3272 = vmatpush1.msra.mxu0 0.0
        %3273 = vmatprep.subr.mxu0 0.0
        %3274 = vmatpush1.msra.mxu0 0.0
        %3275 = vmatprep.subr.mxu0 0.0
        %3276 = vmatpush1.msra.mxu0 %v3242
        %3277 = vmatprep.subr.mxu0 0.0
        %3278 = vmatpush1.msra.mxu0 %v3241
        %3279 = vmatprep.subr.mxu0 0.0
        %3280 = vmatpush2.msra.mxu0 0.0
        %3281 = vmatprep.subr.mxu0 0.0
        %3282 = vmatpush2.msra.mxu0 0.0
        %3283 = vmatprep.subr.mxu0 0.0
        %3284 = vmatpush2.msra.mxu0 0.0
        %3285 = vmatprep.subr.mxu0 0.0
        %3286 = vmatpush2.msra.mxu0 0.0
        %3287 = vmatprep.subr.mxu0 0.0
        %3288 = vmatpush2.msra.mxu0 0.0
        %3289 = vmatprep.subr.mxu0 0.0
        %3290 = vmatpush2.msra.mxu0 0.0
        %3291 = vmatprep.subr.mxu0 0.0
        %3292 = vmatpush2.msra.mxu0 0.0
        %3293 = vmatprep.subr.mxu0 0.0
        %3294 = vmatpush2.msra.mxu0 0.0
        %3295 = vmatprep.subr.mxu0 0.0
        %3296 = vmatpush2.msra.mxu0 0.0
        %3297 = vmatprep.subr.mxu0 0.0
        %3298 = vmatpush2.msra.mxu0 0.0
        %3299 = vmatprep.subr.mxu0 0.0
        %3300 = vmatpush2.msra.mxu0 0.0
        %3301 = vmatprep.subr.mxu0 0.0
        %3302 = vmatpush2.msra.mxu0 0.0
        %3303 = vmatprep.subr.mxu0 0.0
        %3304 = vmatpush2.msra.mxu0 0.0
        %3305 = vmatprep.subr.mxu0 0.0
        %3306 = vmatpush2.msra.mxu0 0.0
        %3307 = vmatprep.subr.mxu0 0.0
        %3308 = vmatpush2.msra.mxu0 0.0
        %3309 = vmatprep.subr.mxu0 0.0
        %3310 = vmatpush2.msra.mxu0 0.0
        %3311 = vmatprep.mubr.f32.mxu0 0.0
        %3312 = vmatmul.mubr.f32.gmra.mxu0 %v3245
        %v3313 = vpop.f32.mrf.mxu0
        %v3314 = vadd.f32 %v3243, %v3313
        %v3315 = vpop.f32.mrf.mxu0
        %3316 = vdwg.mxu0
        %v3317 = vand.u32 2147483647, %v3314
        %v3318 = vadd.f32 %v3317, 1.0
        %v3319 = vrcp.pop %v3318
        %v3320 = vmul.f32 %v3314, %v3319
        %v3321 = vlaneseq
        %v3322 = vshrl.u32 %v3321, 7
        %v3323 = vsub.s32 0, %v3322
        %v3324 = vrot.slane %v3160, %v3323
        %v3325 = vlaneseq
        %v3326 = vshrl.u32 %v3325, 7
        %v3327 = vsub.s32 0, %v3326
        %v3328 = vrot.slane %v3320, %v3327
        %3330 = vrot.lane.b32.xlu0 %v3324, 32
        %v3331 = vpop.permute.xlu0 %3330
        %3334 = vrot.lane.b32.xlu0 %v3328, 48
        %v3335 = vpop.permute.xlu0 %3334
        %v3337 = vsel %vm911, %v3079, %v3331
        %vm3338 = vcmask 392192
        %v3339 = vsel %vm3338, %v3337, %v3335
        %3340 = vst.msk [vmem:[%s891] sm:$0xff] %vm1883, %v3339
        %s3341 = sand.u32 %s512, 1
        %s3342 = scalar_lea.sflag [#allocation6], %s3341
        %s3343 = sand.u32 %s512, 1
        %s3344 = smul.addr %s3343, 8
        %s3345 = scalar_lea.vmem [#allocation25], %s3344
        // Predicated region
        $region161: #{tpu_custom_call.1} parent=103 // pred_check
          %p3346 = pneg %p522
        $region162: #{tpu_custom_call.1} parent=103 // pred_check_branch
          %3348 = sbr.rel (%p3346) target = $region164
        $region163: #{tpu_custom_call.1} parent=103 // pred_region
          %s3350 = ssub.s32 128, 128
          %3351 = vsyncadd %s3342, %s3350
          %s3352 = smul.addr %s48, 128
          %s3353 = scalar_lea.hbm %s22, %s3352
          %s3355 = sshll.u32 %s3345, 4
          %s3356 = int_to_ptr.vmem [resolvable:$true] %s3355
          %3358 = dma.vmem_to_hbm [thread:$0]  %s3356, 128, %s3353, %s3342
        $region164: #{tpu_custom_call.1} parent=103 // pred_fallthru
          _
      $region104: #{tpu_custom_call.1} parent=5 // pred_fallthru
        _
      %p3359 = scmp.le.s32.totalorder 2, %s43
      // Predicated region
      $region165: #{tpu_custom_call.1} parent=5 // pred_check
        %p3360 = pneg %p3359
      $region166: #{tpu_custom_call.1} parent=5 // pred_check_branch
        %3362 = sbr.rel (%p3360) target = $region168
      $region167: #{tpu_custom_call.1} parent=5 // pred_region
        %s3363 = ssub.s32 %s43, 2
        // Predicated region
        $region169: #{tpu_custom_call.1} parent=167 // pred_check
          %p3364 = pneg %p528
        $region170: #{tpu_custom_call.1} parent=167 // pred_check_branch
          %3366 = sbr.rel (%p3364) target = $region172
        $region171: #{tpu_custom_call.1} parent=167 // pred_region
          %s3367 = sand.u32 %s513, 1
          %s3368 = scalar_lea.sflag [#allocation6], %s3367
          %s3369 = sand.u32 %s513, 1
          %s3370 = smul.addr %s3369, 8
          %s3371 = scalar_lea.vmem [#allocation25], %s3370
          %3372 = dma.done %s3368, 128
        $region172: #{tpu_custom_call.1} parent=167 // pred_fallthru
          _
      $region168: #{tpu_custom_call.1} parent=5 // pred_fallthru
        _
    $region6: #{tpu_custom_call.1} parent=1 // loop_footer
      %s47 = sadd.s32 1, %s43
    $region7: #{tpu_custom_call.1} parent=1 // loop_footer_branch
      %42 = sbr.rel target = $region3
    $region8: #{tpu_custom_call.1} parent=1 // loop_exit
      _
    %3373 = vsyncpa [#allocation5], 1
    %s3374 = scalar_lea.sflag [#allocation5], 1
    %3375 = vsyncpa %s3374, 1
    %3376 = vsyncpa [#allocation8], 1
    %3377 = vsyncpa [#allocation11], 1
    %3378 = vsyncpa [#allocation14], 1
    %3379 = vsyncpa [#allocation17], 1
    %3380 = vsyncpa [#allocation20], 1
    %3381 = vsyncpa [#allocation6], 1
    %s3382 = scalar_lea.sflag [#allocation6], 1
    %3383 = vsyncpa %s3382, 1

</llo_original>
